<compile_context>
chip_gen: v7x
topology: tpu7x:2x2x1
jax: 0.10.0
libtpu: 0.0.40
codegen_flags: <defaults>
</compile_context>

<pallas_src>
import jax
import jax.numpy as jnp
from jax import lax
from jax.experimental import pallas as pl
from jax.experimental.pallas import tpu as pltpu

H = 768          # hidden size fixed by the module (Linear(768, vocab))
V = 2048         # token.vocab_size (small synthetic vocab; real bert-base-chinese is 21128)
TV = 2048        # vocab tile (f32 weight tile = TV*768*4 B = 6.3 MB; x2 buffers ~12.6 MB)


def decoder_kernel(h_ref, w_ref, b_ref, o_ref):
    # h_ref: (B, H)   hidden vector of token position 15 for each batch element
    # w_ref: (TV, H)  tile of the decoder weight (PyTorch [out, in] layout)
    # b_ref: (1, TV)  tile of the bias
    # o_ref: (B, TV)  tile of the logits
    h = h_ref[...]
    w = w_ref[...]
    b = b_ref[...]
    # Contract over H directly: (B, H) x (TV, H) -> (B, TV). No transpose of w.
    logits = lax.dot_general(
        h, w,
        dimension_numbers=(((1,), (1,)), ((), ())),
        preferred_element_type=jnp.float32,
    )
    o_ref[...] = (logits + b).astype(o_ref.dtype)


def decoder_forward(last_hidden_state, weight, bias, *, tv=TV):
    """last_hidden_state: [B, S, H] f32; weight: [V, H]; bias: [V] -> logits [B, V]."""
    B, S, Hdim = last_hidden_state.shape
    V_full, Hw = weight.shape
    assert Hdim == Hw

    # Glue: select token at sequence position 15 (out.last_hidden_state[:, 15]).
    h15 = last_hidden_state[:, 15, :]                      # [B, H]

    # Pad vocab up to a multiple of the tile so no tail tile is dropped.
    n_tiles = pl.cdiv(V_full, tv)
    V_pad = n_tiles * tv
    if V_pad != V_full:
        weight = jnp.pad(weight, ((0, V_pad - V_full), (0, 0)))
        bias = jnp.pad(bias, (0, V_pad - V_full))
    bias2d = bias.reshape(1, V_pad)                        # lane-dense 2D view

    out = pl.pallas_call(
        decoder_kernel,
        out_shape=jax.ShapeDtypeStruct((B, V_pad), jnp.float32),
        grid_spec=pltpu.PrefetchScalarGridSpec(
            num_scalar_prefetch=0,
            grid=(n_tiles,),
            in_specs=[
                pl.BlockSpec((B, Hdim), lambda j: (0, 0)),    # hidden, resident every step
                pl.BlockSpec((tv, Hdim), lambda j: (j, 0)),   # contiguous weight tile
                pl.BlockSpec((1, tv), lambda j: (0, j)),      # bias tile
            ],
            out_specs=pl.BlockSpec((B, tv), lambda j: (0, j)),
        ),
        compiler_params=pltpu.CompilerParams(
            # Vocab axis is embarrassingly parallel: lets v7x's 2 TCs split the
            # weight stream; neutral on single-core v5e/v6e.
            dimension_semantics=("parallel",),
            # Double-buffered 6.3 MB weight tiles exceed v5e's 16 MiB scoped
            # default; 48 MiB is safe on all of v5e/v6e (128 MiB) and v7x (64 MiB).
            vmem_limit_bytes=48 * 1024 * 1024,
        ),
    )(h15, weight, bias2d)

    if V_pad != V_full:
        out = out[:, :V_full]
    return out


def synthetic_pretrained(input_ids, attention_mask, token_type_ids, key):
    # TODO(synk): stand-in for the frozen external `pretrained` BERT encoder —
    # produces a deterministic last_hidden_state of the correct shape/dtype.
    k1, k2 = jax.random.split(key)
    word_emb = jax.random.normal(k1, (V, H), jnp.float32) * 0.02
    type_emb = jax.random.normal(k2, (2, H), jnp.float32) * 0.02
    hidden = word_emb[input_ids] + type_emb[token_type_ids]       # [B, S, H]
    hidden = hidden * attention_mask[..., None].astype(jnp.float32)
    return hidden


if __name__ == "__main__":
    key = jax.random.PRNGKey(0)
    k_ids, k_enc, k_w = jax.random.split(key, 3)

    B, S = 2, 32
    input_ids = jax.random.randint(k_ids, (B, S), 0, V, dtype=jnp.int32)
    attention_mask = jnp.ones((B, S), dtype=jnp.int32)
    token_type_ids = jnp.zeros((B, S), dtype=jnp.int32)

    # Deterministic decoder parameters (module __init__: Linear(768, vocab) weight,
    # bias parameter initialized to zeros and attached as the decoder bias).
    dec_weight = jax.random.normal(k_w, (V, H), jnp.float32) * 0.02   # [out, in]
    dec_bias = jnp.zeros((V,), jnp.float32)
    # NOTE: optionally cast dec_weight (and h15) to bf16 to halve HBM traffic on
    # the memory-bound weight stream; kept f32 here for bit-tight reference check.

    # "Frozen encoder" output (glue, not the hot path).
    last_hidden_state = synthetic_pretrained(input_ids, attention_mask,
                                             token_type_ids, k_enc)

    out = decoder_forward(last_hidden_state, dec_weight, dec_bias)
    out = jax.block_until_ready(out)

    # Reference check in plain JAX.
    ref = last_hidden_state[:, 15, :] @ dec_weight.T + dec_bias
    assert out.shape == (B, V)
    assert jnp.allclose(out, ref, atol=1e-4, rtol=1e-4)

    print("KERNEL_OK")
</pallas_src>

<mosaic_0001>
module attributes {stable_mosaic.version = 11 : i64} {
  func.func @decoder_kernel(%arg0: i32, %arg1: memref<2x768xf32, #tpu.memory_space<vmem>>, %arg2: memref<2048x768xf32, #tpu.memory_space<vmem>>, %arg3: memref<1x2048xf32, #tpu.memory_space<vmem>>, %arg4: memref<2x2048xf32, #tpu.memory_space<vmem>>) attributes {dimension_semantics = [#tpu.dimension_semantics<parallel>], iteration_bounds = array<i64: 1>, scalar_prefetch = 0 : i64, scratch_operands = 0 : i64, tpu.core_type = #tpu.core_type<tc>, window_params = [{pipeline_mode = #tpu.pipeline_mode<synchronous>, transform_indices = @transform_0, window_bounds = array<i64: 2, 768>}, {transform_indices = @transform_1, window_bounds = array<i64: 2048, 768>}, {transform_indices = @transform_2, window_bounds = array<i64: 1, 2048>}, {transform_indices = @transform_3, window_bounds = array<i64: 2, 2048>}]} {
    %c0 = arith.constant 0 : index
    %c0_0 = arith.constant 0 : index
    %0 = vector.load %arg1[%c0, %c0_0] : memref<2x768xf32, #tpu.memory_space<vmem>>, vector<2x768xf32>
    %c0_1 = arith.constant 0 : index
    %c0_2 = arith.constant 0 : index
    %1 = vector.load %arg2[%c0_1, %c0_2] : memref<2048x768xf32, #tpu.memory_space<vmem>>, vector<2048x768xf32>
    %c0_3 = arith.constant 0 : index
    %c0_4 = arith.constant 0 : index
    %2 = vector.load %arg3[%c0_3, %c0_4] : memref<1x2048xf32, #tpu.memory_space<vmem>>, vector<1x2048xf32>
    %cst = arith.constant dense<0.000000e+00> : vector<2x2048xf32>
    %3 = tpu.matmul %0, %1, %cst {dimension_numbers = #tpu.dot_dimension_numbers<[1], [1], [0], [0], [0, 0, 1, 0], [], []>} : vector<2x768xf32>, vector<2048x768xf32>, vector<2x2048xf32> -> vector<2x2048xf32>
    %4 = vector.broadcast %2 : vector<1x2048xf32> to vector<2x2048xf32>
    %5 = arith.addf %3, %4 : vector<2x2048xf32>
    %c0_5 = arith.constant 0 : index
    %c0_6 = arith.constant 0 : index
    %6 = vector.load %arg4[%c0_5, %c0_6] : memref<2x2048xf32, #tpu.memory_space<vmem>>, vector<2x2048xf32>
    tpu.vector_store %arg4[%c0_5, %c0_6], %5 {strides = array<i32>} : memref<2x2048xf32, #tpu.memory_space<vmem>>, vector<2x2048xf32>,
    return
  }
  func.func @transform_0(%arg0: i32) -> (i32, i32) {
    %c0_i32 = arith.constant 0 : i32
    %c0_i32_0 = arith.constant 0 : i32
    %c0_i32_1 = arith.constant 0 : i32
    return %c0_i32, %c0_i32_0 : i32, i32
  }
  func.func @transform_1(%arg0: i32) -> (i32, i32) {
    %c0_i32 = arith.constant 0 : i32
    %c0_i32_0 = arith.constant 0 : i32
    return %arg0, %c0_i32 : i32, i32
  }
  func.func @transform_2(%arg0: i32) -> (i32, i32) {
    %c0_i32 = arith.constant 0 : i32
    %c0_i32_0 = arith.constant 0 : i32
    return %c0_i32, %arg0 : i32, i32
  }
  func.func @transform_3(%arg0: i32) -> (i32, i32) {
    %c0_i32 = arith.constant 0 : i32
    %c0_i32_0 = arith.constant 0 : i32
    return %c0_i32, %arg0 : i32, i32
  }
}

</mosaic_0001>

<llo_original>
// kernel: tpu_custom_call.1
$region0: #{tpu_custom_call.1}
  #allocation0 [shape = 'u32[]', space=smem, size = 0x4, offset = 0x4, fixed_abs, tag = 'smem constant byte address 0x4 - core index']
  #allocation1 [shape = 'u32[144,128]{1,0:T(1,128)}', space=vmem, size = 0x12000, scoped, tag = 'internal scratch']
  %s0 = inlined_call_operand.hbm [shape: f32[2,768], index: 0, kind: input, shape index: {}]
  %s1 = inlined_call_operand.hbm [shape: f32[2048,768], index: 1, kind: input, shape index: {}]
  %s2 = inlined_call_operand.hbm [shape: f32[1,2048], index: 2, kind: input, shape index: {}]
  %s3 = inlined_call_operand.hbm [shape: f32[2,2048], index: 3, kind: output, shape index: {}]
  %s4 = sld [smem:[#allocation0]]
  $region34: #{tpu_custom_call.1} parent=0
    _
  %s6 = ssub.s32 1, %s4
  %s7 = scalar_select 0, %s6, %s4
  $region1: #{tpu_custom_call.1} parent=0
    #allocation2 [shape = 'u8[6144]{0}', space=vmem, size = 0x1800, scoped, tag = 'input window, operand 0, single buffered']
    #allocation3 [shape = 's32[1]{0}', space=sflag, size = 0x4, scoped, tag = 'scoped memory for tpu_custom_call.1']
    #allocation4 [shape = 's32[1]{0}', space=sflag, size = 0x4, scoped, tag = 'scoped memory for tpu_custom_call.1']
    #allocation5 [shape = 'u8[6291456]{0}', space=vmem, size = 0x600000, scoped, tag = 'input window, operand 1, single buffered']
    #allocation6 [shape = 's32[1]{0}', space=sflag, size = 0x4, scoped, tag = 'scoped memory for tpu_custom_call.1']
    #allocation7 [shape = 'u8[8192]{0}', space=vmem, size = 0x2000, scoped, tag = 'input window, operand 2, single buffered']
    #allocation8 [shape = 'u8[16384]{0}', space=vmem, size = 0x4000, scoped, tag = 'output window, operand 0, single buffered']
    %8 = vsyncpa [#allocation3], 0
    %9 = vsyncpa [#allocation6], 0
    %10 = vsyncpa [#allocation4], 0
    // Predicated region
    $region2: #{tpu_custom_call.1} parent=1 // pred_check
      _
    $region3: #{tpu_custom_call.1} parent=1 // pred_check_branch
      %12 = sbr.rel (0) target = $region5
    $region4: #{tpu_custom_call.1} parent=1 // pred_region
      %s14 = ssub.s32 192, 192
      %15 = vsyncadd [#allocation3], %s14
      %s17 = sshll.u32 [#allocation2], 4
      %s18 = int_to_ptr.vmem [resolvable:$true] %s17
      %20 = dma.hbm_to_vmem [thread:$0]  %s0, 192, %s18, [#allocation3]
    $region5: #{tpu_custom_call.1} parent=1 // pred_fallthru
      _
    // Predicated region
    $region6: #{tpu_custom_call.1} parent=1 // pred_check
      _
    $region7: #{tpu_custom_call.1} parent=1 // pred_check_branch
      %22 = sbr.rel (0) target = $region9
    $region8: #{tpu_custom_call.1} parent=1 // pred_region
      %s24 = ssub.s32 196608, 196608
      %25 = vsyncadd [#allocation6], %s24
      %s26 = sshll.u32 [#allocation5], 4
      %s27 = int_to_ptr.vmem [resolvable:$true] %s26
      %32 = dma.hbm_to_vmem [thread:$0]  %s1, 196608, %s27, [#allocation6], 768, 768, 48
    $region9: #{tpu_custom_call.1} parent=1 // pred_fallthru
      _
    // Predicated region
    $region10: #{tpu_custom_call.1} parent=1 // pred_check
      _
    $region11: #{tpu_custom_call.1} parent=1 // pred_check_branch
      %34 = sbr.rel (0) target = $region13
    $region12: #{tpu_custom_call.1} parent=1 // pred_region
      %s36 = ssub.s32 256, 256
      %37 = vsyncadd [#allocation6], %s36
      %s39 = sshll.u32 [#allocation7], 4
      %s40 = int_to_ptr.vmem [resolvable:$true] %s39
      %42 = dma.hbm_to_vmem [thread:$0]  %s2, 256, %s40, [#allocation6]
    $region13: #{tpu_custom_call.1} parent=1 // pred_fallthru
      _
    // Predicated region
    $region14: #{tpu_custom_call.1} parent=1 // pred_check
      _
    $region15: #{tpu_custom_call.1} parent=1 // pred_check_branch
      %44 = sbr.rel (0) target = $region17
    $region16: #{tpu_custom_call.1} parent=1 // pred_region
      %45 = dma.done [#allocation3], 192
    $region17: #{tpu_custom_call.1} parent=1 // pred_fallthru
      _
    // Predicated region
    $region18: #{tpu_custom_call.1} parent=1 // pred_check
      _
    $region19: #{tpu_custom_call.1} parent=1 // pred_check_branch
      %47 = sbr.rel (0) target = $region21
    $region20: #{tpu_custom_call.1} parent=1 // pred_region
      %48 = dma.done [#allocation6], 196608
    $region21: #{tpu_custom_call.1} parent=1 // pred_fallthru
      _
    // Predicated region
    $region22: #{tpu_custom_call.1} parent=1 // pred_check
      _
    $region23: #{tpu_custom_call.1} parent=1 // pred_check_branch
      %50 = sbr.rel (0) target = $region25
    $region24: #{tpu_custom_call.1} parent=1 // pred_region
      %51 = dma.done [#allocation6], 256
    $region25: #{tpu_custom_call.1} parent=1 // pred_fallthru
      _
    %v52 = vld [vmem:[#allocation2] sm:$0xff]
    %v53 = vld [vmem:[#allocation2 + $0x8] sm:$0xf]
    %v54 = vld [vmem:[#allocation5] sm:$0xff]
    %v55 = vld [vmem:[#allocation5 + $0x8] sm:$0xff]
    %v56 = vld [vmem:[#allocation5 + $0x10] sm:$0xff]
    %v57 = vld [vmem:[#allocation5 + $0x18] sm:$0xff]
    %v58 = vld [vmem:[#allocation5 + $0x20] sm:$0xff]
    %v59 = vld [vmem:[#allocation5 + $0x28] sm:$0xff]
    %v60 = vld [vmem:[#allocation5 + $0x30] sm:$0xff]
    %v61 = vld [vmem:[#allocation5 + $0x38] sm:$0xff]
    %v62 = vld [vmem:[#allocation5 + $0x40] sm:$0xff]
    %v63 = vld [vmem:[#allocation5 + $0x48] sm:$0xff]
    %v64 = vld [vmem:[#allocation5 + $0x50] sm:$0xff]
    %v65 = vld [vmem:[#allocation5 + $0x58] sm:$0xff]
    %v66 = vld [vmem:[#allocation5 + $0x60] sm:$0xff]
    %v67 = vld [vmem:[#allocation5 + $0x68] sm:$0xff]
    %v68 = vld [vmem:[#allocation5 + $0x70] sm:$0xff]
    %v69 = vld [vmem:[#allocation5 + $0x78] sm:$0xff]
    %v70 = vld [vmem:[#allocation5 + $0x80] sm:$0xff]
    %v71 = vld [vmem:[#allocation5 + $0x88] sm:$0xff]
    %v72 = vld [vmem:[#allocation5 + $0x90] sm:$0xff]
    %v73 = vld [vmem:[#allocation5 + $0x98] sm:$0xff]
    %v74 = vld [vmem:[#allocation5 + $0xa0] sm:$0xff]
    %v75 = vld [vmem:[#allocation5 + $0xa8] sm:$0xff]
    %v76 = vld [vmem:[#allocation5 + $0xb0] sm:$0xff]
    %v77 = vld [vmem:[#allocation5 + $0xb8] sm:$0xff]
    %v78 = vld [vmem:[#allocation5 + $0xc0] sm:$0xff]
    %v79 = vld [vmem:[#allocation5 + $0xc8] sm:$0xff]
    %v80 = vld [vmem:[#allocation5 + $0xd0] sm:$0xff]
    %v81 = vld [vmem:[#allocation5 + $0xd8] sm:$0xff]
    %v82 = vld [vmem:[#allocation5 + $0xe0] sm:$0xff]
    %v83 = vld [vmem:[#allocation5 + $0xe8] sm:$0xff]
    %v84 = vld [vmem:[#allocation5 + $0xf0] sm:$0xff]
    %v85 = vld [vmem:[#allocation5 + $0xf8] sm:$0xff]
    %v86 = vld [vmem:[#allocation5 + $0x100] sm:$0xff]
    %v87 = vld [vmem:[#allocation5 + $0x108] sm:$0xff]
    %v88 = vld [vmem:[#allocation5 + $0x110] sm:$0xff]
    %v89 = vld [vmem:[#allocation5 + $0x118] sm:$0xff]
    %v90 = vld [vmem:[#allocation5 + $0x120] sm:$0xff]
    %v91 = vld [vmem:[#allocation5 + $0x128] sm:$0xff]
    %v92 = vld [vmem:[#allocation5 + $0x130] sm:$0xff]
    %v93 = vld [vmem:[#allocation5 + $0x138] sm:$0xff]
    %v94 = vld [vmem:[#allocation5 + $0x140] sm:$0xff]
    %v95 = vld [vmem:[#allocation5 + $0x148] sm:$0xff]
    %v96 = vld [vmem:[#allocation5 + $0x150] sm:$0xff]
    %v97 = vld [vmem:[#allocation5 + $0x158] sm:$0xff]
    %v98 = vld [vmem:[#allocation5 + $0x160] sm:$0xff]
    %v99 = vld [vmem:[#allocation5 + $0x168] sm:$0xff]
    %v100 = vld [vmem:[#allocation5 + $0x170] sm:$0xff]
    %v101 = vld [vmem:[#allocation5 + $0x178] sm:$0xff]
    %v102 = vld [vmem:[#allocation5 + $0x180] sm:$0xff]
    %v103 = vld [vmem:[#allocation5 + $0x188] sm:$0xff]
    %v104 = vld [vmem:[#allocation5 + $0x190] sm:$0xff]
    %v105 = vld [vmem:[#allocation5 + $0x198] sm:$0xff]
    %v106 = vld [vmem:[#allocation5 + $0x1a0] sm:$0xff]
    %v107 = vld [vmem:[#allocation5 + $0x1a8] sm:$0xff]
    %v108 = vld [vmem:[#allocation5 + $0x1b0] sm:$0xff]
    %v109 = vld [vmem:[#allocation5 + $0x1b8] sm:$0xff]
    %v110 = vld [vmem:[#allocation5 + $0x1c0] sm:$0xff]
    %v111 = vld [vmem:[#allocation5 + $0x1c8] sm:$0xff]
    %v112 = vld [vmem:[#allocation5 + $0x1d0] sm:$0xff]
    %v113 = vld [vmem:[#allocation5 + $0x1d8] sm:$0xff]
    %v114 = vld [vmem:[#allocation5 + $0x1e0] sm:$0xff]
    %v115 = vld [vmem:[#allocation5 + $0x1e8] sm:$0xff]
    %v116 = vld [vmem:[#allocation5 + $0x1f0] sm:$0xff]
    %v117 = vld [vmem:[#allocation5 + $0x1f8] sm:$0xff]
    %v118 = vld [vmem:[#allocation5 + $0x200] sm:$0xff]
    %v119 = vld [vmem:[#allocation5 + $0x208] sm:$0xff]
    %v120 = vld [vmem:[#allocation5 + $0x210] sm:$0xff]
    %v121 = vld [vmem:[#allocation5 + $0x218] sm:$0xff]
    %v122 = vld [vmem:[#allocation5 + $0x220] sm:$0xff]
    %v123 = vld [vmem:[#allocation5 + $0x228] sm:$0xff]
    %v124 = vld [vmem:[#allocation5 + $0x230] sm:$0xff]
    %v125 = vld [vmem:[#allocation5 + $0x238] sm:$0xff]
    %v126 = vld [vmem:[#allocation5 + $0x240] sm:$0xff]
    %v127 = vld [vmem:[#allocation5 + $0x248] sm:$0xff]
    %v128 = vld [vmem:[#allocation5 + $0x250] sm:$0xff]
    %v129 = vld [vmem:[#allocation5 + $0x258] sm:$0xff]
    %v130 = vld [vmem:[#allocation5 + $0x260] sm:$0xff]
    %v131 = vld [vmem:[#allocation5 + $0x268] sm:$0xff]
    %v132 = vld [vmem:[#allocation5 + $0x270] sm:$0xff]
    %v133 = vld [vmem:[#allocation5 + $0x278] sm:$0xff]
    %v134 = vld [vmem:[#allocation5 + $0x280] sm:$0xff]
    %v135 = vld [vmem:[#allocation5 + $0x288] sm:$0xff]
    %v136 = vld [vmem:[#allocation5 + $0x290] sm:$0xff]
    %v137 = vld [vmem:[#allocation5 + $0x298] sm:$0xff]
    %v138 = vld [vmem:[#allocation5 + $0x2a0] sm:$0xff]
    %v139 = vld [vmem:[#allocation5 + $0x2a8] sm:$0xff]
    %v140 = vld [vmem:[#allocation5 + $0x2b0] sm:$0xff]
    %v141 = vld [vmem:[#allocation5 + $0x2b8] sm:$0xff]
    %v142 = vld [vmem:[#allocation5 + $0x2c0] sm:$0xff]
    %v143 = vld [vmem:[#allocation5 + $0x2c8] sm:$0xff]
    %v144 = vld [vmem:[#allocation5 + $0x2d0] sm:$0xff]
    %v145 = vld [vmem:[#allocation5 + $0x2d8] sm:$0xff]
    %v146 = vld [vmem:[#allocation5 + $0x2e0] sm:$0xff]
    %v147 = vld [vmem:[#allocation5 + $0x2e8] sm:$0xff]
    %v148 = vld [vmem:[#allocation5 + $0x2f0] sm:$0xff]
    %v149 = vld [vmem:[#allocation5 + $0x2f8] sm:$0xff]
    %v150 = vld [vmem:[#allocation5 + $0x300] sm:$0xff]
    %v151 = vld [vmem:[#allocation5 + $0x308] sm:$0xff]
    %v152 = vld [vmem:[#allocation5 + $0x310] sm:$0xff]
    %v153 = vld [vmem:[#allocation5 + $0x318] sm:$0xff]
    %v154 = vld [vmem:[#allocation5 + $0x320] sm:$0xff]
    %v155 = vld [vmem:[#allocation5 + $0x328] sm:$0xff]
    %v156 = vld [vmem:[#allocation5 + $0x330] sm:$0xff]
    %v157 = vld [vmem:[#allocation5 + $0x338] sm:$0xff]
    %v158 = vld [vmem:[#allocation5 + $0x340] sm:$0xff]
    %v159 = vld [vmem:[#allocation5 + $0x348] sm:$0xff]
    %v160 = vld [vmem:[#allocation5 + $0x350] sm:$0xff]
    %v161 = vld [vmem:[#allocation5 + $0x358] sm:$0xff]
    %v162 = vld [vmem:[#allocation5 + $0x360] sm:$0xff]
    %v163 = vld [vmem:[#allocation5 + $0x368] sm:$0xff]
    %v164 = vld [vmem:[#allocation5 + $0x370] sm:$0xff]
    %v165 = vld [vmem:[#allocation5 + $0x378] sm:$0xff]
    %v166 = vld [vmem:[#allocation5 + $0x380] sm:$0xff]
    %v167 = vld [vmem:[#allocation5 + $0x388] sm:$0xff]
    %v168 = vld [vmem:[#allocation5 + $0x390] sm:$0xff]
    %v169 = vld [vmem:[#allocation5 + $0x398] sm:$0xff]
    %v170 = vld [vmem:[#allocation5 + $0x3a0] sm:$0xff]
    %v171 = vld [vmem:[#allocation5 + $0x3a8] sm:$0xff]
    %v172 = vld [vmem:[#allocation5 + $0x3b0] sm:$0xff]
    %v173 = vld [vmem:[#allocation5 + $0x3b8] sm:$0xff]
    %v174 = vld [vmem:[#allocation5 + $0x3c0] sm:$0xff]
    %v175 = vld [vmem:[#allocation5 + $0x3c8] sm:$0xff]
    %v176 = vld [vmem:[#allocation5 + $0x3d0] sm:$0xff]
    %v177 = vld [vmem:[#allocation5 + $0x3d8] sm:$0xff]
    %v178 = vld [vmem:[#allocation5 + $0x3e0] sm:$0xff]
    %v179 = vld [vmem:[#allocation5 + $0x3e8] sm:$0xff]
    %v180 = vld [vmem:[#allocation5 + $0x3f0] sm:$0xff]
    %v181 = vld [vmem:[#allocation5 + $0x3f8] sm:$0xff]
    %v182 = vld [vmem:[#allocation5 + $0x400] sm:$0xff]
    %v183 = vld [vmem:[#allocation5 + $0x408] sm:$0xff]
    %v184 = vld [vmem:[#allocation5 + $0x410] sm:$0xff]
    %v185 = vld [vmem:[#allocation5 + $0x418] sm:$0xff]
    %v186 = vld [vmem:[#allocation5 + $0x420] sm:$0xff]
    %v187 = vld [vmem:[#allocation5 + $0x428] sm:$0xff]
    %v188 = vld [vmem:[#allocation5 + $0x430] sm:$0xff]
    %v189 = vld [vmem:[#allocation5 + $0x438] sm:$0xff]
    %v190 = vld [vmem:[#allocation5 + $0x440] sm:$0xff]
    %v191 = vld [vmem:[#allocation5 + $0x448] sm:$0xff]
    %v192 = vld [vmem:[#allocation5 + $0x450] sm:$0xff]
    %v193 = vld [vmem:[#allocation5 + $0x458] sm:$0xff]
    %v194 = vld [vmem:[#allocation5 + $0x460] sm:$0xff]
    %v195 = vld [vmem:[#allocation5 + $0x468] sm:$0xff]
    %v196 = vld [vmem:[#allocation5 + $0x470] sm:$0xff]
    %v197 = vld [vmem:[#allocation5 + $0x478] sm:$0xff]
    %v198 = vld [vmem:[#allocation5 + $0x480] sm:$0xff]
    %v199 = vld [vmem:[#allocation5 + $0x488] sm:$0xff]
    %v200 = vld [vmem:[#allocation5 + $0x490] sm:$0xff]
    %v201 = vld [vmem:[#allocation5 + $0x498] sm:$0xff]
    %v202 = vld [vmem:[#allocation5 + $0x4a0] sm:$0xff]
    %v203 = vld [vmem:[#allocation5 + $0x4a8] sm:$0xff]
    %v204 = vld [vmem:[#allocation5 + $0x4b0] sm:$0xff]
    %v205 = vld [vmem:[#allocation5 + $0x4b8] sm:$0xff]
    %v206 = vld [vmem:[#allocation5 + $0x4c0] sm:$0xff]
    %v207 = vld [vmem:[#allocation5 + $0x4c8] sm:$0xff]
    %v208 = vld [vmem:[#allocation5 + $0x4d0] sm:$0xff]
    %v209 = vld [vmem:[#allocation5 + $0x4d8] sm:$0xff]
    %v210 = vld [vmem:[#allocation5 + $0x4e0] sm:$0xff]
    %v211 = vld [vmem:[#allocation5 + $0x4e8] sm:$0xff]
    %v212 = vld [vmem:[#allocation5 + $0x4f0] sm:$0xff]
    %v213 = vld [vmem:[#allocation5 + $0x4f8] sm:$0xff]
    %v214 = vld [vmem:[#allocation5 + $0x500] sm:$0xff]
    %v215 = vld [vmem:[#allocation5 + $0x508] sm:$0xff]
    %v216 = vld [vmem:[#allocation5 + $0x510] sm:$0xff]
    %v217 = vld [vmem:[#allocation5 + $0x518] sm:$0xff]
    %v218 = vld [vmem:[#allocation5 + $0x520] sm:$0xff]
    %v219 = vld [vmem:[#allocation5 + $0x528] sm:$0xff]
    %v220 = vld [vmem:[#allocation5 + $0x530] sm:$0xff]
    %v221 = vld [vmem:[#allocation5 + $0x538] sm:$0xff]
    %v222 = vld [vmem:[#allocation5 + $0x540] sm:$0xff]
    %v223 = vld [vmem:[#allocation5 + $0x548] sm:$0xff]
    %v224 = vld [vmem:[#allocation5 + $0x550] sm:$0xff]
    %v225 = vld [vmem:[#allocation5 + $0x558] sm:$0xff]
    %v226 = vld [vmem:[#allocation5 + $0x560] sm:$0xff]
    %v227 = vld [vmem:[#allocation5 + $0x568] sm:$0xff]
    %v228 = vld [vmem:[#allocation5 + $0x570] sm:$0xff]
    %v229 = vld [vmem:[#allocation5 + $0x578] sm:$0xff]
    %v230 = vld [vmem:[#allocation5 + $0x580] sm:$0xff]
    %v231 = vld [vmem:[#allocation5 + $0x588] sm:$0xff]
    %v232 = vld [vmem:[#allocation5 + $0x590] sm:$0xff]
    %v233 = vld [vmem:[#allocation5 + $0x598] sm:$0xff]
    %v234 = vld [vmem:[#allocation5 + $0x5a0] sm:$0xff]
    %v235 = vld [vmem:[#allocation5 + $0x5a8] sm:$0xff]
    %v236 = vld [vmem:[#allocation5 + $0x5b0] sm:$0xff]
    %v237 = vld [vmem:[#allocation5 + $0x5b8] sm:$0xff]
    %v238 = vld [vmem:[#allocation5 + $0x5c0] sm:$0xff]
    %v239 = vld [vmem:[#allocation5 + $0x5c8] sm:$0xff]
    %v240 = vld [vmem:[#allocation5 + $0x5d0] sm:$0xff]
    %v241 = vld [vmem:[#allocation5 + $0x5d8] sm:$0xff]
    %v242 = vld [vmem:[#allocation5 + $0x5e0] sm:$0xff]
    %v243 = vld [vmem:[#allocation5 + $0x5e8] sm:$0xff]
    %v244 = vld [vmem:[#allocation5 + $0x5f0] sm:$0xff]
    %v245 = vld [vmem:[#allocation5 + $0x5f8] sm:$0xff]
    %v246 = vld [vmem:[#allocation5 + $0x600] sm:$0xff]
    %v247 = vld [vmem:[#allocation5 + $0x608] sm:$0xff]
    %v248 = vld [vmem:[#allocation5 + $0x610] sm:$0xff]
    %v249 = vld [vmem:[#allocation5 + $0x618] sm:$0xff]
    %v250 = vld [vmem:[#allocation5 + $0x620] sm:$0xff]
    %v251 = vld [vmem:[#allocation5 + $0x628] sm:$0xff]
    %v252 = vld [vmem:[#allocation5 + $0x630] sm:$0xff]
    %v253 = vld [vmem:[#allocation5 + $0x638] sm:$0xff]
    %v254 = vld [vmem:[#allocation5 + $0x640] sm:$0xff]
    %v255 = vld [vmem:[#allocation5 + $0x648] sm:$0xff]
    %v256 = vld [vmem:[#allocation5 + $0x650] sm:$0xff]
    %v257 = vld [vmem:[#allocation5 + $0x658] sm:$0xff]
    %v258 = vld [vmem:[#allocation5 + $0x660] sm:$0xff]
    %v259 = vld [vmem:[#allocation5 + $0x668] sm:$0xff]
    %v260 = vld [vmem:[#allocation5 + $0x670] sm:$0xff]
    %v261 = vld [vmem:[#allocation5 + $0x678] sm:$0xff]
    %v262 = vld [vmem:[#allocation5 + $0x680] sm:$0xff]
    %v263 = vld [vmem:[#allocation5 + $0x688] sm:$0xff]
    %v264 = vld [vmem:[#allocation5 + $0x690] sm:$0xff]
    %v265 = vld [vmem:[#allocation5 + $0x698] sm:$0xff]
    %v266 = vld [vmem:[#allocation5 + $0x6a0] sm:$0xff]
    %v267 = vld [vmem:[#allocation5 + $0x6a8] sm:$0xff]
    %v268 = vld [vmem:[#allocation5 + $0x6b0] sm:$0xff]
    %v269 = vld [vmem:[#allocation5 + $0x6b8] sm:$0xff]
    %v270 = vld [vmem:[#allocation5 + $0x6c0] sm:$0xff]
    %v271 = vld [vmem:[#allocation5 + $0x6c8] sm:$0xff]
    %v272 = vld [vmem:[#allocation5 + $0x6d0] sm:$0xff]
    %v273 = vld [vmem:[#allocation5 + $0x6d8] sm:$0xff]
    %v274 = vld [vmem:[#allocation5 + $0x6e0] sm:$0xff]
    %v275 = vld [vmem:[#allocation5 + $0x6e8] sm:$0xff]
    %v276 = vld [vmem:[#allocation5 + $0x6f0] sm:$0xff]
    %v277 = vld [vmem:[#allocation5 + $0x6f8] sm:$0xff]
    %v278 = vld [vmem:[#allocation5 + $0x700] sm:$0xff]
    %v279 = vld [vmem:[#allocation5 + $0x708] sm:$0xff]
    %v280 = vld [vmem:[#allocation5 + $0x710] sm:$0xff]
    %v281 = vld [vmem:[#allocation5 + $0x718] sm:$0xff]
    %v282 = vld [vmem:[#allocation5 + $0x720] sm:$0xff]
    %v283 = vld [vmem:[#allocation5 + $0x728] sm:$0xff]
    %v284 = vld [vmem:[#allocation5 + $0x730] sm:$0xff]
    %v285 = vld [vmem:[#allocation5 + $0x738] sm:$0xff]
    %v286 = vld [vmem:[#allocation5 + $0x740] sm:$0xff]
    %v287 = vld [vmem:[#allocation5 + $0x748] sm:$0xff]
    %v288 = vld [vmem:[#allocation5 + $0x750] sm:$0xff]
    %v289 = vld [vmem:[#allocation5 + $0x758] sm:$0xff]
    %v290 = vld [vmem:[#allocation5 + $0x760] sm:$0xff]
    %v291 = vld [vmem:[#allocation5 + $0x768] sm:$0xff]
    %v292 = vld [vmem:[#allocation5 + $0x770] sm:$0xff]
    %v293 = vld [vmem:[#allocation5 + $0x778] sm:$0xff]
    %v294 = vld [vmem:[#allocation5 + $0x780] sm:$0xff]
    %v295 = vld [vmem:[#allocation5 + $0x788] sm:$0xff]
    %v296 = vld [vmem:[#allocation5 + $0x790] sm:$0xff]
    %v297 = vld [vmem:[#allocation5 + $0x798] sm:$0xff]
    %v298 = vld [vmem:[#allocation5 + $0x7a0] sm:$0xff]
    %v299 = vld [vmem:[#allocation5 + $0x7a8] sm:$0xff]
    %v300 = vld [vmem:[#allocation5 + $0x7b0] sm:$0xff]
    %v301 = vld [vmem:[#allocation5 + $0x7b8] sm:$0xff]
    %v302 = vld [vmem:[#allocation5 + $0x7c0] sm:$0xff]
    %v303 = vld [vmem:[#allocation5 + $0x7c8] sm:$0xff]
    %v304 = vld [vmem:[#allocation5 + $0x7d0] sm:$0xff]
    %v305 = vld [vmem:[#allocation5 + $0x7d8] sm:$0xff]
    %v306 = vld [vmem:[#allocation5 + $0x7e0] sm:$0xff]
    %v307 = vld [vmem:[#allocation5 + $0x7e8] sm:$0xff]
    %v308 = vld [vmem:[#allocation5 + $0x7f0] sm:$0xff]
    %v309 = vld [vmem:[#allocation5 + $0x7f8] sm:$0xff]
    %v310 = vld [vmem:[#allocation5 + $0x800] sm:$0xff]
    %v311 = vld [vmem:[#allocation5 + $0x808] sm:$0xff]
    %v312 = vld [vmem:[#allocation5 + $0x810] sm:$0xff]
    %v313 = vld [vmem:[#allocation5 + $0x818] sm:$0xff]
    %v314 = vld [vmem:[#allocation5 + $0x820] sm:$0xff]
    %v315 = vld [vmem:[#allocation5 + $0x828] sm:$0xff]
    %v316 = vld [vmem:[#allocation5 + $0x830] sm:$0xff]
    %v317 = vld [vmem:[#allocation5 + $0x838] sm:$0xff]
    %v318 = vld [vmem:[#allocation5 + $0x840] sm:$0xff]
    %v319 = vld [vmem:[#allocation5 + $0x848] sm:$0xff]
    %v320 = vld [vmem:[#allocation5 + $0x850] sm:$0xff]
    %v321 = vld [vmem:[#allocation5 + $0x858] sm:$0xff]
    %v322 = vld [vmem:[#allocation5 + $0x860] sm:$0xff]
    %v323 = vld [vmem:[#allocation5 + $0x868] sm:$0xff]
    %v324 = vld [vmem:[#allocation5 + $0x870] sm:$0xff]
    %v325 = vld [vmem:[#allocation5 + $0x878] sm:$0xff]
    %v326 = vld [vmem:[#allocation5 + $0x880] sm:$0xff]
    %v327 = vld [vmem:[#allocation5 + $0x888] sm:$0xff]
    %v328 = vld [vmem:[#allocation5 + $0x890] sm:$0xff]
    %v329 = vld [vmem:[#allocation5 + $0x898] sm:$0xff]
    %v330 = vld [vmem:[#allocation5 + $0x8a0] sm:$0xff]
    %v331 = vld [vmem:[#allocation5 + $0x8a8] sm:$0xff]
    %v332 = vld [vmem:[#allocation5 + $0x8b0] sm:$0xff]
    %v333 = vld [vmem:[#allocation5 + $0x8b8] sm:$0xff]
    %v334 = vld [vmem:[#allocation5 + $0x8c0] sm:$0xff]
    %v335 = vld [vmem:[#allocation5 + $0x8c8] sm:$0xff]
    %v336 = vld [vmem:[#allocation5 + $0x8d0] sm:$0xff]
    %v337 = vld [vmem:[#allocation5 + $0x8d8] sm:$0xff]
    %v338 = vld [vmem:[#allocation5 + $0x8e0] sm:$0xff]
    %v339 = vld [vmem:[#allocation5 + $0x8e8] sm:$0xff]
    %v340 = vld [vmem:[#allocation5 + $0x8f0] sm:$0xff]
    %v341 = vld [vmem:[#allocation5 + $0x8f8] sm:$0xff]
    %v342 = vld [vmem:[#allocation5 + $0x900] sm:$0xff]
    %v343 = vld [vmem:[#allocation5 + $0x908] sm:$0xff]
    %v344 = vld [vmem:[#allocation5 + $0x910] sm:$0xff]
    %v345 = vld [vmem:[#allocation5 + $0x918] sm:$0xff]
    %v346 = vld [vmem:[#allocation5 + $0x920] sm:$0xff]
    %v347 = vld [vmem:[#allocation5 + $0x928] sm:$0xff]
    %v348 = vld [vmem:[#allocation5 + $0x930] sm:$0xff]
    %v349 = vld [vmem:[#allocation5 + $0x938] sm:$0xff]
    %v350 = vld [vmem:[#allocation5 + $0x940] sm:$0xff]
    %v351 = vld [vmem:[#allocation5 + $0x948] sm:$0xff]
    %v352 = vld [vmem:[#allocation5 + $0x950] sm:$0xff]
    %v353 = vld [vmem:[#allocation5 + $0x958] sm:$0xff]
    %v354 = vld [vmem:[#allocation5 + $0x960] sm:$0xff]
    %v355 = vld [vmem:[#allocation5 + $0x968] sm:$0xff]
    %v356 = vld [vmem:[#allocation5 + $0x970] sm:$0xff]
    %v357 = vld [vmem:[#allocation5 + $0x978] sm:$0xff]
    %v358 = vld [vmem:[#allocation5 + $0x980] sm:$0xff]
    %v359 = vld [vmem:[#allocation5 + $0x988] sm:$0xff]
    %v360 = vld [vmem:[#allocation5 + $0x990] sm:$0xff]
    %v361 = vld [vmem:[#allocation5 + $0x998] sm:$0xff]
    %v362 = vld [vmem:[#allocation5 + $0x9a0] sm:$0xff]
    %v363 = vld [vmem:[#allocation5 + $0x9a8] sm:$0xff]
    %v364 = vld [vmem:[#allocation5 + $0x9b0] sm:$0xff]
    %v365 = vld [vmem:[#allocation5 + $0x9b8] sm:$0xff]
    %v366 = vld [vmem:[#allocation5 + $0x9c0] sm:$0xff]
    %v367 = vld [vmem:[#allocation5 + $0x9c8] sm:$0xff]
    %v368 = vld [vmem:[#allocation5 + $0x9d0] sm:$0xff]
    %v369 = vld [vmem:[#allocation5 + $0x9d8] sm:$0xff]
    %v370 = vld [vmem:[#allocation5 + $0x9e0] sm:$0xff]
    %v371 = vld [vmem:[#allocation5 + $0x9e8] sm:$0xff]
    %v372 = vld [vmem:[#allocation5 + $0x9f0] sm:$0xff]
    %v373 = vld [vmem:[#allocation5 + $0x9f8] sm:$0xff]
    %v374 = vld [vmem:[#allocation5 + $0xa00] sm:$0xff]
    %v375 = vld [vmem:[#allocation5 + $0xa08] sm:$0xff]
    %v376 = vld [vmem:[#allocation5 + $0xa10] sm:$0xff]
    %v377 = vld [vmem:[#allocation5 + $0xa18] sm:$0xff]
    %v378 = vld [vmem:[#allocation5 + $0xa20] sm:$0xff]
    %v379 = vld [vmem:[#allocation5 + $0xa28] sm:$0xff]
    %v380 = vld [vmem:[#allocation5 + $0xa30] sm:$0xff]
    %v381 = vld [vmem:[#allocation5 + $0xa38] sm:$0xff]
    %v382 = vld [vmem:[#allocation5 + $0xa40] sm:$0xff]
    %v383 = vld [vmem:[#allocation5 + $0xa48] sm:$0xff]
    %v384 = vld [vmem:[#allocation5 + $0xa50] sm:$0xff]
    %v385 = vld [vmem:[#allocation5 + $0xa58] sm:$0xff]
    %v386 = vld [vmem:[#allocation5 + $0xa60] sm:$0xff]
    %v387 = vld [vmem:[#allocation5 + $0xa68] sm:$0xff]
    %v388 = vld [vmem:[#allocation5 + $0xa70] sm:$0xff]
    %v389 = vld [vmem:[#allocation5 + $0xa78] sm:$0xff]
    %v390 = vld [vmem:[#allocation5 + $0xa80] sm:$0xff]
    %v391 = vld [vmem:[#allocation5 + $0xa88] sm:$0xff]
    %v392 = vld [vmem:[#allocation5 + $0xa90] sm:$0xff]
    %v393 = vld [vmem:[#allocation5 + $0xa98] sm:$0xff]
    %v394 = vld [vmem:[#allocation5 + $0xaa0] sm:$0xff]
    %v395 = vld [vmem:[#allocation5 + $0xaa8] sm:$0xff]
    %v396 = vld [vmem:[#allocation5 + $0xab0] sm:$0xff]
    %v397 = vld [vmem:[#allocation5 + $0xab8] sm:$0xff]
    %v398 = vld [vmem:[#allocation5 + $0xac0] sm:$0xff]
    %v399 = vld [vmem:[#allocation5 + $0xac8] sm:$0xff]
    %v400 = vld [vmem:[#allocation5 + $0xad0] sm:$0xff]
    %v401 = vld [vmem:[#allocation5 + $0xad8] sm:$0xff]
    %v402 = vld [vmem:[#allocation5 + $0xae0] sm:$0xff]
    %v403 = vld [vmem:[#allocation5 + $0xae8] sm:$0xff]
    %v404 = vld [vmem:[#allocation5 + $0xaf0] sm:$0xff]
    %v405 = vld [vmem:[#allocation5 + $0xaf8] sm:$0xff]
    %v406 = vld [vmem:[#allocation5 + $0xb00] sm:$0xff]
    %v407 = vld [vmem:[#allocation5 + $0xb08] sm:$0xff]
    %v408 = vld [vmem:[#allocation5 + $0xb10] sm:$0xff]
    %v409 = vld [vmem:[#allocation5 + $0xb18] sm:$0xff]
    %v410 = vld [vmem:[#allocation5 + $0xb20] sm:$0xff]
    %v411 = vld [vmem:[#allocation5 + $0xb28] sm:$0xff]
    %v412 = vld [vmem:[#allocation5 + $0xb30] sm:$0xff]
    %v413 = vld [vmem:[#allocation5 + $0xb38] sm:$0xff]
    %v414 = vld [vmem:[#allocation5 + $0xb40] sm:$0xff]
    %v415 = vld [vmem:[#allocation5 + $0xb48] sm:$0xff]
    %v416 = vld [vmem:[#allocation5 + $0xb50] sm:$0xff]
    %v417 = vld [vmem:[#allocation5 + $0xb58] sm:$0xff]
    %v418 = vld [vmem:[#allocation5 + $0xb60] sm:$0xff]
    %v419 = vld [vmem:[#allocation5 + $0xb68] sm:$0xff]
    %v420 = vld [vmem:[#allocation5 + $0xb70] sm:$0xff]
    %v421 = vld [vmem:[#allocation5 + $0xb78] sm:$0xff]
    %v422 = vld [vmem:[#allocation5 + $0xb80] sm:$0xff]
    %v423 = vld [vmem:[#allocation5 + $0xb88] sm:$0xff]
    %v424 = vld [vmem:[#allocation5 + $0xb90] sm:$0xff]
    %v425 = vld [vmem:[#allocation5 + $0xb98] sm:$0xff]
    %v426 = vld [vmem:[#allocation5 + $0xba0] sm:$0xff]
    %v427 = vld [vmem:[#allocation5 + $0xba8] sm:$0xff]
    %v428 = vld [vmem:[#allocation5 + $0xbb0] sm:$0xff]
    %v429 = vld [vmem:[#allocation5 + $0xbb8] sm:$0xff]
    %v430 = vld [vmem:[#allocation5 + $0xbc0] sm:$0xff]
    %v431 = vld [vmem:[#allocation5 + $0xbc8] sm:$0xff]
    %v432 = vld [vmem:[#allocation5 + $0xbd0] sm:$0xff]
    %v433 = vld [vmem:[#allocation5 + $0xbd8] sm:$0xff]
    %v434 = vld [vmem:[#allocation5 + $0xbe0] sm:$0xff]
    %v435 = vld [vmem:[#allocation5 + $0xbe8] sm:$0xff]
    %v436 = vld [vmem:[#allocation5 + $0xbf0] sm:$0xff]
    %v437 = vld [vmem:[#allocation5 + $0xbf8] sm:$0xff]
    %v438 = vld [vmem:[#allocation5 + $0xc00] sm:$0xff]
    %v439 = vld [vmem:[#allocation5 + $0xc08] sm:$0xff]
    %v440 = vld [vmem:[#allocation5 + $0xc10] sm:$0xff]
    %v441 = vld [vmem:[#allocation5 + $0xc18] sm:$0xff]
    %v442 = vld [vmem:[#allocation5 + $0xc20] sm:$0xff]
    %v443 = vld [vmem:[#allocation5 + $0xc28] sm:$0xff]
    %v444 = vld [vmem:[#allocation5 + $0xc30] sm:$0xff]
    %v445 = vld [vmem:[#allocation5 + $0xc38] sm:$0xff]
    %v446 = vld [vmem:[#allocation5 + $0xc40] sm:$0xff]
    %v447 = vld [vmem:[#allocation5 + $0xc48] sm:$0xff]
    %v448 = vld [vmem:[#allocation5 + $0xc50] sm:$0xff]
    %v449 = vld [vmem:[#allocation5 + $0xc58] sm:$0xff]
    %v450 = vld [vmem:[#allocation5 + $0xc60] sm:$0xff]
    %v451 = vld [vmem:[#allocation5 + $0xc68] sm:$0xff]
    %v452 = vld [vmem:[#allocation5 + $0xc70] sm:$0xff]
    %v453 = vld [vmem:[#allocation5 + $0xc78] sm:$0xff]
    %v454 = vld [vmem:[#allocation5 + $0xc80] sm:$0xff]
    %v455 = vld [vmem:[#allocation5 + $0xc88] sm:$0xff]
    %v456 = vld [vmem:[#allocation5 + $0xc90] sm:$0xff]
    %v457 = vld [vmem:[#allocation5 + $0xc98] sm:$0xff]
    %v458 = vld [vmem:[#allocation5 + $0xca0] sm:$0xff]
    %v459 = vld [vmem:[#allocation5 + $0xca8] sm:$0xff]
    %v460 = vld [vmem:[#allocation5 + $0xcb0] sm:$0xff]
    %v461 = vld [vmem:[#allocation5 + $0xcb8] sm:$0xff]
    %v462 = vld [vmem:[#allocation5 + $0xcc0] sm:$0xff]
    %v463 = vld [vmem:[#allocation5 + $0xcc8] sm:$0xff]
    %v464 = vld [vmem:[#allocation5 + $0xcd0] sm:$0xff]
    %v465 = vld [vmem:[#allocation5 + $0xcd8] sm:$0xff]
    %v466 = vld [vmem:[#allocation5 + $0xce0] sm:$0xff]
    %v467 = vld [vmem:[#allocation5 + $0xce8] sm:$0xff]
    %v468 = vld [vmem:[#allocation5 + $0xcf0] sm:$0xff]
    %v469 = vld [vmem:[#allocation5 + $0xcf8] sm:$0xff]
    %v470 = vld [vmem:[#allocation5 + $0xd00] sm:$0xff]
    %v471 = vld [vmem:[#allocation5 + $0xd08] sm:$0xff]
    %v472 = vld [vmem:[#allocation5 + $0xd10] sm:$0xff]
    %v473 = vld [vmem:[#allocation5 + $0xd18] sm:$0xff]
    %v474 = vld [vmem:[#allocation5 + $0xd20] sm:$0xff]
    %v475 = vld [vmem:[#allocation5 + $0xd28] sm:$0xff]
    %v476 = vld [vmem:[#allocation5 + $0xd30] sm:$0xff]
    %v477 = vld [vmem:[#allocation5 + $0xd38] sm:$0xff]
    %v478 = vld [vmem:[#allocation5 + $0xd40] sm:$0xff]
    %v479 = vld [vmem:[#allocation5 + $0xd48] sm:$0xff]
    %v480 = vld [vmem:[#allocation5 + $0xd50] sm:$0xff]
    %v481 = vld [vmem:[#allocation5 + $0xd58] sm:$0xff]
    %v482 = vld [vmem:[#allocation5 + $0xd60] sm:$0xff]
    %v483 = vld [vmem:[#allocation5 + $0xd68] sm:$0xff]
    %v484 = vld [vmem:[#allocation5 + $0xd70] sm:$0xff]
    %v485 = vld [vmem:[#allocation5 + $0xd78] sm:$0xff]
    %v486 = vld [vmem:[#allocation5 + $0xd80] sm:$0xff]
    %v487 = vld [vmem:[#allocation5 + $0xd88] sm:$0xff]
    %v488 = vld [vmem:[#allocation5 + $0xd90] sm:$0xff]
    %v489 = vld [vmem:[#allocation5 + $0xd98] sm:$0xff]
    %v490 = vld [vmem:[#allocation5 + $0xda0] sm:$0xff]
    %v491 = vld [vmem:[#allocation5 + $0xda8] sm:$0xff]
    %v492 = vld [vmem:[#allocation5 + $0xdb0] sm:$0xff]
    %v493 = vld [vmem:[#allocation5 + $0xdb8] sm:$0xff]
    %v494 = vld [vmem:[#allocation5 + $0xdc0] sm:$0xff]
    %v495 = vld [vmem:[#allocation5 + $0xdc8] sm:$0xff]
    %v496 = vld [vmem:[#allocation5 + $0xdd0] sm:$0xff]
    %v497 = vld [vmem:[#allocation5 + $0xdd8] sm:$0xff]
    %v498 = vld [vmem:[#allocation5 + $0xde0] sm:$0xff]
    %v499 = vld [vmem:[#allocation5 + $0xde8] sm:$0xff]
    %v500 = vld [vmem:[#allocation5 + $0xdf0] sm:$0xff]
    %v501 = vld [vmem:[#allocation5 + $0xdf8] sm:$0xff]
    %v502 = vld [vmem:[#allocation5 + $0xe00] sm:$0xff]
    %v503 = vld [vmem:[#allocation5 + $0xe08] sm:$0xff]
    %v504 = vld [vmem:[#allocation5 + $0xe10] sm:$0xff]
    %v505 = vld [vmem:[#allocation5 + $0xe18] sm:$0xff]
    %v506 = vld [vmem:[#allocation5 + $0xe20] sm:$0xff]
    %v507 = vld [vmem:[#allocation5 + $0xe28] sm:$0xff]
    %v508 = vld [vmem:[#allocation5 + $0xe30] sm:$0xff]
    %v509 = vld [vmem:[#allocation5 + $0xe38] sm:$0xff]
    %v510 = vld [vmem:[#allocation5 + $0xe40] sm:$0xff]
    %v511 = vld [vmem:[#allocation5 + $0xe48] sm:$0xff]
    %v512 = vld [vmem:[#allocation5 + $0xe50] sm:$0xff]
    %v513 = vld [vmem:[#allocation5 + $0xe58] sm:$0xff]
    %v514 = vld [vmem:[#allocation5 + $0xe60] sm:$0xff]
    %v515 = vld [vmem:[#allocation5 + $0xe68] sm:$0xff]
    %v516 = vld [vmem:[#allocation5 + $0xe70] sm:$0xff]
    %v517 = vld [vmem:[#allocation5 + $0xe78] sm:$0xff]
    %v518 = vld [vmem:[#allocation5 + $0xe80] sm:$0xff]
    %v519 = vld [vmem:[#allocation5 + $0xe88] sm:$0xff]
    %v520 = vld [vmem:[#allocation5 + $0xe90] sm:$0xff]
    %v521 = vld [vmem:[#allocation5 + $0xe98] sm:$0xff]
    %v522 = vld [vmem:[#allocation5 + $0xea0] sm:$0xff]
    %v523 = vld [vmem:[#allocation5 + $0xea8] sm:$0xff]
    %v524 = vld [vmem:[#allocation5 + $0xeb0] sm:$0xff]
    %v525 = vld [vmem:[#allocation5 + $0xeb8] sm:$0xff]
    %v526 = vld [vmem:[#allocation5 + $0xec0] sm:$0xff]
    %v527 = vld [vmem:[#allocation5 + $0xec8] sm:$0xff]
    %v528 = vld [vmem:[#allocation5 + $0xed0] sm:$0xff]
    %v529 = vld [vmem:[#allocation5 + $0xed8] sm:$0xff]
    %v530 = vld [vmem:[#allocation5 + $0xee0] sm:$0xff]
    %v531 = vld [vmem:[#allocation5 + $0xee8] sm:$0xff]
    %v532 = vld [vmem:[#allocation5 + $0xef0] sm:$0xff]
    %v533 = vld [vmem:[#allocation5 + $0xef8] sm:$0xff]
    %v534 = vld [vmem:[#allocation5 + $0xf00] sm:$0xff]
    %v535 = vld [vmem:[#allocation5 + $0xf08] sm:$0xff]
    %v536 = vld [vmem:[#allocation5 + $0xf10] sm:$0xff]
    %v537 = vld [vmem:[#allocation5 + $0xf18] sm:$0xff]
    %v538 = vld [vmem:[#allocation5 + $0xf20] sm:$0xff]
    %v539 = vld [vmem:[#allocation5 + $0xf28] sm:$0xff]
    %v540 = vld [vmem:[#allocation5 + $0xf30] sm:$0xff]
    %v541 = vld [vmem:[#allocation5 + $0xf38] sm:$0xff]
    %v542 = vld [vmem:[#allocation5 + $0xf40] sm:$0xff]
    %v543 = vld [vmem:[#allocation5 + $0xf48] sm:$0xff]
    %v544 = vld [vmem:[#allocation5 + $0xf50] sm:$0xff]
    %v545 = vld [vmem:[#allocation5 + $0xf58] sm:$0xff]
    %v546 = vld [vmem:[#allocation5 + $0xf60] sm:$0xff]
    %v547 = vld [vmem:[#allocation5 + $0xf68] sm:$0xff]
    %v548 = vld [vmem:[#allocation5 + $0xf70] sm:$0xff]
    %v549 = vld [vmem:[#allocation5 + $0xf78] sm:$0xff]
    %v550 = vld [vmem:[#allocation5 + $0xf80] sm:$0xff]
    %v551 = vld [vmem:[#allocation5 + $0xf88] sm:$0xff]
    %v552 = vld [vmem:[#allocation5 + $0xf90] sm:$0xff]
    %v553 = vld [vmem:[#allocation5 + $0xf98] sm:$0xff]
    %v554 = vld [vmem:[#allocation5 + $0xfa0] sm:$0xff]
    %v555 = vld [vmem:[#allocation5 + $0xfa8] sm:$0xff]
    %v556 = vld [vmem:[#allocation5 + $0xfb0] sm:$0xff]
    %v557 = vld [vmem:[#allocation5 + $0xfb8] sm:$0xff]
    %v558 = vld [vmem:[#allocation5 + $0xfc0] sm:$0xff]
    %v559 = vld [vmem:[#allocation5 + $0xfc8] sm:$0xff]
    %v560 = vld [vmem:[#allocation5 + $0xfd0] sm:$0xff]
    %v561 = vld [vmem:[#allocation5 + $0xfd8] sm:$0xff]
    %v562 = vld [vmem:[#allocation5 + $0xfe0] sm:$0xff]
    %v563 = vld [vmem:[#allocation5 + $0xfe8] sm:$0xff]
    %v564 = vld [vmem:[#allocation5 + $0xff0] sm:$0xff]
    %v565 = vld [vmem:[#allocation5 + $0xff8] sm:$0xff]
    %v566 = vld [vmem:[#allocation5 + $0x1000] sm:$0xff]
    %v567 = vld [vmem:[#allocation5 + $0x1008] sm:$0xff]
    %v568 = vld [vmem:[#allocation5 + $0x1010] sm:$0xff]
    %v569 = vld [vmem:[#allocation5 + $0x1018] sm:$0xff]
    %v570 = vld [vmem:[#allocation5 + $0x1020] sm:$0xff]
    %v571 = vld [vmem:[#allocation5 + $0x1028] sm:$0xff]
    %v572 = vld [vmem:[#allocation5 + $0x1030] sm:$0xff]
    %v573 = vld [vmem:[#allocation5 + $0x1038] sm:$0xff]
    %v574 = vld [vmem:[#allocation5 + $0x1040] sm:$0xff]
    %v575 = vld [vmem:[#allocation5 + $0x1048] sm:$0xff]
    %v576 = vld [vmem:[#allocation5 + $0x1050] sm:$0xff]
    %v577 = vld [vmem:[#allocation5 + $0x1058] sm:$0xff]
    %v578 = vld [vmem:[#allocation5 + $0x1060] sm:$0xff]
    %v579 = vld [vmem:[#allocation5 + $0x1068] sm:$0xff]
    %v580 = vld [vmem:[#allocation5 + $0x1070] sm:$0xff]
    %v581 = vld [vmem:[#allocation5 + $0x1078] sm:$0xff]
    %v582 = vld [vmem:[#allocation5 + $0x1080] sm:$0xff]
    %v583 = vld [vmem:[#allocation5 + $0x1088] sm:$0xff]
    %v584 = vld [vmem:[#allocation5 + $0x1090] sm:$0xff]
    %v585 = vld [vmem:[#allocation5 + $0x1098] sm:$0xff]
    %v586 = vld [vmem:[#allocation5 + $0x10a0] sm:$0xff]
    %v587 = vld [vmem:[#allocation5 + $0x10a8] sm:$0xff]
    %v588 = vld [vmem:[#allocation5 + $0x10b0] sm:$0xff]
    %v589 = vld [vmem:[#allocation5 + $0x10b8] sm:$0xff]
    %v590 = vld [vmem:[#allocation5 + $0x10c0] sm:$0xff]
    %v591 = vld [vmem:[#allocation5 + $0x10c8] sm:$0xff]
    %v592 = vld [vmem:[#allocation5 + $0x10d0] sm:$0xff]
    %v593 = vld [vmem:[#allocation5 + $0x10d8] sm:$0xff]
    %v594 = vld [vmem:[#allocation5 + $0x10e0] sm:$0xff]
    %v595 = vld [vmem:[#allocation5 + $0x10e8] sm:$0xff]
    %v596 = vld [vmem:[#allocation5 + $0x10f0] sm:$0xff]
    %v597 = vld [vmem:[#allocation5 + $0x10f8] sm:$0xff]
    %v598 = vld [vmem:[#allocation5 + $0x1100] sm:$0xff]
    %v599 = vld [vmem:[#allocation5 + $0x1108] sm:$0xff]
    %v600 = vld [vmem:[#allocation5 + $0x1110] sm:$0xff]
    %v601 = vld [vmem:[#allocation5 + $0x1118] sm:$0xff]
    %v602 = vld [vmem:[#allocation5 + $0x1120] sm:$0xff]
    %v603 = vld [vmem:[#allocation5 + $0x1128] sm:$0xff]
    %v604 = vld [vmem:[#allocation5 + $0x1130] sm:$0xff]
    %v605 = vld [vmem:[#allocation5 + $0x1138] sm:$0xff]
    %v606 = vld [vmem:[#allocation5 + $0x1140] sm:$0xff]
    %v607 = vld [vmem:[#allocation5 + $0x1148] sm:$0xff]
    %v608 = vld [vmem:[#allocation5 + $0x1150] sm:$0xff]
    %v609 = vld [vmem:[#allocation5 + $0x1158] sm:$0xff]
    %v610 = vld [vmem:[#allocation5 + $0x1160] sm:$0xff]
    %v611 = vld [vmem:[#allocation5 + $0x1168] sm:$0xff]
    %v612 = vld [vmem:[#allocation5 + $0x1170] sm:$0xff]
    %v613 = vld [vmem:[#allocation5 + $0x1178] sm:$0xff]
    %v614 = vld [vmem:[#allocation5 + $0x1180] sm:$0xff]
    %v615 = vld [vmem:[#allocation5 + $0x1188] sm:$0xff]
    %v616 = vld [vmem:[#allocation5 + $0x1190] sm:$0xff]
    %v617 = vld [vmem:[#allocation5 + $0x1198] sm:$0xff]
    %v618 = vld [vmem:[#allocation5 + $0x11a0] sm:$0xff]
    %v619 = vld [vmem:[#allocation5 + $0x11a8] sm:$0xff]
    %v620 = vld [vmem:[#allocation5 + $0x11b0] sm:$0xff]
    %v621 = vld [vmem:[#allocation5 + $0x11b8] sm:$0xff]
    %v622 = vld [vmem:[#allocation5 + $0x11c0] sm:$0xff]
    %v623 = vld [vmem:[#allocation5 + $0x11c8] sm:$0xff]
    %v624 = vld [vmem:[#allocation5 + $0x11d0] sm:$0xff]
    %v625 = vld [vmem:[#allocation5 + $0x11d8] sm:$0xff]
    %v626 = vld [vmem:[#allocation5 + $0x11e0] sm:$0xff]
    %v627 = vld [vmem:[#allocation5 + $0x11e8] sm:$0xff]
    %v628 = vld [vmem:[#allocation5 + $0x11f0] sm:$0xff]
    %v629 = vld [vmem:[#allocation5 + $0x11f8] sm:$0xff]
    %v630 = vld [vmem:[#allocation5 + $0x1200] sm:$0xff]
    %v631 = vld [vmem:[#allocation5 + $0x1208] sm:$0xff]
    %v632 = vld [vmem:[#allocation5 + $0x1210] sm:$0xff]
    %v633 = vld [vmem:[#allocation5 + $0x1218] sm:$0xff]
    %v634 = vld [vmem:[#allocation5 + $0x1220] sm:$0xff]
    %v635 = vld [vmem:[#allocation5 + $0x1228] sm:$0xff]
    %v636 = vld [vmem:[#allocation5 + $0x1230] sm:$0xff]
    %v637 = vld [vmem:[#allocation5 + $0x1238] sm:$0xff]
    %v638 = vld [vmem:[#allocation5 + $0x1240] sm:$0xff]
    %v639 = vld [vmem:[#allocation5 + $0x1248] sm:$0xff]
    %v640 = vld [vmem:[#allocation5 + $0x1250] sm:$0xff]
    %v641 = vld [vmem:[#allocation5 + $0x1258] sm:$0xff]
    %v642 = vld [vmem:[#allocation5 + $0x1260] sm:$0xff]
    %v643 = vld [vmem:[#allocation5 + $0x1268] sm:$0xff]
    %v644 = vld [vmem:[#allocation5 + $0x1270] sm:$0xff]
    %v645 = vld [vmem:[#allocation5 + $0x1278] sm:$0xff]
    %v646 = vld [vmem:[#allocation5 + $0x1280] sm:$0xff]
    %v647 = vld [vmem:[#allocation5 + $0x1288] sm:$0xff]
    %v648 = vld [vmem:[#allocation5 + $0x1290] sm:$0xff]
    %v649 = vld [vmem:[#allocation5 + $0x1298] sm:$0xff]
    %v650 = vld [vmem:[#allocation5 + $0x12a0] sm:$0xff]
    %v651 = vld [vmem:[#allocation5 + $0x12a8] sm:$0xff]
    %v652 = vld [vmem:[#allocation5 + $0x12b0] sm:$0xff]
    %v653 = vld [vmem:[#allocation5 + $0x12b8] sm:$0xff]
    %v654 = vld [vmem:[#allocation5 + $0x12c0] sm:$0xff]
    %v655 = vld [vmem:[#allocation5 + $0x12c8] sm:$0xff]
    %v656 = vld [vmem:[#allocation5 + $0x12d0] sm:$0xff]
    %v657 = vld [vmem:[#allocation5 + $0x12d8] sm:$0xff]
    %v658 = vld [vmem:[#allocation5 + $0x12e0] sm:$0xff]
    %v659 = vld [vmem:[#allocation5 + $0x12e8] sm:$0xff]
    %v660 = vld [vmem:[#allocation5 + $0x12f0] sm:$0xff]
    %v661 = vld [vmem:[#allocation5 + $0x12f8] sm:$0xff]
    %v662 = vld [vmem:[#allocation5 + $0x1300] sm:$0xff]
    %v663 = vld [vmem:[#allocation5 + $0x1308] sm:$0xff]
    %v664 = vld [vmem:[#allocation5 + $0x1310] sm:$0xff]
    %v665 = vld [vmem:[#allocation5 + $0x1318] sm:$0xff]
    %v666 = vld [vmem:[#allocation5 + $0x1320] sm:$0xff]
    %v667 = vld [vmem:[#allocation5 + $0x1328] sm:$0xff]
    %v668 = vld [vmem:[#allocation5 + $0x1330] sm:$0xff]
    %v669 = vld [vmem:[#allocation5 + $0x1338] sm:$0xff]
    %v670 = vld [vmem:[#allocation5 + $0x1340] sm:$0xff]
    %v671 = vld [vmem:[#allocation5 + $0x1348] sm:$0xff]
    %v672 = vld [vmem:[#allocation5 + $0x1350] sm:$0xff]
    %v673 = vld [vmem:[#allocation5 + $0x1358] sm:$0xff]
    %v674 = vld [vmem:[#allocation5 + $0x1360] sm:$0xff]
    %v675 = vld [vmem:[#allocation5 + $0x1368] sm:$0xff]
    %v676 = vld [vmem:[#allocation5 + $0x1370] sm:$0xff]
    %v677 = vld [vmem:[#allocation5 + $0x1378] sm:$0xff]
    %v678 = vld [vmem:[#allocation5 + $0x1380] sm:$0xff]
    %v679 = vld [vmem:[#allocation5 + $0x1388] sm:$0xff]
    %v680 = vld [vmem:[#allocation5 + $0x1390] sm:$0xff]
    %v681 = vld [vmem:[#allocation5 + $0x1398] sm:$0xff]
    %v682 = vld [vmem:[#allocation5 + $0x13a0] sm:$0xff]
    %v683 = vld [vmem:[#allocation5 + $0x13a8] sm:$0xff]
    %v684 = vld [vmem:[#allocation5 + $0x13b0] sm:$0xff]
    %v685 = vld [vmem:[#allocation5 + $0x13b8] sm:$0xff]
    %v686 = vld [vmem:[#allocation5 + $0x13c0] sm:$0xff]
    %v687 = vld [vmem:[#allocation5 + $0x13c8] sm:$0xff]
    %v688 = vld [vmem:[#allocation5 + $0x13d0] sm:$0xff]
    %v689 = vld [vmem:[#allocation5 + $0x13d8] sm:$0xff]
    %v690 = vld [vmem:[#allocation5 + $0x13e0] sm:$0xff]
    %v691 = vld [vmem:[#allocation5 + $0x13e8] sm:$0xff]
    %v692 = vld [vmem:[#allocation5 + $0x13f0] sm:$0xff]
    %v693 = vld [vmem:[#allocation5 + $0x13f8] sm:$0xff]
    %v694 = vld [vmem:[#allocation5 + $0x1400] sm:$0xff]
    %v695 = vld [vmem:[#allocation5 + $0x1408] sm:$0xff]
    %v696 = vld [vmem:[#allocation5 + $0x1410] sm:$0xff]
    %v697 = vld [vmem:[#allocation5 + $0x1418] sm:$0xff]
    %v698 = vld [vmem:[#allocation5 + $0x1420] sm:$0xff]
    %v699 = vld [vmem:[#allocation5 + $0x1428] sm:$0xff]
    %v700 = vld [vmem:[#allocation5 + $0x1430] sm:$0xff]
    %v701 = vld [vmem:[#allocation5 + $0x1438] sm:$0xff]
    %v702 = vld [vmem:[#allocation5 + $0x1440] sm:$0xff]
    %v703 = vld [vmem:[#allocation5 + $0x1448] sm:$0xff]
    %v704 = vld [vmem:[#allocation5 + $0x1450] sm:$0xff]
    %v705 = vld [vmem:[#allocation5 + $0x1458] sm:$0xff]
    %v706 = vld [vmem:[#allocation5 + $0x1460] sm:$0xff]
    %v707 = vld [vmem:[#allocation5 + $0x1468] sm:$0xff]
    %v708 = vld [vmem:[#allocation5 + $0x1470] sm:$0xff]
    %v709 = vld [vmem:[#allocation5 + $0x1478] sm:$0xff]
    %v710 = vld [vmem:[#allocation5 + $0x1480] sm:$0xff]
    %v711 = vld [vmem:[#allocation5 + $0x1488] sm:$0xff]
    %v712 = vld [vmem:[#allocation5 + $0x1490] sm:$0xff]
    %v713 = vld [vmem:[#allocation5 + $0x1498] sm:$0xff]
    %v714 = vld [vmem:[#allocation5 + $0x14a0] sm:$0xff]
    %v715 = vld [vmem:[#allocation5 + $0x14a8] sm:$0xff]
    %v716 = vld [vmem:[#allocation5 + $0x14b0] sm:$0xff]
    %v717 = vld [vmem:[#allocation5 + $0x14b8] sm:$0xff]
    %v718 = vld [vmem:[#allocation5 + $0x14c0] sm:$0xff]
    %v719 = vld [vmem:[#allocation5 + $0x14c8] sm:$0xff]
    %v720 = vld [vmem:[#allocation5 + $0x14d0] sm:$0xff]
    %v721 = vld [vmem:[#allocation5 + $0x14d8] sm:$0xff]
    %v722 = vld [vmem:[#allocation5 + $0x14e0] sm:$0xff]
    %v723 = vld [vmem:[#allocation5 + $0x14e8] sm:$0xff]
    %v724 = vld [vmem:[#allocation5 + $0x14f0] sm:$0xff]
    %v725 = vld [vmem:[#allocation5 + $0x14f8] sm:$0xff]
    %v726 = vld [vmem:[#allocation5 + $0x1500] sm:$0xff]
    %v727 = vld [vmem:[#allocation5 + $0x1508] sm:$0xff]
    %v728 = vld [vmem:[#allocation5 + $0x1510] sm:$0xff]
    %v729 = vld [vmem:[#allocation5 + $0x1518] sm:$0xff]
    %v730 = vld [vmem:[#allocation5 + $0x1520] sm:$0xff]
    %v731 = vld [vmem:[#allocation5 + $0x1528] sm:$0xff]
    %v732 = vld [vmem:[#allocation5 + $0x1530] sm:$0xff]
    %v733 = vld [vmem:[#allocation5 + $0x1538] sm:$0xff]
    %v734 = vld [vmem:[#allocation5 + $0x1540] sm:$0xff]
    %v735 = vld [vmem:[#allocation5 + $0x1548] sm:$0xff]
    %v736 = vld [vmem:[#allocation5 + $0x1550] sm:$0xff]
    %v737 = vld [vmem:[#allocation5 + $0x1558] sm:$0xff]
    %v738 = vld [vmem:[#allocation5 + $0x1560] sm:$0xff]
    %v739 = vld [vmem:[#allocation5 + $0x1568] sm:$0xff]
    %v740 = vld [vmem:[#allocation5 + $0x1570] sm:$0xff]
    %v741 = vld [vmem:[#allocation5 + $0x1578] sm:$0xff]
    %v742 = vld [vmem:[#allocation5 + $0x1580] sm:$0xff]
    %v743 = vld [vmem:[#allocation5 + $0x1588] sm:$0xff]
    %v744 = vld [vmem:[#allocation5 + $0x1590] sm:$0xff]
    %v745 = vld [vmem:[#allocation5 + $0x1598] sm:$0xff]
    %v746 = vld [vmem:[#allocation5 + $0x15a0] sm:$0xff]
    %v747 = vld [vmem:[#allocation5 + $0x15a8] sm:$0xff]
    %v748 = vld [vmem:[#allocation5 + $0x15b0] sm:$0xff]
    %v749 = vld [vmem:[#allocation5 + $0x15b8] sm:$0xff]
    %v750 = vld [vmem:[#allocation5 + $0x15c0] sm:$0xff]
    %v751 = vld [vmem:[#allocation5 + $0x15c8] sm:$0xff]
    %v752 = vld [vmem:[#allocation5 + $0x15d0] sm:$0xff]
    %v753 = vld [vmem:[#allocation5 + $0x15d8] sm:$0xff]
    %v754 = vld [vmem:[#allocation5 + $0x15e0] sm:$0xff]
    %v755 = vld [vmem:[#allocation5 + $0x15e8] sm:$0xff]
    %v756 = vld [vmem:[#allocation5 + $0x15f0] sm:$0xff]
    %v757 = vld [vmem:[#allocation5 + $0x15f8] sm:$0xff]
    %v758 = vld [vmem:[#allocation5 + $0x1600] sm:$0xff]
    %v759 = vld [vmem:[#allocation5 + $0x1608] sm:$0xff]
    %v760 = vld [vmem:[#allocation5 + $0x1610] sm:$0xff]
    %v761 = vld [vmem:[#allocation5 + $0x1618] sm:$0xff]
    %v762 = vld [vmem:[#allocation5 + $0x1620] sm:$0xff]
    %v763 = vld [vmem:[#allocation5 + $0x1628] sm:$0xff]
    %v764 = vld [vmem:[#allocation5 + $0x1630] sm:$0xff]
    %v765 = vld [vmem:[#allocation5 + $0x1638] sm:$0xff]
    %v766 = vld [vmem:[#allocation5 + $0x1640] sm:$0xff]
    %v767 = vld [vmem:[#allocation5 + $0x1648] sm:$0xff]
    %v768 = vld [vmem:[#allocation5 + $0x1650] sm:$0xff]
    %v769 = vld [vmem:[#allocation5 + $0x1658] sm:$0xff]
    %v770 = vld [vmem:[#allocation5 + $0x1660] sm:$0xff]
    %v771 = vld [vmem:[#allocation5 + $0x1668] sm:$0xff]
    %v772 = vld [vmem:[#allocation5 + $0x1670] sm:$0xff]
    %v773 = vld [vmem:[#allocation5 + $0x1678] sm:$0xff]
    %v774 = vld [vmem:[#allocation5 + $0x1680] sm:$0xff]
    %v775 = vld [vmem:[#allocation5 + $0x1688] sm:$0xff]
    %v776 = vld [vmem:[#allocation5 + $0x1690] sm:$0xff]
    %v777 = vld [vmem:[#allocation5 + $0x1698] sm:$0xff]
    %v778 = vld [vmem:[#allocation5 + $0x16a0] sm:$0xff]
    %v779 = vld [vmem:[#allocation5 + $0x16a8] sm:$0xff]
    %v780 = vld [vmem:[#allocation5 + $0x16b0] sm:$0xff]
    %v781 = vld [vmem:[#allocation5 + $0x16b8] sm:$0xff]
    %v782 = vld [vmem:[#allocation5 + $0x16c0] sm:$0xff]
    %v783 = vld [vmem:[#allocation5 + $0x16c8] sm:$0xff]
    %v784 = vld [vmem:[#allocation5 + $0x16d0] sm:$0xff]
    %v785 = vld [vmem:[#allocation5 + $0x16d8] sm:$0xff]
    %v786 = vld [vmem:[#allocation5 + $0x16e0] sm:$0xff]
    %v787 = vld [vmem:[#allocation5 + $0x16e8] sm:$0xff]
    %v788 = vld [vmem:[#allocation5 + $0x16f0] sm:$0xff]
    %v789 = vld [vmem:[#allocation5 + $0x16f8] sm:$0xff]
    %v790 = vld [vmem:[#allocation5 + $0x1700] sm:$0xff]
    %v791 = vld [vmem:[#allocation5 + $0x1708] sm:$0xff]
    %v792 = vld [vmem:[#allocation5 + $0x1710] sm:$0xff]
    %v793 = vld [vmem:[#allocation5 + $0x1718] sm:$0xff]
    %v794 = vld [vmem:[#allocation5 + $0x1720] sm:$0xff]
    %v795 = vld [vmem:[#allocation5 + $0x1728] sm:$0xff]
    %v796 = vld [vmem:[#allocation5 + $0x1730] sm:$0xff]
    %v797 = vld [vmem:[#allocation5 + $0x1738] sm:$0xff]
    %v798 = vld [vmem:[#allocation5 + $0x1740] sm:$0xff]
    %v799 = vld [vmem:[#allocation5 + $0x1748] sm:$0xff]
    %v800 = vld [vmem:[#allocation5 + $0x1750] sm:$0xff]
    %v801 = vld [vmem:[#allocation5 + $0x1758] sm:$0xff]
    %v802 = vld [vmem:[#allocation5 + $0x1760] sm:$0xff]
    %v803 = vld [vmem:[#allocation5 + $0x1768] sm:$0xff]
    %v804 = vld [vmem:[#allocation5 + $0x1770] sm:$0xff]
    %v805 = vld [vmem:[#allocation5 + $0x1778] sm:$0xff]
    %v806 = vld [vmem:[#allocation5 + $0x1780] sm:$0xff]
    %v807 = vld [vmem:[#allocation5 + $0x1788] sm:$0xff]
    %v808 = vld [vmem:[#allocation5 + $0x1790] sm:$0xff]
    %v809 = vld [vmem:[#allocation5 + $0x1798] sm:$0xff]
    %v810 = vld [vmem:[#allocation5 + $0x17a0] sm:$0xff]
    %v811 = vld [vmem:[#allocation5 + $0x17a8] sm:$0xff]
    %v812 = vld [vmem:[#allocation5 + $0x17b0] sm:$0xff]
    %v813 = vld [vmem:[#allocation5 + $0x17b8] sm:$0xff]
    %v814 = vld [vmem:[#allocation5 + $0x17c0] sm:$0xff]
    %v815 = vld [vmem:[#allocation5 + $0x17c8] sm:$0xff]
    %v816 = vld [vmem:[#allocation5 + $0x17d0] sm:$0xff]
    %v817 = vld [vmem:[#allocation5 + $0x17d8] sm:$0xff]
    %v818 = vld [vmem:[#allocation5 + $0x17e0] sm:$0xff]
    %v819 = vld [vmem:[#allocation5 + $0x17e8] sm:$0xff]
    %v820 = vld [vmem:[#allocation5 + $0x17f0] sm:$0xff]
    %v821 = vld [vmem:[#allocation5 + $0x17f8] sm:$0xff]
    %v822 = vld [vmem:[#allocation5 + $0x1800] sm:$0xff]
    %v823 = vld [vmem:[#allocation5 + $0x1808] sm:$0xff]
    %v824 = vld [vmem:[#allocation5 + $0x1810] sm:$0xff]
    %v825 = vld [vmem:[#allocation5 + $0x1818] sm:$0xff]
    %v826 = vld [vmem:[#allocation5 + $0x1820] sm:$0xff]
    %v827 = vld [vmem:[#allocation5 + $0x1828] sm:$0xff]
    %v828 = vld [vmem:[#allocation5 + $0x1830] sm:$0xff]
    %v829 = vld [vmem:[#allocation5 + $0x1838] sm:$0xff]
    %v830 = vld [vmem:[#allocation5 + $0x1840] sm:$0xff]
    %v831 = vld [vmem:[#allocation5 + $0x1848] sm:$0xff]
    %v832 = vld [vmem:[#allocation5 + $0x1850] sm:$0xff]
    %v833 = vld [vmem:[#allocation5 + $0x1858] sm:$0xff]
    %v834 = vld [vmem:[#allocation5 + $0x1860] sm:$0xff]
    %v835 = vld [vmem:[#allocation5 + $0x1868] sm:$0xff]
    %v836 = vld [vmem:[#allocation5 + $0x1870] sm:$0xff]
    %v837 = vld [vmem:[#allocation5 + $0x1878] sm:$0xff]
    %v838 = vld [vmem:[#allocation5 + $0x1880] sm:$0xff]
    %v839 = vld [vmem:[#allocation5 + $0x1888] sm:$0xff]
    %v840 = vld [vmem:[#allocation5 + $0x1890] sm:$0xff]
    %v841 = vld [vmem:[#allocation5 + $0x1898] sm:$0xff]
    %v842 = vld [vmem:[#allocation5 + $0x18a0] sm:$0xff]
    %v843 = vld [vmem:[#allocation5 + $0x18a8] sm:$0xff]
    %v844 = vld [vmem:[#allocation5 + $0x18b0] sm:$0xff]
    %v845 = vld [vmem:[#allocation5 + $0x18b8] sm:$0xff]
    %v846 = vld [vmem:[#allocation5 + $0x18c0] sm:$0xff]
    %v847 = vld [vmem:[#allocation5 + $0x18c8] sm:$0xff]
    %v848 = vld [vmem:[#allocation5 + $0x18d0] sm:$0xff]
    %v849 = vld [vmem:[#allocation5 + $0x18d8] sm:$0xff]
    %v850 = vld [vmem:[#allocation5 + $0x18e0] sm:$0xff]
    %v851 = vld [vmem:[#allocation5 + $0x18e8] sm:$0xff]
    %v852 = vld [vmem:[#allocation5 + $0x18f0] sm:$0xff]
    %v853 = vld [vmem:[#allocation5 + $0x18f8] sm:$0xff]
    %v854 = vld [vmem:[#allocation5 + $0x1900] sm:$0xff]
    %v855 = vld [vmem:[#allocation5 + $0x1908] sm:$0xff]
    %v856 = vld [vmem:[#allocation5 + $0x1910] sm:$0xff]
    %v857 = vld [vmem:[#allocation5 + $0x1918] sm:$0xff]
    %v858 = vld [vmem:[#allocation5 + $0x1920] sm:$0xff]
    %v859 = vld [vmem:[#allocation5 + $0x1928] sm:$0xff]
    %v860 = vld [vmem:[#allocation5 + $0x1930] sm:$0xff]
    %v861 = vld [vmem:[#allocation5 + $0x1938] sm:$0xff]
    %v862 = vld [vmem:[#allocation5 + $0x1940] sm:$0xff]
    %v863 = vld [vmem:[#allocation5 + $0x1948] sm:$0xff]
    %v864 = vld [vmem:[#allocation5 + $0x1950] sm:$0xff]
    %v865 = vld [vmem:[#allocation5 + $0x1958] sm:$0xff]
    %v866 = vld [vmem:[#allocation5 + $0x1960] sm:$0xff]
    %v867 = vld [vmem:[#allocation5 + $0x1968] sm:$0xff]
    %v868 = vld [vmem:[#allocation5 + $0x1970] sm:$0xff]
    %v869 = vld [vmem:[#allocation5 + $0x1978] sm:$0xff]
    %v870 = vld [vmem:[#allocation5 + $0x1980] sm:$0xff]
    %v871 = vld [vmem:[#allocation5 + $0x1988] sm:$0xff]
    %v872 = vld [vmem:[#allocation5 + $0x1990] sm:$0xff]
    %v873 = vld [vmem:[#allocation5 + $0x1998] sm:$0xff]
    %v874 = vld [vmem:[#allocation5 + $0x19a0] sm:$0xff]
    %v875 = vld [vmem:[#allocation5 + $0x19a8] sm:$0xff]
    %v876 = vld [vmem:[#allocation5 + $0x19b0] sm:$0xff]
    %v877 = vld [vmem:[#allocation5 + $0x19b8] sm:$0xff]
    %v878 = vld [vmem:[#allocation5 + $0x19c0] sm:$0xff]
    %v879 = vld [vmem:[#allocation5 + $0x19c8] sm:$0xff]
    %v880 = vld [vmem:[#allocation5 + $0x19d0] sm:$0xff]
    %v881 = vld [vmem:[#allocation5 + $0x19d8] sm:$0xff]
    %v882 = vld [vmem:[#allocation5 + $0x19e0] sm:$0xff]
    %v883 = vld [vmem:[#allocation5 + $0x19e8] sm:$0xff]
    %v884 = vld [vmem:[#allocation5 + $0x19f0] sm:$0xff]
    %v885 = vld [vmem:[#allocation5 + $0x19f8] sm:$0xff]
    %v886 = vld [vmem:[#allocation5 + $0x1a00] sm:$0xff]
    %v887 = vld [vmem:[#allocation5 + $0x1a08] sm:$0xff]
    %v888 = vld [vmem:[#allocation5 + $0x1a10] sm:$0xff]
    %v889 = vld [vmem:[#allocation5 + $0x1a18] sm:$0xff]
    %v890 = vld [vmem:[#allocation5 + $0x1a20] sm:$0xff]
    %v891 = vld [vmem:[#allocation5 + $0x1a28] sm:$0xff]
    %v892 = vld [vmem:[#allocation5 + $0x1a30] sm:$0xff]
    %v893 = vld [vmem:[#allocation5 + $0x1a38] sm:$0xff]
    %v894 = vld [vmem:[#allocation5 + $0x1a40] sm:$0xff]
    %v895 = vld [vmem:[#allocation5 + $0x1a48] sm:$0xff]
    %v896 = vld [vmem:[#allocation5 + $0x1a50] sm:$0xff]
    %v897 = vld [vmem:[#allocation5 + $0x1a58] sm:$0xff]
    %v898 = vld [vmem:[#allocation5 + $0x1a60] sm:$0xff]
    %v899 = vld [vmem:[#allocation5 + $0x1a68] sm:$0xff]
    %v900 = vld [vmem:[#allocation5 + $0x1a70] sm:$0xff]
    %v901 = vld [vmem:[#allocation5 + $0x1a78] sm:$0xff]
    %v902 = vld [vmem:[#allocation5 + $0x1a80] sm:$0xff]
    %v903 = vld [vmem:[#allocation5 + $0x1a88] sm:$0xff]
    %v904 = vld [vmem:[#allocation5 + $0x1a90] sm:$0xff]
    %v905 = vld [vmem:[#allocation5 + $0x1a98] sm:$0xff]
    %v906 = vld [vmem:[#allocation5 + $0x1aa0] sm:$0xff]
    %v907 = vld [vmem:[#allocation5 + $0x1aa8] sm:$0xff]
    %v908 = vld [vmem:[#allocation5 + $0x1ab0] sm:$0xff]
    %v909 = vld [vmem:[#allocation5 + $0x1ab8] sm:$0xff]
    %v910 = vld [vmem:[#allocation5 + $0x1ac0] sm:$0xff]
    %v911 = vld [vmem:[#allocation5 + $0x1ac8] sm:$0xff]
    %v912 = vld [vmem:[#allocation5 + $0x1ad0] sm:$0xff]
    %v913 = vld [vmem:[#allocation5 + $0x1ad8] sm:$0xff]
    %v914 = vld [vmem:[#allocation5 + $0x1ae0] sm:$0xff]
    %v915 = vld [vmem:[#allocation5 + $0x1ae8] sm:$0xff]
    %v916 = vld [vmem:[#allocation5 + $0x1af0] sm:$0xff]
    %v917 = vld [vmem:[#allocation5 + $0x1af8] sm:$0xff]
    %v918 = vld [vmem:[#allocation5 + $0x1b00] sm:$0xff]
    %v919 = vld [vmem:[#allocation5 + $0x1b08] sm:$0xff]
    %v920 = vld [vmem:[#allocation5 + $0x1b10] sm:$0xff]
    %v921 = vld [vmem:[#allocation5 + $0x1b18] sm:$0xff]
    %v922 = vld [vmem:[#allocation5 + $0x1b20] sm:$0xff]
    %v923 = vld [vmem:[#allocation5 + $0x1b28] sm:$0xff]
    %v924 = vld [vmem:[#allocation5 + $0x1b30] sm:$0xff]
    %v925 = vld [vmem:[#allocation5 + $0x1b38] sm:$0xff]
    %v926 = vld [vmem:[#allocation5 + $0x1b40] sm:$0xff]
    %v927 = vld [vmem:[#allocation5 + $0x1b48] sm:$0xff]
    %v928 = vld [vmem:[#allocation5 + $0x1b50] sm:$0xff]
    %v929 = vld [vmem:[#allocation5 + $0x1b58] sm:$0xff]
    %v930 = vld [vmem:[#allocation5 + $0x1b60] sm:$0xff]
    %v931 = vld [vmem:[#allocation5 + $0x1b68] sm:$0xff]
    %v932 = vld [vmem:[#allocation5 + $0x1b70] sm:$0xff]
    %v933 = vld [vmem:[#allocation5 + $0x1b78] sm:$0xff]
    %v934 = vld [vmem:[#allocation5 + $0x1b80] sm:$0xff]
    %v935 = vld [vmem:[#allocation5 + $0x1b88] sm:$0xff]
    %v936 = vld [vmem:[#allocation5 + $0x1b90] sm:$0xff]
    %v937 = vld [vmem:[#allocation5 + $0x1b98] sm:$0xff]
    %v938 = vld [vmem:[#allocation5 + $0x1ba0] sm:$0xff]
    %v939 = vld [vmem:[#allocation5 + $0x1ba8] sm:$0xff]
    %v940 = vld [vmem:[#allocation5 + $0x1bb0] sm:$0xff]
    %v941 = vld [vmem:[#allocation5 + $0x1bb8] sm:$0xff]
    %v942 = vld [vmem:[#allocation5 + $0x1bc0] sm:$0xff]
    %v943 = vld [vmem:[#allocation5 + $0x1bc8] sm:$0xff]
    %v944 = vld [vmem:[#allocation5 + $0x1bd0] sm:$0xff]
    %v945 = vld [vmem:[#allocation5 + $0x1bd8] sm:$0xff]
    %v946 = vld [vmem:[#allocation5 + $0x1be0] sm:$0xff]
    %v947 = vld [vmem:[#allocation5 + $0x1be8] sm:$0xff]
    %v948 = vld [vmem:[#allocation5 + $0x1bf0] sm:$0xff]
    %v949 = vld [vmem:[#allocation5 + $0x1bf8] sm:$0xff]
    %v950 = vld [vmem:[#allocation5 + $0x1c00] sm:$0xff]
    %v951 = vld [vmem:[#allocation5 + $0x1c08] sm:$0xff]
    %v952 = vld [vmem:[#allocation5 + $0x1c10] sm:$0xff]
    %v953 = vld [vmem:[#allocation5 + $0x1c18] sm:$0xff]
    %v954 = vld [vmem:[#allocation5 + $0x1c20] sm:$0xff]
    %v955 = vld [vmem:[#allocation5 + $0x1c28] sm:$0xff]
    %v956 = vld [vmem:[#allocation5 + $0x1c30] sm:$0xff]
    %v957 = vld [vmem:[#allocation5 + $0x1c38] sm:$0xff]
    %v958 = vld [vmem:[#allocation5 + $0x1c40] sm:$0xff]
    %v959 = vld [vmem:[#allocation5 + $0x1c48] sm:$0xff]
    %v960 = vld [vmem:[#allocation5 + $0x1c50] sm:$0xff]
    %v961 = vld [vmem:[#allocation5 + $0x1c58] sm:$0xff]
    %v962 = vld [vmem:[#allocation5 + $0x1c60] sm:$0xff]
    %v963 = vld [vmem:[#allocation5 + $0x1c68] sm:$0xff]
    %v964 = vld [vmem:[#allocation5 + $0x1c70] sm:$0xff]
    %v965 = vld [vmem:[#allocation5 + $0x1c78] sm:$0xff]
    %v966 = vld [vmem:[#allocation5 + $0x1c80] sm:$0xff]
    %v967 = vld [vmem:[#allocation5 + $0x1c88] sm:$0xff]
    %v968 = vld [vmem:[#allocation5 + $0x1c90] sm:$0xff]
    %v969 = vld [vmem:[#allocation5 + $0x1c98] sm:$0xff]
    %v970 = vld [vmem:[#allocation5 + $0x1ca0] sm:$0xff]
    %v971 = vld [vmem:[#allocation5 + $0x1ca8] sm:$0xff]
    %v972 = vld [vmem:[#allocation5 + $0x1cb0] sm:$0xff]
    %v973 = vld [vmem:[#allocation5 + $0x1cb8] sm:$0xff]
    %v974 = vld [vmem:[#allocation5 + $0x1cc0] sm:$0xff]
    %v975 = vld [vmem:[#allocation5 + $0x1cc8] sm:$0xff]
    %v976 = vld [vmem:[#allocation5 + $0x1cd0] sm:$0xff]
    %v977 = vld [vmem:[#allocation5 + $0x1cd8] sm:$0xff]
    %v978 = vld [vmem:[#allocation5 + $0x1ce0] sm:$0xff]
    %v979 = vld [vmem:[#allocation5 + $0x1ce8] sm:$0xff]
    %v980 = vld [vmem:[#allocation5 + $0x1cf0] sm:$0xff]
    %v981 = vld [vmem:[#allocation5 + $0x1cf8] sm:$0xff]
    %v982 = vld [vmem:[#allocation5 + $0x1d00] sm:$0xff]
    %v983 = vld [vmem:[#allocation5 + $0x1d08] sm:$0xff]
    %v984 = vld [vmem:[#allocation5 + $0x1d10] sm:$0xff]
    %v985 = vld [vmem:[#allocation5 + $0x1d18] sm:$0xff]
    %v986 = vld [vmem:[#allocation5 + $0x1d20] sm:$0xff]
    %v987 = vld [vmem:[#allocation5 + $0x1d28] sm:$0xff]
    %v988 = vld [vmem:[#allocation5 + $0x1d30] sm:$0xff]
    %v989 = vld [vmem:[#allocation5 + $0x1d38] sm:$0xff]
    %v990 = vld [vmem:[#allocation5 + $0x1d40] sm:$0xff]
    %v991 = vld [vmem:[#allocation5 + $0x1d48] sm:$0xff]
    %v992 = vld [vmem:[#allocation5 + $0x1d50] sm:$0xff]
    %v993 = vld [vmem:[#allocation5 + $0x1d58] sm:$0xff]
    %v994 = vld [vmem:[#allocation5 + $0x1d60] sm:$0xff]
    %v995 = vld [vmem:[#allocation5 + $0x1d68] sm:$0xff]
    %v996 = vld [vmem:[#allocation5 + $0x1d70] sm:$0xff]
    %v997 = vld [vmem:[#allocation5 + $0x1d78] sm:$0xff]
    %v998 = vld [vmem:[#allocation5 + $0x1d80] sm:$0xff]
    %v999 = vld [vmem:[#allocation5 + $0x1d88] sm:$0xff]
    %v1000 = vld [vmem:[#allocation5 + $0x1d90] sm:$0xff]
    %v1001 = vld [vmem:[#allocation5 + $0x1d98] sm:$0xff]
    %v1002 = vld [vmem:[#allocation5 + $0x1da0] sm:$0xff]
    %v1003 = vld [vmem:[#allocation5 + $0x1da8] sm:$0xff]
    %v1004 = vld [vmem:[#allocation5 + $0x1db0] sm:$0xff]
    %v1005 = vld [vmem:[#allocation5 + $0x1db8] sm:$0xff]
    %v1006 = vld [vmem:[#allocation5 + $0x1dc0] sm:$0xff]
    %v1007 = vld [vmem:[#allocation5 + $0x1dc8] sm:$0xff]
    %v1008 = vld [vmem:[#allocation5 + $0x1dd0] sm:$0xff]
    %v1009 = vld [vmem:[#allocation5 + $0x1dd8] sm:$0xff]
    %v1010 = vld [vmem:[#allocation5 + $0x1de0] sm:$0xff]
    %v1011 = vld [vmem:[#allocation5 + $0x1de8] sm:$0xff]
    %v1012 = vld [vmem:[#allocation5 + $0x1df0] sm:$0xff]
    %v1013 = vld [vmem:[#allocation5 + $0x1df8] sm:$0xff]
    %v1014 = vld [vmem:[#allocation5 + $0x1e00] sm:$0xff]
    %v1015 = vld [vmem:[#allocation5 + $0x1e08] sm:$0xff]
    %v1016 = vld [vmem:[#allocation5 + $0x1e10] sm:$0xff]
    %v1017 = vld [vmem:[#allocation5 + $0x1e18] sm:$0xff]
    %v1018 = vld [vmem:[#allocation5 + $0x1e20] sm:$0xff]
    %v1019 = vld [vmem:[#allocation5 + $0x1e28] sm:$0xff]
    %v1020 = vld [vmem:[#allocation5 + $0x1e30] sm:$0xff]
    %v1021 = vld [vmem:[#allocation5 + $0x1e38] sm:$0xff]
    %v1022 = vld [vmem:[#allocation5 + $0x1e40] sm:$0xff]
    %v1023 = vld [vmem:[#allocation5 + $0x1e48] sm:$0xff]
    %v1024 = vld [vmem:[#allocation5 + $0x1e50] sm:$0xff]
    %v1025 = vld [vmem:[#allocation5 + $0x1e58] sm:$0xff]
    %v1026 = vld [vmem:[#allocation5 + $0x1e60] sm:$0xff]
    %v1027 = vld [vmem:[#allocation5 + $0x1e68] sm:$0xff]
    %v1028 = vld [vmem:[#allocation5 + $0x1e70] sm:$0xff]
    %v1029 = vld [vmem:[#allocation5 + $0x1e78] sm:$0xff]
    %v1030 = vld [vmem:[#allocation5 + $0x1e80] sm:$0xff]
    %v1031 = vld [vmem:[#allocation5 + $0x1e88] sm:$0xff]
    %v1032 = vld [vmem:[#allocation5 + $0x1e90] sm:$0xff]
    %v1033 = vld [vmem:[#allocation5 + $0x1e98] sm:$0xff]
    %v1034 = vld [vmem:[#allocation5 + $0x1ea0] sm:$0xff]
    %v1035 = vld [vmem:[#allocation5 + $0x1ea8] sm:$0xff]
    %v1036 = vld [vmem:[#allocation5 + $0x1eb0] sm:$0xff]
    %v1037 = vld [vmem:[#allocation5 + $0x1eb8] sm:$0xff]
    %v1038 = vld [vmem:[#allocation5 + $0x1ec0] sm:$0xff]
    %v1039 = vld [vmem:[#allocation5 + $0x1ec8] sm:$0xff]
    %v1040 = vld [vmem:[#allocation5 + $0x1ed0] sm:$0xff]
    %v1041 = vld [vmem:[#allocation5 + $0x1ed8] sm:$0xff]
    %v1042 = vld [vmem:[#allocation5 + $0x1ee0] sm:$0xff]
    %v1043 = vld [vmem:[#allocation5 + $0x1ee8] sm:$0xff]
    %v1044 = vld [vmem:[#allocation5 + $0x1ef0] sm:$0xff]
    %v1045 = vld [vmem:[#allocation5 + $0x1ef8] sm:$0xff]
    %v1046 = vld [vmem:[#allocation5 + $0x1f00] sm:$0xff]
    %v1047 = vld [vmem:[#allocation5 + $0x1f08] sm:$0xff]
    %v1048 = vld [vmem:[#allocation5 + $0x1f10] sm:$0xff]
    %v1049 = vld [vmem:[#allocation5 + $0x1f18] sm:$0xff]
    %v1050 = vld [vmem:[#allocation5 + $0x1f20] sm:$0xff]
    %v1051 = vld [vmem:[#allocation5 + $0x1f28] sm:$0xff]
    %v1052 = vld [vmem:[#allocation5 + $0x1f30] sm:$0xff]
    %v1053 = vld [vmem:[#allocation5 + $0x1f38] sm:$0xff]
    %v1054 = vld [vmem:[#allocation5 + $0x1f40] sm:$0xff]
    %v1055 = vld [vmem:[#allocation5 + $0x1f48] sm:$0xff]
    %v1056 = vld [vmem:[#allocation5 + $0x1f50] sm:$0xff]
    %v1057 = vld [vmem:[#allocation5 + $0x1f58] sm:$0xff]
    %v1058 = vld [vmem:[#allocation5 + $0x1f60] sm:$0xff]
    %v1059 = vld [vmem:[#allocation5 + $0x1f68] sm:$0xff]
    %v1060 = vld [vmem:[#allocation5 + $0x1f70] sm:$0xff]
    %v1061 = vld [vmem:[#allocation5 + $0x1f78] sm:$0xff]
    %v1062 = vld [vmem:[#allocation5 + $0x1f80] sm:$0xff]
    %v1063 = vld [vmem:[#allocation5 + $0x1f88] sm:$0xff]
    %v1064 = vld [vmem:[#allocation5 + $0x1f90] sm:$0xff]
    %v1065 = vld [vmem:[#allocation5 + $0x1f98] sm:$0xff]
    %v1066 = vld [vmem:[#allocation5 + $0x1fa0] sm:$0xff]
    %v1067 = vld [vmem:[#allocation5 + $0x1fa8] sm:$0xff]
    %v1068 = vld [vmem:[#allocation5 + $0x1fb0] sm:$0xff]
    %v1069 = vld [vmem:[#allocation5 + $0x1fb8] sm:$0xff]
    %v1070 = vld [vmem:[#allocation5 + $0x1fc0] sm:$0xff]
    %v1071 = vld [vmem:[#allocation5 + $0x1fc8] sm:$0xff]
    %v1072 = vld [vmem:[#allocation5 + $0x1fd0] sm:$0xff]
    %v1073 = vld [vmem:[#allocation5 + $0x1fd8] sm:$0xff]
    %v1074 = vld [vmem:[#allocation5 + $0x1fe0] sm:$0xff]
    %v1075 = vld [vmem:[#allocation5 + $0x1fe8] sm:$0xff]
    %v1076 = vld [vmem:[#allocation5 + $0x1ff0] sm:$0xff]
    %v1077 = vld [vmem:[#allocation5 + $0x1ff8] sm:$0xff]
    %v1078 = vld [vmem:[#allocation5 + $0x2000] sm:$0xff]
    %v1079 = vld [vmem:[#allocation5 + $0x2008] sm:$0xff]
    %v1080 = vld [vmem:[#allocation5 + $0x2010] sm:$0xff]
    %v1081 = vld [vmem:[#allocation5 + $0x2018] sm:$0xff]
    %v1082 = vld [vmem:[#allocation5 + $0x2020] sm:$0xff]
    %v1083 = vld [vmem:[#allocation5 + $0x2028] sm:$0xff]
    %v1084 = vld [vmem:[#allocation5 + $0x2030] sm:$0xff]
    %v1085 = vld [vmem:[#allocation5 + $0x2038] sm:$0xff]
    %v1086 = vld [vmem:[#allocation5 + $0x2040] sm:$0xff]
    %v1087 = vld [vmem:[#allocation5 + $0x2048] sm:$0xff]
    %v1088 = vld [vmem:[#allocation5 + $0x2050] sm:$0xff]
    %v1089 = vld [vmem:[#allocation5 + $0x2058] sm:$0xff]
    %v1090 = vld [vmem:[#allocation5 + $0x2060] sm:$0xff]
    %v1091 = vld [vmem:[#allocation5 + $0x2068] sm:$0xff]
    %v1092 = vld [vmem:[#allocation5 + $0x2070] sm:$0xff]
    %v1093 = vld [vmem:[#allocation5 + $0x2078] sm:$0xff]
    %v1094 = vld [vmem:[#allocation5 + $0x2080] sm:$0xff]
    %v1095 = vld [vmem:[#allocation5 + $0x2088] sm:$0xff]
    %v1096 = vld [vmem:[#allocation5 + $0x2090] sm:$0xff]
    %v1097 = vld [vmem:[#allocation5 + $0x2098] sm:$0xff]
    %v1098 = vld [vmem:[#allocation5 + $0x20a0] sm:$0xff]
    %v1099 = vld [vmem:[#allocation5 + $0x20a8] sm:$0xff]
    %v1100 = vld [vmem:[#allocation5 + $0x20b0] sm:$0xff]
    %v1101 = vld [vmem:[#allocation5 + $0x20b8] sm:$0xff]
    %v1102 = vld [vmem:[#allocation5 + $0x20c0] sm:$0xff]
    %v1103 = vld [vmem:[#allocation5 + $0x20c8] sm:$0xff]
    %v1104 = vld [vmem:[#allocation5 + $0x20d0] sm:$0xff]
    %v1105 = vld [vmem:[#allocation5 + $0x20d8] sm:$0xff]
    %v1106 = vld [vmem:[#allocation5 + $0x20e0] sm:$0xff]
    %v1107 = vld [vmem:[#allocation5 + $0x20e8] sm:$0xff]
    %v1108 = vld [vmem:[#allocation5 + $0x20f0] sm:$0xff]
    %v1109 = vld [vmem:[#allocation5 + $0x20f8] sm:$0xff]
    %v1110 = vld [vmem:[#allocation5 + $0x2100] sm:$0xff]
    %v1111 = vld [vmem:[#allocation5 + $0x2108] sm:$0xff]
    %v1112 = vld [vmem:[#allocation5 + $0x2110] sm:$0xff]
    %v1113 = vld [vmem:[#allocation5 + $0x2118] sm:$0xff]
    %v1114 = vld [vmem:[#allocation5 + $0x2120] sm:$0xff]
    %v1115 = vld [vmem:[#allocation5 + $0x2128] sm:$0xff]
    %v1116 = vld [vmem:[#allocation5 + $0x2130] sm:$0xff]
    %v1117 = vld [vmem:[#allocation5 + $0x2138] sm:$0xff]
    %v1118 = vld [vmem:[#allocation5 + $0x2140] sm:$0xff]
    %v1119 = vld [vmem:[#allocation5 + $0x2148] sm:$0xff]
    %v1120 = vld [vmem:[#allocation5 + $0x2150] sm:$0xff]
    %v1121 = vld [vmem:[#allocation5 + $0x2158] sm:$0xff]
    %v1122 = vld [vmem:[#allocation5 + $0x2160] sm:$0xff]
    %v1123 = vld [vmem:[#allocation5 + $0x2168] sm:$0xff]
    %v1124 = vld [vmem:[#allocation5 + $0x2170] sm:$0xff]
    %v1125 = vld [vmem:[#allocation5 + $0x2178] sm:$0xff]
    %v1126 = vld [vmem:[#allocation5 + $0x2180] sm:$0xff]
    %v1127 = vld [vmem:[#allocation5 + $0x2188] sm:$0xff]
    %v1128 = vld [vmem:[#allocation5 + $0x2190] sm:$0xff]
    %v1129 = vld [vmem:[#allocation5 + $0x2198] sm:$0xff]
    %v1130 = vld [vmem:[#allocation5 + $0x21a0] sm:$0xff]
    %v1131 = vld [vmem:[#allocation5 + $0x21a8] sm:$0xff]
    %v1132 = vld [vmem:[#allocation5 + $0x21b0] sm:$0xff]
    %v1133 = vld [vmem:[#allocation5 + $0x21b8] sm:$0xff]
    %v1134 = vld [vmem:[#allocation5 + $0x21c0] sm:$0xff]
    %v1135 = vld [vmem:[#allocation5 + $0x21c8] sm:$0xff]
    %v1136 = vld [vmem:[#allocation5 + $0x21d0] sm:$0xff]
    %v1137 = vld [vmem:[#allocation5 + $0x21d8] sm:$0xff]
    %v1138 = vld [vmem:[#allocation5 + $0x21e0] sm:$0xff]
    %v1139 = vld [vmem:[#allocation5 + $0x21e8] sm:$0xff]
    %v1140 = vld [vmem:[#allocation5 + $0x21f0] sm:$0xff]
    %v1141 = vld [vmem:[#allocation5 + $0x21f8] sm:$0xff]
    %v1142 = vld [vmem:[#allocation5 + $0x2200] sm:$0xff]
    %v1143 = vld [vmem:[#allocation5 + $0x2208] sm:$0xff]
    %v1144 = vld [vmem:[#allocation5 + $0x2210] sm:$0xff]
    %v1145 = vld [vmem:[#allocation5 + $0x2218] sm:$0xff]
    %v1146 = vld [vmem:[#allocation5 + $0x2220] sm:$0xff]
    %v1147 = vld [vmem:[#allocation5 + $0x2228] sm:$0xff]
    %v1148 = vld [vmem:[#allocation5 + $0x2230] sm:$0xff]
    %v1149 = vld [vmem:[#allocation5 + $0x2238] sm:$0xff]
    %v1150 = vld [vmem:[#allocation5 + $0x2240] sm:$0xff]
    %v1151 = vld [vmem:[#allocation5 + $0x2248] sm:$0xff]
    %v1152 = vld [vmem:[#allocation5 + $0x2250] sm:$0xff]
    %v1153 = vld [vmem:[#allocation5 + $0x2258] sm:$0xff]
    %v1154 = vld [vmem:[#allocation5 + $0x2260] sm:$0xff]
    %v1155 = vld [vmem:[#allocation5 + $0x2268] sm:$0xff]
    %v1156 = vld [vmem:[#allocation5 + $0x2270] sm:$0xff]
    %v1157 = vld [vmem:[#allocation5 + $0x2278] sm:$0xff]
    %v1158 = vld [vmem:[#allocation5 + $0x2280] sm:$0xff]
    %v1159 = vld [vmem:[#allocation5 + $0x2288] sm:$0xff]
    %v1160 = vld [vmem:[#allocation5 + $0x2290] sm:$0xff]
    %v1161 = vld [vmem:[#allocation5 + $0x2298] sm:$0xff]
    %v1162 = vld [vmem:[#allocation5 + $0x22a0] sm:$0xff]
    %v1163 = vld [vmem:[#allocation5 + $0x22a8] sm:$0xff]
    %v1164 = vld [vmem:[#allocation5 + $0x22b0] sm:$0xff]
    %v1165 = vld [vmem:[#allocation5 + $0x22b8] sm:$0xff]
    %v1166 = vld [vmem:[#allocation5 + $0x22c0] sm:$0xff]
    %v1167 = vld [vmem:[#allocation5 + $0x22c8] sm:$0xff]
    %v1168 = vld [vmem:[#allocation5 + $0x22d0] sm:$0xff]
    %v1169 = vld [vmem:[#allocation5 + $0x22d8] sm:$0xff]
    %v1170 = vld [vmem:[#allocation5 + $0x22e0] sm:$0xff]
    %v1171 = vld [vmem:[#allocation5 + $0x22e8] sm:$0xff]
    %v1172 = vld [vmem:[#allocation5 + $0x22f0] sm:$0xff]
    %v1173 = vld [vmem:[#allocation5 + $0x22f8] sm:$0xff]
    %v1174 = vld [vmem:[#allocation5 + $0x2300] sm:$0xff]
    %v1175 = vld [vmem:[#allocation5 + $0x2308] sm:$0xff]
    %v1176 = vld [vmem:[#allocation5 + $0x2310] sm:$0xff]
    %v1177 = vld [vmem:[#allocation5 + $0x2318] sm:$0xff]
    %v1178 = vld [vmem:[#allocation5 + $0x2320] sm:$0xff]
    %v1179 = vld [vmem:[#allocation5 + $0x2328] sm:$0xff]
    %v1180 = vld [vmem:[#allocation5 + $0x2330] sm:$0xff]
    %v1181 = vld [vmem:[#allocation5 + $0x2338] sm:$0xff]
    %v1182 = vld [vmem:[#allocation5 + $0x2340] sm:$0xff]
    %v1183 = vld [vmem:[#allocation5 + $0x2348] sm:$0xff]
    %v1184 = vld [vmem:[#allocation5 + $0x2350] sm:$0xff]
    %v1185 = vld [vmem:[#allocation5 + $0x2358] sm:$0xff]
    %v1186 = vld [vmem:[#allocation5 + $0x2360] sm:$0xff]
    %v1187 = vld [vmem:[#allocation5 + $0x2368] sm:$0xff]
    %v1188 = vld [vmem:[#allocation5 + $0x2370] sm:$0xff]
    %v1189 = vld [vmem:[#allocation5 + $0x2378] sm:$0xff]
    %v1190 = vld [vmem:[#allocation5 + $0x2380] sm:$0xff]
    %v1191 = vld [vmem:[#allocation5 + $0x2388] sm:$0xff]
    %v1192 = vld [vmem:[#allocation5 + $0x2390] sm:$0xff]
    %v1193 = vld [vmem:[#allocation5 + $0x2398] sm:$0xff]
    %v1194 = vld [vmem:[#allocation5 + $0x23a0] sm:$0xff]
    %v1195 = vld [vmem:[#allocation5 + $0x23a8] sm:$0xff]
    %v1196 = vld [vmem:[#allocation5 + $0x23b0] sm:$0xff]
    %v1197 = vld [vmem:[#allocation5 + $0x23b8] sm:$0xff]
    %v1198 = vld [vmem:[#allocation5 + $0x23c0] sm:$0xff]
    %v1199 = vld [vmem:[#allocation5 + $0x23c8] sm:$0xff]
    %v1200 = vld [vmem:[#allocation5 + $0x23d0] sm:$0xff]
    %v1201 = vld [vmem:[#allocation5 + $0x23d8] sm:$0xff]
    %v1202 = vld [vmem:[#allocation5 + $0x23e0] sm:$0xff]
    %v1203 = vld [vmem:[#allocation5 + $0x23e8] sm:$0xff]
    %v1204 = vld [vmem:[#allocation5 + $0x23f0] sm:$0xff]
    %v1205 = vld [vmem:[#allocation5 + $0x23f8] sm:$0xff]
    %v1206 = vld [vmem:[#allocation5 + $0x2400] sm:$0xff]
    %v1207 = vld [vmem:[#allocation5 + $0x2408] sm:$0xff]
    %v1208 = vld [vmem:[#allocation5 + $0x2410] sm:$0xff]
    %v1209 = vld [vmem:[#allocation5 + $0x2418] sm:$0xff]
    %v1210 = vld [vmem:[#allocation5 + $0x2420] sm:$0xff]
    %v1211 = vld [vmem:[#allocation5 + $0x2428] sm:$0xff]
    %v1212 = vld [vmem:[#allocation5 + $0x2430] sm:$0xff]
    %v1213 = vld [vmem:[#allocation5 + $0x2438] sm:$0xff]
    %v1214 = vld [vmem:[#allocation5 + $0x2440] sm:$0xff]
    %v1215 = vld [vmem:[#allocation5 + $0x2448] sm:$0xff]
    %v1216 = vld [vmem:[#allocation5 + $0x2450] sm:$0xff]
    %v1217 = vld [vmem:[#allocation5 + $0x2458] sm:$0xff]
    %v1218 = vld [vmem:[#allocation5 + $0x2460] sm:$0xff]
    %v1219 = vld [vmem:[#allocation5 + $0x2468] sm:$0xff]
    %v1220 = vld [vmem:[#allocation5 + $0x2470] sm:$0xff]
    %v1221 = vld [vmem:[#allocation5 + $0x2478] sm:$0xff]
    %v1222 = vld [vmem:[#allocation5 + $0x2480] sm:$0xff]
    %v1223 = vld [vmem:[#allocation5 + $0x2488] sm:$0xff]
    %v1224 = vld [vmem:[#allocation5 + $0x2490] sm:$0xff]
    %v1225 = vld [vmem:[#allocation5 + $0x2498] sm:$0xff]
    %v1226 = vld [vmem:[#allocation5 + $0x24a0] sm:$0xff]
    %v1227 = vld [vmem:[#allocation5 + $0x24a8] sm:$0xff]
    %v1228 = vld [vmem:[#allocation5 + $0x24b0] sm:$0xff]
    %v1229 = vld [vmem:[#allocation5 + $0x24b8] sm:$0xff]
    %v1230 = vld [vmem:[#allocation5 + $0x24c0] sm:$0xff]
    %v1231 = vld [vmem:[#allocation5 + $0x24c8] sm:$0xff]
    %v1232 = vld [vmem:[#allocation5 + $0x24d0] sm:$0xff]
    %v1233 = vld [vmem:[#allocation5 + $0x24d8] sm:$0xff]
    %v1234 = vld [vmem:[#allocation5 + $0x24e0] sm:$0xff]
    %v1235 = vld [vmem:[#allocation5 + $0x24e8] sm:$0xff]
    %v1236 = vld [vmem:[#allocation5 + $0x24f0] sm:$0xff]
    %v1237 = vld [vmem:[#allocation5 + $0x24f8] sm:$0xff]
    %v1238 = vld [vmem:[#allocation5 + $0x2500] sm:$0xff]
    %v1239 = vld [vmem:[#allocation5 + $0x2508] sm:$0xff]
    %v1240 = vld [vmem:[#allocation5 + $0x2510] sm:$0xff]
    %v1241 = vld [vmem:[#allocation5 + $0x2518] sm:$0xff]
    %v1242 = vld [vmem:[#allocation5 + $0x2520] sm:$0xff]
    %v1243 = vld [vmem:[#allocation5 + $0x2528] sm:$0xff]
    %v1244 = vld [vmem:[#allocation5 + $0x2530] sm:$0xff]
    %v1245 = vld [vmem:[#allocation5 + $0x2538] sm:$0xff]
    %v1246 = vld [vmem:[#allocation5 + $0x2540] sm:$0xff]
    %v1247 = vld [vmem:[#allocation5 + $0x2548] sm:$0xff]
    %v1248 = vld [vmem:[#allocation5 + $0x2550] sm:$0xff]
    %v1249 = vld [vmem:[#allocation5 + $0x2558] sm:$0xff]
    %v1250 = vld [vmem:[#allocation5 + $0x2560] sm:$0xff]
    %v1251 = vld [vmem:[#allocation5 + $0x2568] sm:$0xff]
    %v1252 = vld [vmem:[#allocation5 + $0x2570] sm:$0xff]
    %v1253 = vld [vmem:[#allocation5 + $0x2578] sm:$0xff]
    %v1254 = vld [vmem:[#allocation5 + $0x2580] sm:$0xff]
    %v1255 = vld [vmem:[#allocation5 + $0x2588] sm:$0xff]
    %v1256 = vld [vmem:[#allocation5 + $0x2590] sm:$0xff]
    %v1257 = vld [vmem:[#allocation5 + $0x2598] sm:$0xff]
    %v1258 = vld [vmem:[#allocation5 + $0x25a0] sm:$0xff]
    %v1259 = vld [vmem:[#allocation5 + $0x25a8] sm:$0xff]
    %v1260 = vld [vmem:[#allocation5 + $0x25b0] sm:$0xff]
    %v1261 = vld [vmem:[#allocation5 + $0x25b8] sm:$0xff]
    %v1262 = vld [vmem:[#allocation5 + $0x25c0] sm:$0xff]
    %v1263 = vld [vmem:[#allocation5 + $0x25c8] sm:$0xff]
    %v1264 = vld [vmem:[#allocation5 + $0x25d0] sm:$0xff]
    %v1265 = vld [vmem:[#allocation5 + $0x25d8] sm:$0xff]
    %v1266 = vld [vmem:[#allocation5 + $0x25e0] sm:$0xff]
    %v1267 = vld [vmem:[#allocation5 + $0x25e8] sm:$0xff]
    %v1268 = vld [vmem:[#allocation5 + $0x25f0] sm:$0xff]
    %v1269 = vld [vmem:[#allocation5 + $0x25f8] sm:$0xff]
    %v1270 = vld [vmem:[#allocation5 + $0x2600] sm:$0xff]
    %v1271 = vld [vmem:[#allocation5 + $0x2608] sm:$0xff]
    %v1272 = vld [vmem:[#allocation5 + $0x2610] sm:$0xff]
    %v1273 = vld [vmem:[#allocation5 + $0x2618] sm:$0xff]
    %v1274 = vld [vmem:[#allocation5 + $0x2620] sm:$0xff]
    %v1275 = vld [vmem:[#allocation5 + $0x2628] sm:$0xff]
    %v1276 = vld [vmem:[#allocation5 + $0x2630] sm:$0xff]
    %v1277 = vld [vmem:[#allocation5 + $0x2638] sm:$0xff]
    %v1278 = vld [vmem:[#allocation5 + $0x2640] sm:$0xff]
    %v1279 = vld [vmem:[#allocation5 + $0x2648] sm:$0xff]
    %v1280 = vld [vmem:[#allocation5 + $0x2650] sm:$0xff]
    %v1281 = vld [vmem:[#allocation5 + $0x2658] sm:$0xff]
    %v1282 = vld [vmem:[#allocation5 + $0x2660] sm:$0xff]
    %v1283 = vld [vmem:[#allocation5 + $0x2668] sm:$0xff]
    %v1284 = vld [vmem:[#allocation5 + $0x2670] sm:$0xff]
    %v1285 = vld [vmem:[#allocation5 + $0x2678] sm:$0xff]
    %v1286 = vld [vmem:[#allocation5 + $0x2680] sm:$0xff]
    %v1287 = vld [vmem:[#allocation5 + $0x2688] sm:$0xff]
    %v1288 = vld [vmem:[#allocation5 + $0x2690] sm:$0xff]
    %v1289 = vld [vmem:[#allocation5 + $0x2698] sm:$0xff]
    %v1290 = vld [vmem:[#allocation5 + $0x26a0] sm:$0xff]
    %v1291 = vld [vmem:[#allocation5 + $0x26a8] sm:$0xff]
    %v1292 = vld [vmem:[#allocation5 + $0x26b0] sm:$0xff]
    %v1293 = vld [vmem:[#allocation5 + $0x26b8] sm:$0xff]
    %v1294 = vld [vmem:[#allocation5 + $0x26c0] sm:$0xff]
    %v1295 = vld [vmem:[#allocation5 + $0x26c8] sm:$0xff]
    %v1296 = vld [vmem:[#allocation5 + $0x26d0] sm:$0xff]
    %v1297 = vld [vmem:[#allocation5 + $0x26d8] sm:$0xff]
    %v1298 = vld [vmem:[#allocation5 + $0x26e0] sm:$0xff]
    %v1299 = vld [vmem:[#allocation5 + $0x26e8] sm:$0xff]
    %v1300 = vld [vmem:[#allocation5 + $0x26f0] sm:$0xff]
    %v1301 = vld [vmem:[#allocation5 + $0x26f8] sm:$0xff]
    %v1302 = vld [vmem:[#allocation5 + $0x2700] sm:$0xff]
    %v1303 = vld [vmem:[#allocation5 + $0x2708] sm:$0xff]
    %v1304 = vld [vmem:[#allocation5 + $0x2710] sm:$0xff]
    %v1305 = vld [vmem:[#allocation5 + $0x2718] sm:$0xff]
    %v1306 = vld [vmem:[#allocation5 + $0x2720] sm:$0xff]
    %v1307 = vld [vmem:[#allocation5 + $0x2728] sm:$0xff]
    %v1308 = vld [vmem:[#allocation5 + $0x2730] sm:$0xff]
    %v1309 = vld [vmem:[#allocation5 + $0x2738] sm:$0xff]
    %v1310 = vld [vmem:[#allocation5 + $0x2740] sm:$0xff]
    %v1311 = vld [vmem:[#allocation5 + $0x2748] sm:$0xff]
    %v1312 = vld [vmem:[#allocation5 + $0x2750] sm:$0xff]
    %v1313 = vld [vmem:[#allocation5 + $0x2758] sm:$0xff]
    %v1314 = vld [vmem:[#allocation5 + $0x2760] sm:$0xff]
    %v1315 = vld [vmem:[#allocation5 + $0x2768] sm:$0xff]
    %v1316 = vld [vmem:[#allocation5 + $0x2770] sm:$0xff]
    %v1317 = vld [vmem:[#allocation5 + $0x2778] sm:$0xff]
    %v1318 = vld [vmem:[#allocation5 + $0x2780] sm:$0xff]
    %v1319 = vld [vmem:[#allocation5 + $0x2788] sm:$0xff]
    %v1320 = vld [vmem:[#allocation5 + $0x2790] sm:$0xff]
    %v1321 = vld [vmem:[#allocation5 + $0x2798] sm:$0xff]
    %v1322 = vld [vmem:[#allocation5 + $0x27a0] sm:$0xff]
    %v1323 = vld [vmem:[#allocation5 + $0x27a8] sm:$0xff]
    %v1324 = vld [vmem:[#allocation5 + $0x27b0] sm:$0xff]
    %v1325 = vld [vmem:[#allocation5 + $0x27b8] sm:$0xff]
    %v1326 = vld [vmem:[#allocation5 + $0x27c0] sm:$0xff]
    %v1327 = vld [vmem:[#allocation5 + $0x27c8] sm:$0xff]
    %v1328 = vld [vmem:[#allocation5 + $0x27d0] sm:$0xff]
    %v1329 = vld [vmem:[#allocation5 + $0x27d8] sm:$0xff]
    %v1330 = vld [vmem:[#allocation5 + $0x27e0] sm:$0xff]
    %v1331 = vld [vmem:[#allocation5 + $0x27e8] sm:$0xff]
    %v1332 = vld [vmem:[#allocation5 + $0x27f0] sm:$0xff]
    %v1333 = vld [vmem:[#allocation5 + $0x27f8] sm:$0xff]
    %v1334 = vld [vmem:[#allocation5 + $0x2800] sm:$0xff]
    %v1335 = vld [vmem:[#allocation5 + $0x2808] sm:$0xff]
    %v1336 = vld [vmem:[#allocation5 + $0x2810] sm:$0xff]
    %v1337 = vld [vmem:[#allocation5 + $0x2818] sm:$0xff]
    %v1338 = vld [vmem:[#allocation5 + $0x2820] sm:$0xff]
    %v1339 = vld [vmem:[#allocation5 + $0x2828] sm:$0xff]
    %v1340 = vld [vmem:[#allocation5 + $0x2830] sm:$0xff]
    %v1341 = vld [vmem:[#allocation5 + $0x2838] sm:$0xff]
    %v1342 = vld [vmem:[#allocation5 + $0x2840] sm:$0xff]
    %v1343 = vld [vmem:[#allocation5 + $0x2848] sm:$0xff]
    %v1344 = vld [vmem:[#allocation5 + $0x2850] sm:$0xff]
    %v1345 = vld [vmem:[#allocation5 + $0x2858] sm:$0xff]
    %v1346 = vld [vmem:[#allocation5 + $0x2860] sm:$0xff]
    %v1347 = vld [vmem:[#allocation5 + $0x2868] sm:$0xff]
    %v1348 = vld [vmem:[#allocation5 + $0x2870] sm:$0xff]
    %v1349 = vld [vmem:[#allocation5 + $0x2878] sm:$0xff]
    %v1350 = vld [vmem:[#allocation5 + $0x2880] sm:$0xff]
    %v1351 = vld [vmem:[#allocation5 + $0x2888] sm:$0xff]
    %v1352 = vld [vmem:[#allocation5 + $0x2890] sm:$0xff]
    %v1353 = vld [vmem:[#allocation5 + $0x2898] sm:$0xff]
    %v1354 = vld [vmem:[#allocation5 + $0x28a0] sm:$0xff]
    %v1355 = vld [vmem:[#allocation5 + $0x28a8] sm:$0xff]
    %v1356 = vld [vmem:[#allocation5 + $0x28b0] sm:$0xff]
    %v1357 = vld [vmem:[#allocation5 + $0x28b8] sm:$0xff]
    %v1358 = vld [vmem:[#allocation5 + $0x28c0] sm:$0xff]
    %v1359 = vld [vmem:[#allocation5 + $0x28c8] sm:$0xff]
    %v1360 = vld [vmem:[#allocation5 + $0x28d0] sm:$0xff]
    %v1361 = vld [vmem:[#allocation5 + $0x28d8] sm:$0xff]
    %v1362 = vld [vmem:[#allocation5 + $0x28e0] sm:$0xff]
    %v1363 = vld [vmem:[#allocation5 + $0x28e8] sm:$0xff]
    %v1364 = vld [vmem:[#allocation5 + $0x28f0] sm:$0xff]
    %v1365 = vld [vmem:[#allocation5 + $0x28f8] sm:$0xff]
    %v1366 = vld [vmem:[#allocation5 + $0x2900] sm:$0xff]
    %v1367 = vld [vmem:[#allocation5 + $0x2908] sm:$0xff]
    %v1368 = vld [vmem:[#allocation5 + $0x2910] sm:$0xff]
    %v1369 = vld [vmem:[#allocation5 + $0x2918] sm:$0xff]
    %v1370 = vld [vmem:[#allocation5 + $0x2920] sm:$0xff]
    %v1371 = vld [vmem:[#allocation5 + $0x2928] sm:$0xff]
    %v1372 = vld [vmem:[#allocation5 + $0x2930] sm:$0xff]
    %v1373 = vld [vmem:[#allocation5 + $0x2938] sm:$0xff]
    %v1374 = vld [vmem:[#allocation5 + $0x2940] sm:$0xff]
    %v1375 = vld [vmem:[#allocation5 + $0x2948] sm:$0xff]
    %v1376 = vld [vmem:[#allocation5 + $0x2950] sm:$0xff]
    %v1377 = vld [vmem:[#allocation5 + $0x2958] sm:$0xff]
    %v1378 = vld [vmem:[#allocation5 + $0x2960] sm:$0xff]
    %v1379 = vld [vmem:[#allocation5 + $0x2968] sm:$0xff]
    %v1380 = vld [vmem:[#allocation5 + $0x2970] sm:$0xff]
    %v1381 = vld [vmem:[#allocation5 + $0x2978] sm:$0xff]
    %v1382 = vld [vmem:[#allocation5 + $0x2980] sm:$0xff]
    %v1383 = vld [vmem:[#allocation5 + $0x2988] sm:$0xff]
    %v1384 = vld [vmem:[#allocation5 + $0x2990] sm:$0xff]
    %v1385 = vld [vmem:[#allocation5 + $0x2998] sm:$0xff]
    %v1386 = vld [vmem:[#allocation5 + $0x29a0] sm:$0xff]
    %v1387 = vld [vmem:[#allocation5 + $0x29a8] sm:$0xff]
    %v1388 = vld [vmem:[#allocation5 + $0x29b0] sm:$0xff]
    %v1389 = vld [vmem:[#allocation5 + $0x29b8] sm:$0xff]
    %v1390 = vld [vmem:[#allocation5 + $0x29c0] sm:$0xff]
    %v1391 = vld [vmem:[#allocation5 + $0x29c8] sm:$0xff]
    %v1392 = vld [vmem:[#allocation5 + $0x29d0] sm:$0xff]
    %v1393 = vld [vmem:[#allocation5 + $0x29d8] sm:$0xff]
    %v1394 = vld [vmem:[#allocation5 + $0x29e0] sm:$0xff]
    %v1395 = vld [vmem:[#allocation5 + $0x29e8] sm:$0xff]
    %v1396 = vld [vmem:[#allocation5 + $0x29f0] sm:$0xff]
    %v1397 = vld [vmem:[#allocation5 + $0x29f8] sm:$0xff]
    %v1398 = vld [vmem:[#allocation5 + $0x2a00] sm:$0xff]
    %v1399 = vld [vmem:[#allocation5 + $0x2a08] sm:$0xff]
    %v1400 = vld [vmem:[#allocation5 + $0x2a10] sm:$0xff]
    %v1401 = vld [vmem:[#allocation5 + $0x2a18] sm:$0xff]
    %v1402 = vld [vmem:[#allocation5 + $0x2a20] sm:$0xff]
    %v1403 = vld [vmem:[#allocation5 + $0x2a28] sm:$0xff]
    %v1404 = vld [vmem:[#allocation5 + $0x2a30] sm:$0xff]
    %v1405 = vld [vmem:[#allocation5 + $0x2a38] sm:$0xff]
    %v1406 = vld [vmem:[#allocation5 + $0x2a40] sm:$0xff]
    %v1407 = vld [vmem:[#allocation5 + $0x2a48] sm:$0xff]
    %v1408 = vld [vmem:[#allocation5 + $0x2a50] sm:$0xff]
    %v1409 = vld [vmem:[#allocation5 + $0x2a58] sm:$0xff]
    %v1410 = vld [vmem:[#allocation5 + $0x2a60] sm:$0xff]
    %v1411 = vld [vmem:[#allocation5 + $0x2a68] sm:$0xff]
    %v1412 = vld [vmem:[#allocation5 + $0x2a70] sm:$0xff]
    %v1413 = vld [vmem:[#allocation5 + $0x2a78] sm:$0xff]
    %v1414 = vld [vmem:[#allocation5 + $0x2a80] sm:$0xff]
    %v1415 = vld [vmem:[#allocation5 + $0x2a88] sm:$0xff]
    %v1416 = vld [vmem:[#allocation5 + $0x2a90] sm:$0xff]
    %v1417 = vld [vmem:[#allocation5 + $0x2a98] sm:$0xff]
    %v1418 = vld [vmem:[#allocation5 + $0x2aa0] sm:$0xff]
    %v1419 = vld [vmem:[#allocation5 + $0x2aa8] sm:$0xff]
    %v1420 = vld [vmem:[#allocation5 + $0x2ab0] sm:$0xff]
    %v1421 = vld [vmem:[#allocation5 + $0x2ab8] sm:$0xff]
    %v1422 = vld [vmem:[#allocation5 + $0x2ac0] sm:$0xff]
    %v1423 = vld [vmem:[#allocation5 + $0x2ac8] sm:$0xff]
    %v1424 = vld [vmem:[#allocation5 + $0x2ad0] sm:$0xff]
    %v1425 = vld [vmem:[#allocation5 + $0x2ad8] sm:$0xff]
    %v1426 = vld [vmem:[#allocation5 + $0x2ae0] sm:$0xff]
    %v1427 = vld [vmem:[#allocation5 + $0x2ae8] sm:$0xff]
    %v1428 = vld [vmem:[#allocation5 + $0x2af0] sm:$0xff]
    %v1429 = vld [vmem:[#allocation5 + $0x2af8] sm:$0xff]
    %v1430 = vld [vmem:[#allocation5 + $0x2b00] sm:$0xff]
    %v1431 = vld [vmem:[#allocation5 + $0x2b08] sm:$0xff]
    %v1432 = vld [vmem:[#allocation5 + $0x2b10] sm:$0xff]
    %v1433 = vld [vmem:[#allocation5 + $0x2b18] sm:$0xff]
    %v1434 = vld [vmem:[#allocation5 + $0x2b20] sm:$0xff]
    %v1435 = vld [vmem:[#allocation5 + $0x2b28] sm:$0xff]
    %v1436 = vld [vmem:[#allocation5 + $0x2b30] sm:$0xff]
    %v1437 = vld [vmem:[#allocation5 + $0x2b38] sm:$0xff]
    %v1438 = vld [vmem:[#allocation5 + $0x2b40] sm:$0xff]
    %v1439 = vld [vmem:[#allocation5 + $0x2b48] sm:$0xff]
    %v1440 = vld [vmem:[#allocation5 + $0x2b50] sm:$0xff]
    %v1441 = vld [vmem:[#allocation5 + $0x2b58] sm:$0xff]
    %v1442 = vld [vmem:[#allocation5 + $0x2b60] sm:$0xff]
    %v1443 = vld [vmem:[#allocation5 + $0x2b68] sm:$0xff]
    %v1444 = vld [vmem:[#allocation5 + $0x2b70] sm:$0xff]
    %v1445 = vld [vmem:[#allocation5 + $0x2b78] sm:$0xff]
    %v1446 = vld [vmem:[#allocation5 + $0x2b80] sm:$0xff]
    %v1447 = vld [vmem:[#allocation5 + $0x2b88] sm:$0xff]
    %v1448 = vld [vmem:[#allocation5 + $0x2b90] sm:$0xff]
    %v1449 = vld [vmem:[#allocation5 + $0x2b98] sm:$0xff]
    %v1450 = vld [vmem:[#allocation5 + $0x2ba0] sm:$0xff]
    %v1451 = vld [vmem:[#allocation5 + $0x2ba8] sm:$0xff]
    %v1452 = vld [vmem:[#allocation5 + $0x2bb0] sm:$0xff]
    %v1453 = vld [vmem:[#allocation5 + $0x2bb8] sm:$0xff]
    %v1454 = vld [vmem:[#allocation5 + $0x2bc0] sm:$0xff]
    %v1455 = vld [vmem:[#allocation5 + $0x2bc8] sm:$0xff]
    %v1456 = vld [vmem:[#allocation5 + $0x2bd0] sm:$0xff]
    %v1457 = vld [vmem:[#allocation5 + $0x2bd8] sm:$0xff]
    %v1458 = vld [vmem:[#allocation5 + $0x2be0] sm:$0xff]
    %v1459 = vld [vmem:[#allocation5 + $0x2be8] sm:$0xff]
    %v1460 = vld [vmem:[#allocation5 + $0x2bf0] sm:$0xff]
    %v1461 = vld [vmem:[#allocation5 + $0x2bf8] sm:$0xff]
    %v1462 = vld [vmem:[#allocation5 + $0x2c00] sm:$0xff]
    %v1463 = vld [vmem:[#allocation5 + $0x2c08] sm:$0xff]
    %v1464 = vld [vmem:[#allocation5 + $0x2c10] sm:$0xff]
    %v1465 = vld [vmem:[#allocation5 + $0x2c18] sm:$0xff]
    %v1466 = vld [vmem:[#allocation5 + $0x2c20] sm:$0xff]
    %v1467 = vld [vmem:[#allocation5 + $0x2c28] sm:$0xff]
    %v1468 = vld [vmem:[#allocation5 + $0x2c30] sm:$0xff]
    %v1469 = vld [vmem:[#allocation5 + $0x2c38] sm:$0xff]
    %v1470 = vld [vmem:[#allocation5 + $0x2c40] sm:$0xff]
    %v1471 = vld [vmem:[#allocation5 + $0x2c48] sm:$0xff]
    %v1472 = vld [vmem:[#allocation5 + $0x2c50] sm:$0xff]
    %v1473 = vld [vmem:[#allocation5 + $0x2c58] sm:$0xff]
    %v1474 = vld [vmem:[#allocation5 + $0x2c60] sm:$0xff]
    %v1475 = vld [vmem:[#allocation5 + $0x2c68] sm:$0xff]
    %v1476 = vld [vmem:[#allocation5 + $0x2c70] sm:$0xff]
    %v1477 = vld [vmem:[#allocation5 + $0x2c78] sm:$0xff]
    %v1478 = vld [vmem:[#allocation5 + $0x2c80] sm:$0xff]
    %v1479 = vld [vmem:[#allocation5 + $0x2c88] sm:$0xff]
    %v1480 = vld [vmem:[#allocation5 + $0x2c90] sm:$0xff]
    %v1481 = vld [vmem:[#allocation5 + $0x2c98] sm:$0xff]
    %v1482 = vld [vmem:[#allocation5 + $0x2ca0] sm:$0xff]
    %v1483 = vld [vmem:[#allocation5 + $0x2ca8] sm:$0xff]
    %v1484 = vld [vmem:[#allocation5 + $0x2cb0] sm:$0xff]
    %v1485 = vld [vmem:[#allocation5 + $0x2cb8] sm:$0xff]
    %v1486 = vld [vmem:[#allocation5 + $0x2cc0] sm:$0xff]
    %v1487 = vld [vmem:[#allocation5 + $0x2cc8] sm:$0xff]
    %v1488 = vld [vmem:[#allocation5 + $0x2cd0] sm:$0xff]
    %v1489 = vld [vmem:[#allocation5 + $0x2cd8] sm:$0xff]
    %v1490 = vld [vmem:[#allocation5 + $0x2ce0] sm:$0xff]
    %v1491 = vld [vmem:[#allocation5 + $0x2ce8] sm:$0xff]
    %v1492 = vld [vmem:[#allocation5 + $0x2cf0] sm:$0xff]
    %v1493 = vld [vmem:[#allocation5 + $0x2cf8] sm:$0xff]
    %v1494 = vld [vmem:[#allocation5 + $0x2d00] sm:$0xff]
    %v1495 = vld [vmem:[#allocation5 + $0x2d08] sm:$0xff]
    %v1496 = vld [vmem:[#allocation5 + $0x2d10] sm:$0xff]
    %v1497 = vld [vmem:[#allocation5 + $0x2d18] sm:$0xff]
    %v1498 = vld [vmem:[#allocation5 + $0x2d20] sm:$0xff]
    %v1499 = vld [vmem:[#allocation5 + $0x2d28] sm:$0xff]
    %v1500 = vld [vmem:[#allocation5 + $0x2d30] sm:$0xff]
    %v1501 = vld [vmem:[#allocation5 + $0x2d38] sm:$0xff]
    %v1502 = vld [vmem:[#allocation5 + $0x2d40] sm:$0xff]
    %v1503 = vld [vmem:[#allocation5 + $0x2d48] sm:$0xff]
    %v1504 = vld [vmem:[#allocation5 + $0x2d50] sm:$0xff]
    %v1505 = vld [vmem:[#allocation5 + $0x2d58] sm:$0xff]
    %v1506 = vld [vmem:[#allocation5 + $0x2d60] sm:$0xff]
    %v1507 = vld [vmem:[#allocation5 + $0x2d68] sm:$0xff]
    %v1508 = vld [vmem:[#allocation5 + $0x2d70] sm:$0xff]
    %v1509 = vld [vmem:[#allocation5 + $0x2d78] sm:$0xff]
    %v1510 = vld [vmem:[#allocation5 + $0x2d80] sm:$0xff]
    %v1511 = vld [vmem:[#allocation5 + $0x2d88] sm:$0xff]
    %v1512 = vld [vmem:[#allocation5 + $0x2d90] sm:$0xff]
    %v1513 = vld [vmem:[#allocation5 + $0x2d98] sm:$0xff]
    %v1514 = vld [vmem:[#allocation5 + $0x2da0] sm:$0xff]
    %v1515 = vld [vmem:[#allocation5 + $0x2da8] sm:$0xff]
    %v1516 = vld [vmem:[#allocation5 + $0x2db0] sm:$0xff]
    %v1517 = vld [vmem:[#allocation5 + $0x2db8] sm:$0xff]
    %v1518 = vld [vmem:[#allocation5 + $0x2dc0] sm:$0xff]
    %v1519 = vld [vmem:[#allocation5 + $0x2dc8] sm:$0xff]
    %v1520 = vld [vmem:[#allocation5 + $0x2dd0] sm:$0xff]
    %v1521 = vld [vmem:[#allocation5 + $0x2dd8] sm:$0xff]
    %v1522 = vld [vmem:[#allocation5 + $0x2de0] sm:$0xff]
    %v1523 = vld [vmem:[#allocation5 + $0x2de8] sm:$0xff]
    %v1524 = vld [vmem:[#allocation5 + $0x2df0] sm:$0xff]
    %v1525 = vld [vmem:[#allocation5 + $0x2df8] sm:$0xff]
    %v1526 = vld [vmem:[#allocation5 + $0x2e00] sm:$0xff]
    %v1527 = vld [vmem:[#allocation5 + $0x2e08] sm:$0xff]
    %v1528 = vld [vmem:[#allocation5 + $0x2e10] sm:$0xff]
    %v1529 = vld [vmem:[#allocation5 + $0x2e18] sm:$0xff]
    %v1530 = vld [vmem:[#allocation5 + $0x2e20] sm:$0xff]
    %v1531 = vld [vmem:[#allocation5 + $0x2e28] sm:$0xff]
    %v1532 = vld [vmem:[#allocation5 + $0x2e30] sm:$0xff]
    %v1533 = vld [vmem:[#allocation5 + $0x2e38] sm:$0xff]
    %v1534 = vld [vmem:[#allocation5 + $0x2e40] sm:$0xff]
    %v1535 = vld [vmem:[#allocation5 + $0x2e48] sm:$0xff]
    %v1536 = vld [vmem:[#allocation5 + $0x2e50] sm:$0xff]
    %v1537 = vld [vmem:[#allocation5 + $0x2e58] sm:$0xff]
    %v1538 = vld [vmem:[#allocation5 + $0x2e60] sm:$0xff]
    %v1539 = vld [vmem:[#allocation5 + $0x2e68] sm:$0xff]
    %v1540 = vld [vmem:[#allocation5 + $0x2e70] sm:$0xff]
    %v1541 = vld [vmem:[#allocation5 + $0x2e78] sm:$0xff]
    %v1542 = vld [vmem:[#allocation5 + $0x2e80] sm:$0xff]
    %v1543 = vld [vmem:[#allocation5 + $0x2e88] sm:$0xff]
    %v1544 = vld [vmem:[#allocation5 + $0x2e90] sm:$0xff]
    %v1545 = vld [vmem:[#allocation5 + $0x2e98] sm:$0xff]
    %v1546 = vld [vmem:[#allocation5 + $0x2ea0] sm:$0xff]
    %v1547 = vld [vmem:[#allocation5 + $0x2ea8] sm:$0xff]
    %v1548 = vld [vmem:[#allocation5 + $0x2eb0] sm:$0xff]
    %v1549 = vld [vmem:[#allocation5 + $0x2eb8] sm:$0xff]
    %v1550 = vld [vmem:[#allocation5 + $0x2ec0] sm:$0xff]
    %v1551 = vld [vmem:[#allocation5 + $0x2ec8] sm:$0xff]
    %v1552 = vld [vmem:[#allocation5 + $0x2ed0] sm:$0xff]
    %v1553 = vld [vmem:[#allocation5 + $0x2ed8] sm:$0xff]
    %v1554 = vld [vmem:[#allocation5 + $0x2ee0] sm:$0xff]
    %v1555 = vld [vmem:[#allocation5 + $0x2ee8] sm:$0xff]
    %v1556 = vld [vmem:[#allocation5 + $0x2ef0] sm:$0xff]
    %v1557 = vld [vmem:[#allocation5 + $0x2ef8] sm:$0xff]
    %v1558 = vld [vmem:[#allocation5 + $0x2f00] sm:$0xff]
    %v1559 = vld [vmem:[#allocation5 + $0x2f08] sm:$0xff]
    %v1560 = vld [vmem:[#allocation5 + $0x2f10] sm:$0xff]
    %v1561 = vld [vmem:[#allocation5 + $0x2f18] sm:$0xff]
    %v1562 = vld [vmem:[#allocation5 + $0x2f20] sm:$0xff]
    %v1563 = vld [vmem:[#allocation5 + $0x2f28] sm:$0xff]
    %v1564 = vld [vmem:[#allocation5 + $0x2f30] sm:$0xff]
    %v1565 = vld [vmem:[#allocation5 + $0x2f38] sm:$0xff]
    %v1566 = vld [vmem:[#allocation5 + $0x2f40] sm:$0xff]
    %v1567 = vld [vmem:[#allocation5 + $0x2f48] sm:$0xff]
    %v1568 = vld [vmem:[#allocation5 + $0x2f50] sm:$0xff]
    %v1569 = vld [vmem:[#allocation5 + $0x2f58] sm:$0xff]
    %v1570 = vld [vmem:[#allocation5 + $0x2f60] sm:$0xff]
    %v1571 = vld [vmem:[#allocation5 + $0x2f68] sm:$0xff]
    %v1572 = vld [vmem:[#allocation5 + $0x2f70] sm:$0xff]
    %v1573 = vld [vmem:[#allocation5 + $0x2f78] sm:$0xff]
    %v1574 = vld [vmem:[#allocation5 + $0x2f80] sm:$0xff]
    %v1575 = vld [vmem:[#allocation5 + $0x2f88] sm:$0xff]
    %v1576 = vld [vmem:[#allocation5 + $0x2f90] sm:$0xff]
    %v1577 = vld [vmem:[#allocation5 + $0x2f98] sm:$0xff]
    %v1578 = vld [vmem:[#allocation5 + $0x2fa0] sm:$0xff]
    %v1579 = vld [vmem:[#allocation5 + $0x2fa8] sm:$0xff]
    %v1580 = vld [vmem:[#allocation5 + $0x2fb0] sm:$0xff]
    %v1581 = vld [vmem:[#allocation5 + $0x2fb8] sm:$0xff]
    %v1582 = vld [vmem:[#allocation5 + $0x2fc0] sm:$0xff]
    %v1583 = vld [vmem:[#allocation5 + $0x2fc8] sm:$0xff]
    %v1584 = vld [vmem:[#allocation5 + $0x2fd0] sm:$0xff]
    %v1585 = vld [vmem:[#allocation5 + $0x2fd8] sm:$0xff]
    %v1586 = vld [vmem:[#allocation5 + $0x2fe0] sm:$0xff]
    %v1587 = vld [vmem:[#allocation5 + $0x2fe8] sm:$0xff]
    %v1588 = vld [vmem:[#allocation5 + $0x2ff0] sm:$0xff]
    %v1589 = vld [vmem:[#allocation5 + $0x2ff8] sm:$0xff]
    %v1590 = vld [vmem:[#allocation7] sm:$0xff]
    %v1591 = vld [vmem:[#allocation7 + $0x8] sm:$0xff]
    %v1594 = vlaneseq
    %v1595 = vshrl.u32 %v1594, 7
    %v1596 = vsub.s32 0, %v1595
    %v1597 = vrot.slane %v1590, %v1596
    %v1598 = vlaneseq
    %v1599 = vshrl.u32 %v1598, 7
    %v1600 = vsub.s32 1, %v1599
    %v1601 = vrot.slane %v1590, %v1600
    %v1602 = vlaneseq
    %v1603 = vshrl.u32 %v1602, 7
    %v1604 = vsub.s32 2, %v1603
    %v1605 = vrot.slane %v1590, %v1604
    %v1606 = vlaneseq
    %v1607 = vshrl.u32 %v1606, 7
    %v1608 = vsub.s32 3, %v1607
    %v1609 = vrot.slane %v1590, %v1608
    %v1610 = vlaneseq
    %v1611 = vshrl.u32 %v1610, 7
    %v1612 = vsub.s32 4, %v1611
    %v1613 = vrot.slane %v1590, %v1612
    %v1614 = vlaneseq
    %v1615 = vshrl.u32 %v1614, 7
    %v1616 = vsub.s32 5, %v1615
    %v1617 = vrot.slane %v1590, %v1616
    %v1618 = vlaneseq
    %v1619 = vshrl.u32 %v1618, 7
    %v1620 = vsub.s32 6, %v1619
    %v1621 = vrot.slane %v1590, %v1620
    %v1622 = vlaneseq
    %v1623 = vshrl.u32 %v1622, 7
    %v1624 = vsub.s32 7, %v1623
    %v1625 = vrot.slane %v1590, %v1624
    %v1626 = vlaneseq
    %v1627 = vshrl.u32 %v1626, 7
    %v1628 = vsub.s32 0, %v1627
    %v1629 = vrot.slane %v1591, %v1628
    %v1630 = vlaneseq
    %v1631 = vshrl.u32 %v1630, 7
    %v1632 = vsub.s32 1, %v1631
    %v1633 = vrot.slane %v1591, %v1632
    %v1634 = vlaneseq
    %v1635 = vshrl.u32 %v1634, 7
    %v1636 = vsub.s32 2, %v1635
    %v1637 = vrot.slane %v1591, %v1636
    %v1638 = vlaneseq
    %v1639 = vshrl.u32 %v1638, 7
    %v1640 = vsub.s32 3, %v1639
    %v1641 = vrot.slane %v1591, %v1640
    %v1642 = vlaneseq
    %v1643 = vshrl.u32 %v1642, 7
    %v1644 = vsub.s32 4, %v1643
    %v1645 = vrot.slane %v1591, %v1644
    %v1646 = vlaneseq
    %v1647 = vshrl.u32 %v1646, 7
    %v1648 = vsub.s32 5, %v1647
    %v1649 = vrot.slane %v1591, %v1648
    %v1650 = vlaneseq
    %v1651 = vshrl.u32 %v1650, 7
    %v1652 = vsub.s32 6, %v1651
    %v1653 = vrot.slane %v1591, %v1652
    %v1654 = vlaneseq
    %v1655 = vshrl.u32 %v1654, 7
    %v1656 = vsub.s32 7, %v1655
    %v1657 = vrot.slane %v1591, %v1656
    %v1676 = vcombine.high %v52, %v52
    %v1678 = vunpack.c.l.s4 1983009808
    %v1679 = vunpack.c.0.s8 %v1678
    %v1680 = vlaneseq
    %v1681 = vshrl.u32 %v1680, 7
    %v1682 = vsub.s32 %v1679, %v1681
    %v1683 = vrot.slane %v52, %v1682
    %v1685 = vunpack.c.l.s4 1983009808
    %v1686 = vunpack.c.0.s8 %v1685
    %v1687 = vlaneseq
    %v1688 = vshrl.u32 %v1687, 7
    %v1689 = vsub.s32 %v1686, %v1688
    %v1690 = vrot.slane %v1676, %v1689
    %v1691 = vcombine.high %v1683, %v1683
    %v1692 = vcombine.high %v1690, %v1690
    %v1694 = vunpack.c.l.s4 1983009808
    %v1695 = vunpack.c.0.s8 %v1694
    %v1696 = vlaneseq
    %v1697 = vshrl.u32 %v1696, 7
    %v1698 = vsub.s32 %v1695, %v1697
    %v1699 = vrot.slane %v53, %v1698
    %v1700 = vcombine.high %v1699, %v1699
    %1707 = vmatprep.subr.mxu0 %v55
    %1708 = vmatpush1.xpose.msra.mxu0 %v54
    %1709 = vmatprep.subr.mxu0 %v61
    %1710 = vmatpush1.xpose.msra.mxu0 %v60
    %1711 = vmatprep.subr.mxu0 %v67
    %1712 = vmatpush1.xpose.msra.mxu0 %v66
    %1713 = vmatprep.subr.mxu0 %v73
    %1714 = vmatpush1.xpose.msra.mxu0 %v72
    %1715 = vmatprep.subr.mxu0 %v79
    %1716 = vmatpush1.xpose.msra.mxu0 %v78
    %1717 = vmatprep.subr.mxu0 %v85
    %1718 = vmatpush1.xpose.msra.mxu0 %v84
    %1719 = vmatprep.subr.mxu0 %v91
    %1720 = vmatpush1.xpose.msra.mxu0 %v90
    %1721 = vmatprep.subr.mxu0 %v97
    %1722 = vmatpush1.xpose.msra.mxu0 %v96
    %1723 = vmatprep.subr.mxu0 %v103
    %1724 = vmatpush1.xpose.msra.mxu0 %v102
    %1725 = vmatprep.subr.mxu0 %v109
    %1726 = vmatpush1.xpose.msra.mxu0 %v108
    %1727 = vmatprep.subr.mxu0 %v115
    %1728 = vmatpush1.xpose.msra.mxu0 %v114
    %1729 = vmatprep.subr.mxu0 %v121
    %1730 = vmatpush1.xpose.msra.mxu0 %v120
    %1731 = vmatprep.subr.mxu0 %v127
    %1732 = vmatpush1.xpose.msra.mxu0 %v126
    %1733 = vmatprep.subr.mxu0 %v133
    %1734 = vmatpush1.xpose.msra.mxu0 %v132
    %1735 = vmatprep.subr.mxu0 %v139
    %1736 = vmatpush1.xpose.msra.mxu0 %v138
    %1737 = vmatprep.subr.mxu0 %v145
    %1738 = vmatpush1.xpose.msra.mxu0 %v144
    %1739 = vmatprep.subr.mxu0 %v151
    %1740 = vmatpush1.xpose.msra.mxu0 %v150
    %1741 = vmatprep.subr.mxu0 %v157
    %1742 = vmatpush1.xpose.msra.mxu0 %v156
    %1743 = vmatprep.subr.mxu0 %v163
    %1744 = vmatpush1.xpose.msra.mxu0 %v162
    %1745 = vmatprep.subr.mxu0 %v169
    %1746 = vmatpush1.xpose.msra.mxu0 %v168
    %1747 = vmatprep.subr.mxu0 %v175
    %1748 = vmatpush1.xpose.msra.mxu0 %v174
    %1749 = vmatprep.subr.mxu0 %v181
    %1750 = vmatpush1.xpose.msra.mxu0 %v180
    %1751 = vmatprep.subr.mxu0 %v187
    %1752 = vmatpush1.xpose.msra.mxu0 %v186
    %1753 = vmatprep.subr.mxu0 %v193
    %1754 = vmatpush1.xpose.msra.mxu0 %v192
    %1755 = vmatprep.subr.mxu0 %v199
    %1756 = vmatpush1.xpose.msra.mxu0 %v198
    %1757 = vmatprep.subr.mxu0 %v205
    %1758 = vmatpush1.xpose.msra.mxu0 %v204
    %1759 = vmatprep.subr.mxu0 %v211
    %1760 = vmatpush1.xpose.msra.mxu0 %v210
    %1761 = vmatprep.subr.mxu0 %v217
    %1762 = vmatpush1.xpose.msra.mxu0 %v216
    %1763 = vmatprep.subr.mxu0 %v223
    %1764 = vmatpush1.xpose.msra.mxu0 %v222
    %1765 = vmatprep.subr.mxu0 %v229
    %1766 = vmatpush1.xpose.msra.mxu0 %v228
    %1767 = vmatprep.subr.mxu0 %v235
    %1768 = vmatpush1.xpose.msra.mxu0 %v234
    %1769 = vmatprep.subr.mxu0 %v241
    %1770 = vmatpush1.xpose.msra.mxu0 %v240
    %1771 = vmatprep.mubr.f32.mxu0 %v1691
    %1772 = vmatmul.mubr.f32.gmra.mrb[0].mxu0 %v1683
    %v1773 = vpop.f32.mrb[0].mxu0
    %v1774 = vadd.f32 %v1597, %v1773
    %v1775 = vpop.f32.mrb[0].mxu0
    %v1776 = vadd.f32 %v1601, %v1775
    %1777 = vdwg.mxu0
    %1778 = vmatprep.subr.mxu0 %v57
    %1779 = vmatpush1.xpose.msra.mxu0 %v56
    %1780 = vmatprep.subr.mxu0 %v63
    %1781 = vmatpush1.xpose.msra.mxu0 %v62
    %1782 = vmatprep.subr.mxu0 %v69
    %1783 = vmatpush1.xpose.msra.mxu0 %v68
    %1784 = vmatprep.subr.mxu0 %v75
    %1785 = vmatpush1.xpose.msra.mxu0 %v74
    %1786 = vmatprep.subr.mxu0 %v81
    %1787 = vmatpush1.xpose.msra.mxu0 %v80
    %1788 = vmatprep.subr.mxu0 %v87
    %1789 = vmatpush1.xpose.msra.mxu0 %v86
    %1790 = vmatprep.subr.mxu0 %v93
    %1791 = vmatpush1.xpose.msra.mxu0 %v92
    %1792 = vmatprep.subr.mxu0 %v99
    %1793 = vmatpush1.xpose.msra.mxu0 %v98
    %1794 = vmatprep.subr.mxu0 %v105
    %1795 = vmatpush1.xpose.msra.mxu0 %v104
    %1796 = vmatprep.subr.mxu0 %v111
    %1797 = vmatpush1.xpose.msra.mxu0 %v110
    %1798 = vmatprep.subr.mxu0 %v117
    %1799 = vmatpush1.xpose.msra.mxu0 %v116
    %1800 = vmatprep.subr.mxu0 %v123
    %1801 = vmatpush1.xpose.msra.mxu0 %v122
    %1802 = vmatprep.subr.mxu0 %v129
    %1803 = vmatpush1.xpose.msra.mxu0 %v128
    %1804 = vmatprep.subr.mxu0 %v135
    %1805 = vmatpush1.xpose.msra.mxu0 %v134
    %1806 = vmatprep.subr.mxu0 %v141
    %1807 = vmatpush1.xpose.msra.mxu0 %v140
    %1808 = vmatprep.subr.mxu0 %v147
    %1809 = vmatpush1.xpose.msra.mxu0 %v146
    %1810 = vmatprep.subr.mxu0 %v153
    %1811 = vmatpush1.xpose.msra.mxu0 %v152
    %1812 = vmatprep.subr.mxu0 %v159
    %1813 = vmatpush1.xpose.msra.mxu0 %v158
    %1814 = vmatprep.subr.mxu0 %v165
    %1815 = vmatpush1.xpose.msra.mxu0 %v164
    %1816 = vmatprep.subr.mxu0 %v171
    %1817 = vmatpush1.xpose.msra.mxu0 %v170
    %1818 = vmatprep.subr.mxu0 %v177
    %1819 = vmatpush1.xpose.msra.mxu0 %v176
    %1820 = vmatprep.subr.mxu0 %v183
    %1821 = vmatpush1.xpose.msra.mxu0 %v182
    %1822 = vmatprep.subr.mxu0 %v189
    %1823 = vmatpush1.xpose.msra.mxu0 %v188
    %1824 = vmatprep.subr.mxu0 %v195
    %1825 = vmatpush1.xpose.msra.mxu0 %v194
    %1826 = vmatprep.subr.mxu0 %v201
    %1827 = vmatpush1.xpose.msra.mxu0 %v200
    %1828 = vmatprep.subr.mxu0 %v207
    %1829 = vmatpush1.xpose.msra.mxu0 %v206
    %1830 = vmatprep.subr.mxu0 %v213
    %1831 = vmatpush1.xpose.msra.mxu0 %v212
    %1832 = vmatprep.subr.mxu0 %v219
    %1833 = vmatpush1.xpose.msra.mxu0 %v218
    %1834 = vmatprep.subr.mxu0 %v225
    %1835 = vmatpush1.xpose.msra.mxu0 %v224
    %1836 = vmatprep.subr.mxu0 %v231
    %1837 = vmatpush1.xpose.msra.mxu0 %v230
    %1838 = vmatprep.subr.mxu0 %v237
    %1839 = vmatpush1.xpose.msra.mxu0 %v236
    %1840 = vmatprep.subr.mxu0 %v243
    %1841 = vmatpush1.xpose.msra.mxu0 %v242
    %1842 = vmatprep.mubr.f32.mxu0 %v1692
    %1843 = vmatmul.mubr.f32.gmra.mrb[0].mxu0 %v1690
    %v1844 = vpop.f32.mrb[0].mxu0
    %v1845 = vadd.f32 %v1774, %v1844
    %v1846 = vpop.f32.mrb[0].mxu0
    %v1847 = vadd.f32 %v1776, %v1846
    %1848 = vdwg.mxu0
    %1849 = vmatprep.subr.mxu0 %v59
    %1850 = vmatpush1.xpose.msra.mxu0 %v58
    %1851 = vmatprep.subr.mxu0 %v65
    %1852 = vmatpush1.xpose.msra.mxu0 %v64
    %1853 = vmatprep.subr.mxu0 %v71
    %1854 = vmatpush1.xpose.msra.mxu0 %v70
    %1855 = vmatprep.subr.mxu0 %v77
    %1856 = vmatpush1.xpose.msra.mxu0 %v76
    %1857 = vmatprep.subr.mxu0 %v83
    %1858 = vmatpush1.xpose.msra.mxu0 %v82
    %1859 = vmatprep.subr.mxu0 %v89
    %1860 = vmatpush1.xpose.msra.mxu0 %v88
    %1861 = vmatprep.subr.mxu0 %v95
    %1862 = vmatpush1.xpose.msra.mxu0 %v94
    %1863 = vmatprep.subr.mxu0 %v101
    %1864 = vmatpush1.xpose.msra.mxu0 %v100
    %1865 = vmatprep.subr.mxu0 %v107
    %1866 = vmatpush1.xpose.msra.mxu0 %v106
    %1867 = vmatprep.subr.mxu0 %v113
    %1868 = vmatpush1.xpose.msra.mxu0 %v112
    %1869 = vmatprep.subr.mxu0 %v119
    %1870 = vmatpush1.xpose.msra.mxu0 %v118
    %1871 = vmatprep.subr.mxu0 %v125
    %1872 = vmatpush1.xpose.msra.mxu0 %v124
    %1873 = vmatprep.subr.mxu0 %v131
    %1874 = vmatpush1.xpose.msra.mxu0 %v130
    %1875 = vmatprep.subr.mxu0 %v137
    %1876 = vmatpush1.xpose.msra.mxu0 %v136
    %1877 = vmatprep.subr.mxu0 %v143
    %1878 = vmatpush1.xpose.msra.mxu0 %v142
    %1879 = vmatprep.subr.mxu0 %v149
    %1880 = vmatpush1.xpose.msra.mxu0 %v148
    %1881 = vmatprep.subr.mxu0 %v155
    %1882 = vmatpush1.xpose.msra.mxu0 %v154
    %1883 = vmatprep.subr.mxu0 %v161
    %1884 = vmatpush1.xpose.msra.mxu0 %v160
    %1885 = vmatprep.subr.mxu0 %v167
    %1886 = vmatpush1.xpose.msra.mxu0 %v166
    %1887 = vmatprep.subr.mxu0 %v173
    %1888 = vmatpush1.xpose.msra.mxu0 %v172
    %1889 = vmatprep.subr.mxu0 %v179
    %1890 = vmatpush1.xpose.msra.mxu0 %v178
    %1891 = vmatprep.subr.mxu0 %v185
    %1892 = vmatpush1.xpose.msra.mxu0 %v184
    %1893 = vmatprep.subr.mxu0 %v191
    %1894 = vmatpush1.xpose.msra.mxu0 %v190
    %1895 = vmatprep.subr.mxu0 %v197
    %1896 = vmatpush1.xpose.msra.mxu0 %v196
    %1897 = vmatprep.subr.mxu0 %v203
    %1898 = vmatpush1.xpose.msra.mxu0 %v202
    %1899 = vmatprep.subr.mxu0 %v209
    %1900 = vmatpush1.xpose.msra.mxu0 %v208
    %1901 = vmatprep.subr.mxu0 %v215
    %1902 = vmatpush1.xpose.msra.mxu0 %v214
    %1903 = vmatprep.subr.mxu0 %v221
    %1904 = vmatpush1.xpose.msra.mxu0 %v220
    %1905 = vmatprep.subr.mxu0 %v227
    %1906 = vmatpush1.xpose.msra.mxu0 %v226
    %1907 = vmatprep.subr.mxu0 %v233
    %1908 = vmatpush1.xpose.msra.mxu0 %v232
    %1909 = vmatprep.subr.mxu0 %v239
    %1910 = vmatpush1.xpose.msra.mxu0 %v238
    %1911 = vmatprep.subr.mxu0 %v245
    %1912 = vmatpush1.xpose.msra.mxu0 %v244
    %1913 = vmatprep.mubr.f32.mxu0 %v1700
    %1914 = vmatmul.mubr.f32.gmra.mrb[0].mxu0 %v1699
    %v1915 = vpop.f32.mrb[0].mxu0
    %v1916 = vadd.f32 %v1845, %v1915
    %v1917 = vpop.f32.mrb[0].mxu0
    %v1918 = vadd.f32 %v1847, %v1917
    %1919 = vdwg.mxu0
    %1920 = vmatprep.subr.mxu0 %v247
    %1921 = vmatpush1.xpose.msra.mxu0 %v246
    %1922 = vmatprep.subr.mxu0 %v253
    %1923 = vmatpush1.xpose.msra.mxu0 %v252
    %1924 = vmatprep.subr.mxu0 %v259
    %1925 = vmatpush1.xpose.msra.mxu0 %v258
    %1926 = vmatprep.subr.mxu0 %v265
    %1927 = vmatpush1.xpose.msra.mxu0 %v264
    %1928 = vmatprep.subr.mxu0 %v271
    %1929 = vmatpush1.xpose.msra.mxu0 %v270
    %1930 = vmatprep.subr.mxu0 %v277
    %1931 = vmatpush1.xpose.msra.mxu0 %v276
    %1932 = vmatprep.subr.mxu0 %v283
    %1933 = vmatpush1.xpose.msra.mxu0 %v282
    %1934 = vmatprep.subr.mxu0 %v289
    %1935 = vmatpush1.xpose.msra.mxu0 %v288
    %1936 = vmatprep.subr.mxu0 %v295
    %1937 = vmatpush1.xpose.msra.mxu0 %v294
    %1938 = vmatprep.subr.mxu0 %v301
    %1939 = vmatpush1.xpose.msra.mxu0 %v300
    %1940 = vmatprep.subr.mxu0 %v307
    %1941 = vmatpush1.xpose.msra.mxu0 %v306
    %1942 = vmatprep.subr.mxu0 %v313
    %1943 = vmatpush1.xpose.msra.mxu0 %v312
    %1944 = vmatprep.subr.mxu0 %v319
    %1945 = vmatpush1.xpose.msra.mxu0 %v318
    %1946 = vmatprep.subr.mxu0 %v325
    %1947 = vmatpush1.xpose.msra.mxu0 %v324
    %1948 = vmatprep.subr.mxu0 %v331
    %1949 = vmatpush1.xpose.msra.mxu0 %v330
    %1950 = vmatprep.subr.mxu0 %v337
    %1951 = vmatpush1.xpose.msra.mxu0 %v336
    %1952 = vmatprep.subr.mxu0 %v343
    %1953 = vmatpush1.xpose.msra.mxu0 %v342
    %1954 = vmatprep.subr.mxu0 %v349
    %1955 = vmatpush1.xpose.msra.mxu0 %v348
    %1956 = vmatprep.subr.mxu0 %v355
    %1957 = vmatpush1.xpose.msra.mxu0 %v354
    %1958 = vmatprep.subr.mxu0 %v361
    %1959 = vmatpush1.xpose.msra.mxu0 %v360
    %1960 = vmatprep.subr.mxu0 %v367
    %1961 = vmatpush1.xpose.msra.mxu0 %v366
    %1962 = vmatprep.subr.mxu0 %v373
    %1963 = vmatpush1.xpose.msra.mxu0 %v372
    %1964 = vmatprep.subr.mxu0 %v379
    %1965 = vmatpush1.xpose.msra.mxu0 %v378
    %1966 = vmatprep.subr.mxu0 %v385
    %1967 = vmatpush1.xpose.msra.mxu0 %v384
    %1968 = vmatprep.subr.mxu0 %v391
    %1969 = vmatpush1.xpose.msra.mxu0 %v390
    %1970 = vmatprep.subr.mxu0 %v397
    %1971 = vmatpush1.xpose.msra.mxu0 %v396
    %1972 = vmatprep.subr.mxu0 %v403
    %1973 = vmatpush1.xpose.msra.mxu0 %v402
    %1974 = vmatprep.subr.mxu0 %v409
    %1975 = vmatpush1.xpose.msra.mxu0 %v408
    %1976 = vmatprep.subr.mxu0 %v415
    %1977 = vmatpush1.xpose.msra.mxu0 %v414
    %1978 = vmatprep.subr.mxu0 %v421
    %1979 = vmatpush1.xpose.msra.mxu0 %v420
    %1980 = vmatprep.subr.mxu0 %v427
    %1981 = vmatpush1.xpose.msra.mxu0 %v426
    %1982 = vmatprep.subr.mxu0 %v433
    %1983 = vmatpush1.xpose.msra.mxu0 %v432
    %1984 = vmatprep.mubr.f32.mxu0 %v1691
    %1985 = vmatmul.mubr.f32.gmra.mrb[0].mxu0 %v1683
    %v1986 = vpop.f32.mrb[0].mxu0
    %v1987 = vadd.f32 %v1605, %v1986
    %v1988 = vpop.f32.mrb[0].mxu0
    %v1989 = vadd.f32 %v1609, %v1988
    %1990 = vdwg.mxu0
    %1991 = vmatprep.subr.mxu0 %v249
    %1992 = vmatpush1.xpose.msra.mxu0 %v248
    %1993 = vmatprep.subr.mxu0 %v255
    %1994 = vmatpush1.xpose.msra.mxu0 %v254
    %1995 = vmatprep.subr.mxu0 %v261
    %1996 = vmatpush1.xpose.msra.mxu0 %v260
    %1997 = vmatprep.subr.mxu0 %v267
    %1998 = vmatpush1.xpose.msra.mxu0 %v266
    %1999 = vmatprep.subr.mxu0 %v273
    %2000 = vmatpush1.xpose.msra.mxu0 %v272
    %2001 = vmatprep.subr.mxu0 %v279
    %2002 = vmatpush1.xpose.msra.mxu0 %v278
    %2003 = vmatprep.subr.mxu0 %v285
    %2004 = vmatpush1.xpose.msra.mxu0 %v284
    %2005 = vmatprep.subr.mxu0 %v291
    %2006 = vmatpush1.xpose.msra.mxu0 %v290
    %2007 = vmatprep.subr.mxu0 %v297
    %2008 = vmatpush1.xpose.msra.mxu0 %v296
    %2009 = vmatprep.subr.mxu0 %v303
    %2010 = vmatpush1.xpose.msra.mxu0 %v302
    %2011 = vmatprep.subr.mxu0 %v309
    %2012 = vmatpush1.xpose.msra.mxu0 %v308
    %2013 = vmatprep.subr.mxu0 %v315
    %2014 = vmatpush1.xpose.msra.mxu0 %v314
    %2015 = vmatprep.subr.mxu0 %v321
    %2016 = vmatpush1.xpose.msra.mxu0 %v320
    %2017 = vmatprep.subr.mxu0 %v327
    %2018 = vmatpush1.xpose.msra.mxu0 %v326
    %2019 = vmatprep.subr.mxu0 %v333
    %2020 = vmatpush1.xpose.msra.mxu0 %v332
    %2021 = vmatprep.subr.mxu0 %v339
    %2022 = vmatpush1.xpose.msra.mxu0 %v338
    %2023 = vmatprep.subr.mxu0 %v345
    %2024 = vmatpush1.xpose.msra.mxu0 %v344
    %2025 = vmatprep.subr.mxu0 %v351
    %2026 = vmatpush1.xpose.msra.mxu0 %v350
    %2027 = vmatprep.subr.mxu0 %v357
    %2028 = vmatpush1.xpose.msra.mxu0 %v356
    %2029 = vmatprep.subr.mxu0 %v363
    %2030 = vmatpush1.xpose.msra.mxu0 %v362
    %2031 = vmatprep.subr.mxu0 %v369
    %2032 = vmatpush1.xpose.msra.mxu0 %v368
    %2033 = vmatprep.subr.mxu0 %v375
    %2034 = vmatpush1.xpose.msra.mxu0 %v374
    %2035 = vmatprep.subr.mxu0 %v381
    %2036 = vmatpush1.xpose.msra.mxu0 %v380
    %2037 = vmatprep.subr.mxu0 %v387
    %2038 = vmatpush1.xpose.msra.mxu0 %v386
    %2039 = vmatprep.subr.mxu0 %v393
    %2040 = vmatpush1.xpose.msra.mxu0 %v392
    %2041 = vmatprep.subr.mxu0 %v399
    %2042 = vmatpush1.xpose.msra.mxu0 %v398
    %2043 = vmatprep.subr.mxu0 %v405
    %2044 = vmatpush1.xpose.msra.mxu0 %v404
    %2045 = vmatprep.subr.mxu0 %v411
    %2046 = vmatpush1.xpose.msra.mxu0 %v410
    %2047 = vmatprep.subr.mxu0 %v417
    %2048 = vmatpush1.xpose.msra.mxu0 %v416
    %2049 = vmatprep.subr.mxu0 %v423
    %2050 = vmatpush1.xpose.msra.mxu0 %v422
    %2051 = vmatprep.subr.mxu0 %v429
    %2052 = vmatpush1.xpose.msra.mxu0 %v428
    %2053 = vmatprep.subr.mxu0 %v435
    %2054 = vmatpush1.xpose.msra.mxu0 %v434
    %2055 = vmatprep.mubr.f32.mxu0 %v1692
    %2056 = vmatmul.mubr.f32.gmra.mrb[0].mxu0 %v1690
    %v2057 = vpop.f32.mrb[0].mxu0
    %v2058 = vadd.f32 %v1987, %v2057
    %v2059 = vpop.f32.mrb[0].mxu0
    %v2060 = vadd.f32 %v1989, %v2059
    %2061 = vdwg.mxu0
    %2062 = vmatprep.subr.mxu0 %v251
    %2063 = vmatpush1.xpose.msra.mxu0 %v250
    %2064 = vmatprep.subr.mxu0 %v257
    %2065 = vmatpush1.xpose.msra.mxu0 %v256
    %2066 = vmatprep.subr.mxu0 %v263
    %2067 = vmatpush1.xpose.msra.mxu0 %v262
    %2068 = vmatprep.subr.mxu0 %v269
    %2069 = vmatpush1.xpose.msra.mxu0 %v268
    %2070 = vmatprep.subr.mxu0 %v275
    %2071 = vmatpush1.xpose.msra.mxu0 %v274
    %2072 = vmatprep.subr.mxu0 %v281
    %2073 = vmatpush1.xpose.msra.mxu0 %v280
    %2074 = vmatprep.subr.mxu0 %v287
    %2075 = vmatpush1.xpose.msra.mxu0 %v286
    %2076 = vmatprep.subr.mxu0 %v293
    %2077 = vmatpush1.xpose.msra.mxu0 %v292
    %2078 = vmatprep.subr.mxu0 %v299
    %2079 = vmatpush1.xpose.msra.mxu0 %v298
    %2080 = vmatprep.subr.mxu0 %v305
    %2081 = vmatpush1.xpose.msra.mxu0 %v304
    %2082 = vmatprep.subr.mxu0 %v311
    %2083 = vmatpush1.xpose.msra.mxu0 %v310
    %2084 = vmatprep.subr.mxu0 %v317
    %2085 = vmatpush1.xpose.msra.mxu0 %v316
    %2086 = vmatprep.subr.mxu0 %v323
    %2087 = vmatpush1.xpose.msra.mxu0 %v322
    %2088 = vmatprep.subr.mxu0 %v329
    %2089 = vmatpush1.xpose.msra.mxu0 %v328
    %2090 = vmatprep.subr.mxu0 %v335
    %2091 = vmatpush1.xpose.msra.mxu0 %v334
    %2092 = vmatprep.subr.mxu0 %v341
    %2093 = vmatpush1.xpose.msra.mxu0 %v340
    %2094 = vmatprep.subr.mxu0 %v347
    %2095 = vmatpush1.xpose.msra.mxu0 %v346
    %2096 = vmatprep.subr.mxu0 %v353
    %2097 = vmatpush1.xpose.msra.mxu0 %v352
    %2098 = vmatprep.subr.mxu0 %v359
    %2099 = vmatpush1.xpose.msra.mxu0 %v358
    %2100 = vmatprep.subr.mxu0 %v365
    %2101 = vmatpush1.xpose.msra.mxu0 %v364
    %2102 = vmatprep.subr.mxu0 %v371
    %2103 = vmatpush1.xpose.msra.mxu0 %v370
    %2104 = vmatprep.subr.mxu0 %v377
    %2105 = vmatpush1.xpose.msra.mxu0 %v376
    %2106 = vmatprep.subr.mxu0 %v383
    %2107 = vmatpush1.xpose.msra.mxu0 %v382
    %2108 = vmatprep.subr.mxu0 %v389
    %2109 = vmatpush1.xpose.msra.mxu0 %v388
    %2110 = vmatprep.subr.mxu0 %v395
    %2111 = vmatpush1.xpose.msra.mxu0 %v394
    %2112 = vmatprep.subr.mxu0 %v401
    %2113 = vmatpush1.xpose.msra.mxu0 %v400
    %2114 = vmatprep.subr.mxu0 %v407
    %2115 = vmatpush1.xpose.msra.mxu0 %v406
    %2116 = vmatprep.subr.mxu0 %v413
    %2117 = vmatpush1.xpose.msra.mxu0 %v412
    %2118 = vmatprep.subr.mxu0 %v419
    %2119 = vmatpush1.xpose.msra.mxu0 %v418
    %2120 = vmatprep.subr.mxu0 %v425
    %2121 = vmatpush1.xpose.msra.mxu0 %v424
    %2122 = vmatprep.subr.mxu0 %v431
    %2123 = vmatpush1.xpose.msra.mxu0 %v430
    %2124 = vmatprep.subr.mxu0 %v437
    %2125 = vmatpush1.xpose.msra.mxu0 %v436
    %2126 = vmatprep.mubr.f32.mxu0 %v1700
    %2127 = vmatmul.mubr.f32.gmra.mrb[0].mxu0 %v1699
    %v2128 = vpop.f32.mrb[0].mxu0
    %v2129 = vadd.f32 %v2058, %v2128
    %v2130 = vpop.f32.mrb[0].mxu0
    %v2131 = vadd.f32 %v2060, %v2130
    %2132 = vdwg.mxu0
    %2133 = vmatprep.subr.mxu0 %v439
    %2134 = vmatpush1.xpose.msra.mxu0 %v438
    %2135 = vmatprep.subr.mxu0 %v445
    %2136 = vmatpush1.xpose.msra.mxu0 %v444
    %2137 = vmatprep.subr.mxu0 %v451
    %2138 = vmatpush1.xpose.msra.mxu0 %v450
    %2139 = vmatprep.subr.mxu0 %v457
    %2140 = vmatpush1.xpose.msra.mxu0 %v456
    %2141 = vmatprep.subr.mxu0 %v463
    %2142 = vmatpush1.xpose.msra.mxu0 %v462
    %2143 = vmatprep.subr.mxu0 %v469
    %2144 = vmatpush1.xpose.msra.mxu0 %v468
    %2145 = vmatprep.subr.mxu0 %v475
    %2146 = vmatpush1.xpose.msra.mxu0 %v474
    %2147 = vmatprep.subr.mxu0 %v481
    %2148 = vmatpush1.xpose.msra.mxu0 %v480
    %2149 = vmatprep.subr.mxu0 %v487
    %2150 = vmatpush1.xpose.msra.mxu0 %v486
    %2151 = vmatprep.subr.mxu0 %v493
    %2152 = vmatpush1.xpose.msra.mxu0 %v492
    %2153 = vmatprep.subr.mxu0 %v499
    %2154 = vmatpush1.xpose.msra.mxu0 %v498
    %2155 = vmatprep.subr.mxu0 %v505
    %2156 = vmatpush1.xpose.msra.mxu0 %v504
    %2157 = vmatprep.subr.mxu0 %v511
    %2158 = vmatpush1.xpose.msra.mxu0 %v510
    %2159 = vmatprep.subr.mxu0 %v517
    %2160 = vmatpush1.xpose.msra.mxu0 %v516
    %2161 = vmatprep.subr.mxu0 %v523
    %2162 = vmatpush1.xpose.msra.mxu0 %v522
    %2163 = vmatprep.subr.mxu0 %v529
    %2164 = vmatpush1.xpose.msra.mxu0 %v528
    %2165 = vmatprep.subr.mxu0 %v535
    %2166 = vmatpush1.xpose.msra.mxu0 %v534
    %2167 = vmatprep.subr.mxu0 %v541
    %2168 = vmatpush1.xpose.msra.mxu0 %v540
    %2169 = vmatprep.subr.mxu0 %v547
    %2170 = vmatpush1.xpose.msra.mxu0 %v546
    %2171 = vmatprep.subr.mxu0 %v553
    %2172 = vmatpush1.xpose.msra.mxu0 %v552
    %2173 = vmatprep.subr.mxu0 %v559
    %2174 = vmatpush1.xpose.msra.mxu0 %v558
    %2175 = vmatprep.subr.mxu0 %v565
    %2176 = vmatpush1.xpose.msra.mxu0 %v564
    %2177 = vmatprep.subr.mxu0 %v571
    %2178 = vmatpush1.xpose.msra.mxu0 %v570
    %2179 = vmatprep.subr.mxu0 %v577
    %2180 = vmatpush1.xpose.msra.mxu0 %v576
    %2181 = vmatprep.subr.mxu0 %v583
    %2182 = vmatpush1.xpose.msra.mxu0 %v582
    %2183 = vmatprep.subr.mxu0 %v589
    %2184 = vmatpush1.xpose.msra.mxu0 %v588
    %2185 = vmatprep.subr.mxu0 %v595
    %2186 = vmatpush1.xpose.msra.mxu0 %v594
    %2187 = vmatprep.subr.mxu0 %v601
    %2188 = vmatpush1.xpose.msra.mxu0 %v600
    %2189 = vmatprep.subr.mxu0 %v607
    %2190 = vmatpush1.xpose.msra.mxu0 %v606
    %2191 = vmatprep.subr.mxu0 %v613
    %2192 = vmatpush1.xpose.msra.mxu0 %v612
    %2193 = vmatprep.subr.mxu0 %v619
    %2194 = vmatpush1.xpose.msra.mxu0 %v618
    %2195 = vmatprep.subr.mxu0 %v625
    %2196 = vmatpush1.xpose.msra.mxu0 %v624
    %2197 = vmatprep.mubr.f32.mxu0 %v1691
    %2198 = vmatmul.mubr.f32.gmra.mrb[0].mxu0 %v1683
    %v2199 = vpop.f32.mrb[0].mxu0
    %v2200 = vadd.f32 %v1613, %v2199
    %v2201 = vpop.f32.mrb[0].mxu0
    %v2202 = vadd.f32 %v1617, %v2201
    %2203 = vdwg.mxu0
    %2204 = vmatprep.subr.mxu0 %v441
    %2205 = vmatpush1.xpose.msra.mxu0 %v440
    %2206 = vmatprep.subr.mxu0 %v447
    %2207 = vmatpush1.xpose.msra.mxu0 %v446
    %2208 = vmatprep.subr.mxu0 %v453
    %2209 = vmatpush1.xpose.msra.mxu0 %v452
    %2210 = vmatprep.subr.mxu0 %v459
    %2211 = vmatpush1.xpose.msra.mxu0 %v458
    %2212 = vmatprep.subr.mxu0 %v465
    %2213 = vmatpush1.xpose.msra.mxu0 %v464
    %2214 = vmatprep.subr.mxu0 %v471
    %2215 = vmatpush1.xpose.msra.mxu0 %v470
    %2216 = vmatprep.subr.mxu0 %v477
    %2217 = vmatpush1.xpose.msra.mxu0 %v476
    %2218 = vmatprep.subr.mxu0 %v483
    %2219 = vmatpush1.xpose.msra.mxu0 %v482
    %2220 = vmatprep.subr.mxu0 %v489
    %2221 = vmatpush1.xpose.msra.mxu0 %v488
    %2222 = vmatprep.subr.mxu0 %v495
    %2223 = vmatpush1.xpose.msra.mxu0 %v494
    %2224 = vmatprep.subr.mxu0 %v501
    %2225 = vmatpush1.xpose.msra.mxu0 %v500
    %2226 = vmatprep.subr.mxu0 %v507
    %2227 = vmatpush1.xpose.msra.mxu0 %v506
    %2228 = vmatprep.subr.mxu0 %v513
    %2229 = vmatpush1.xpose.msra.mxu0 %v512
    %2230 = vmatprep.subr.mxu0 %v519
    %2231 = vmatpush1.xpose.msra.mxu0 %v518
    %2232 = vmatprep.subr.mxu0 %v525
    %2233 = vmatpush1.xpose.msra.mxu0 %v524
    %2234 = vmatprep.subr.mxu0 %v531
    %2235 = vmatpush1.xpose.msra.mxu0 %v530
    %2236 = vmatprep.subr.mxu0 %v537
    %2237 = vmatpush1.xpose.msra.mxu0 %v536
    %2238 = vmatprep.subr.mxu0 %v543
    %2239 = vmatpush1.xpose.msra.mxu0 %v542
    %2240 = vmatprep.subr.mxu0 %v549
    %2241 = vmatpush1.xpose.msra.mxu0 %v548
    %2242 = vmatprep.subr.mxu0 %v555
    %2243 = vmatpush1.xpose.msra.mxu0 %v554
    %2244 = vmatprep.subr.mxu0 %v561
    %2245 = vmatpush1.xpose.msra.mxu0 %v560
    %2246 = vmatprep.subr.mxu0 %v567
    %2247 = vmatpush1.xpose.msra.mxu0 %v566
    %2248 = vmatprep.subr.mxu0 %v573
    %2249 = vmatpush1.xpose.msra.mxu0 %v572
    %2250 = vmatprep.subr.mxu0 %v579
    %2251 = vmatpush1.xpose.msra.mxu0 %v578
    %2252 = vmatprep.subr.mxu0 %v585
    %2253 = vmatpush1.xpose.msra.mxu0 %v584
    %2254 = vmatprep.subr.mxu0 %v591
    %2255 = vmatpush1.xpose.msra.mxu0 %v590
    %2256 = vmatprep.subr.mxu0 %v597
    %2257 = vmatpush1.xpose.msra.mxu0 %v596
    %2258 = vmatprep.subr.mxu0 %v603
    %2259 = vmatpush1.xpose.msra.mxu0 %v602
    %2260 = vmatprep.subr.mxu0 %v609
    %2261 = vmatpush1.xpose.msra.mxu0 %v608
    %2262 = vmatprep.subr.mxu0 %v615
    %2263 = vmatpush1.xpose.msra.mxu0 %v614
    %2264 = vmatprep.subr.mxu0 %v621
    %2265 = vmatpush1.xpose.msra.mxu0 %v620
    %2266 = vmatprep.subr.mxu0 %v627
    %2267 = vmatpush1.xpose.msra.mxu0 %v626
    %2268 = vmatprep.mubr.f32.mxu0 %v1692
    %2269 = vmatmul.mubr.f32.gmra.mrb[0].mxu0 %v1690
    %v2270 = vpop.f32.mrb[0].mxu0
    %v2271 = vadd.f32 %v2200, %v2270
    %v2272 = vpop.f32.mrb[0].mxu0
    %v2273 = vadd.f32 %v2202, %v2272
    %2274 = vdwg.mxu0
    %2275 = vmatprep.subr.mxu0 %v443
    %2276 = vmatpush1.xpose.msra.mxu0 %v442
    %2277 = vmatprep.subr.mxu0 %v449
    %2278 = vmatpush1.xpose.msra.mxu0 %v448
    %2279 = vmatprep.subr.mxu0 %v455
    %2280 = vmatpush1.xpose.msra.mxu0 %v454
    %2281 = vmatprep.subr.mxu0 %v461
    %2282 = vmatpush1.xpose.msra.mxu0 %v460
    %2283 = vmatprep.subr.mxu0 %v467
    %2284 = vmatpush1.xpose.msra.mxu0 %v466
    %2285 = vmatprep.subr.mxu0 %v473
    %2286 = vmatpush1.xpose.msra.mxu0 %v472
    %2287 = vmatprep.subr.mxu0 %v479
    %2288 = vmatpush1.xpose.msra.mxu0 %v478
    %2289 = vmatprep.subr.mxu0 %v485
    %2290 = vmatpush1.xpose.msra.mxu0 %v484
    %2291 = vmatprep.subr.mxu0 %v491
    %2292 = vmatpush1.xpose.msra.mxu0 %v490
    %2293 = vmatprep.subr.mxu0 %v497
    %2294 = vmatpush1.xpose.msra.mxu0 %v496
    %2295 = vmatprep.subr.mxu0 %v503
    %2296 = vmatpush1.xpose.msra.mxu0 %v502
    %2297 = vmatprep.subr.mxu0 %v509
    %2298 = vmatpush1.xpose.msra.mxu0 %v508
    %2299 = vmatprep.subr.mxu0 %v515
    %2300 = vmatpush1.xpose.msra.mxu0 %v514
    %2301 = vmatprep.subr.mxu0 %v521
    %2302 = vmatpush1.xpose.msra.mxu0 %v520
    %2303 = vmatprep.subr.mxu0 %v527
    %2304 = vmatpush1.xpose.msra.mxu0 %v526
    %2305 = vmatprep.subr.mxu0 %v533
    %2306 = vmatpush1.xpose.msra.mxu0 %v532
    %2307 = vmatprep.subr.mxu0 %v539
    %2308 = vmatpush1.xpose.msra.mxu0 %v538
    %2309 = vmatprep.subr.mxu0 %v545
    %2310 = vmatpush1.xpose.msra.mxu0 %v544
    %2311 = vmatprep.subr.mxu0 %v551
    %2312 = vmatpush1.xpose.msra.mxu0 %v550
    %2313 = vmatprep.subr.mxu0 %v557
    %2314 = vmatpush1.xpose.msra.mxu0 %v556
    %2315 = vmatprep.subr.mxu0 %v563
    %2316 = vmatpush1.xpose.msra.mxu0 %v562
    %2317 = vmatprep.subr.mxu0 %v569
    %2318 = vmatpush1.xpose.msra.mxu0 %v568
    %2319 = vmatprep.subr.mxu0 %v575
    %2320 = vmatpush1.xpose.msra.mxu0 %v574
    %2321 = vmatprep.subr.mxu0 %v581
    %2322 = vmatpush1.xpose.msra.mxu0 %v580
    %2323 = vmatprep.subr.mxu0 %v587
    %2324 = vmatpush1.xpose.msra.mxu0 %v586
    %2325 = vmatprep.subr.mxu0 %v593
    %2326 = vmatpush1.xpose.msra.mxu0 %v592
    %2327 = vmatprep.subr.mxu0 %v599
    %2328 = vmatpush1.xpose.msra.mxu0 %v598
    %2329 = vmatprep.subr.mxu0 %v605
    %2330 = vmatpush1.xpose.msra.mxu0 %v604
    %2331 = vmatprep.subr.mxu0 %v611
    %2332 = vmatpush1.xpose.msra.mxu0 %v610
    %2333 = vmatprep.subr.mxu0 %v617
    %2334 = vmatpush1.xpose.msra.mxu0 %v616
    %2335 = vmatprep.subr.mxu0 %v623
    %2336 = vmatpush1.xpose.msra.mxu0 %v622
    %2337 = vmatprep.subr.mxu0 %v629
    %2338 = vmatpush1.xpose.msra.mxu0 %v628
    %2339 = vmatprep.mubr.f32.mxu0 %v1700
    %2340 = vmatmul.mubr.f32.gmra.mrb[0].mxu0 %v1699
    %v2341 = vpop.f32.mrb[0].mxu0
    %v2342 = vadd.f32 %v2271, %v2341
    %v2343 = vpop.f32.mrb[0].mxu0
    %v2344 = vadd.f32 %v2273, %v2343
    %2345 = vdwg.mxu0
    %2346 = vmatprep.subr.mxu0 %v631
    %2347 = vmatpush1.xpose.msra.mxu0 %v630
    %2348 = vmatprep.subr.mxu0 %v637
    %2349 = vmatpush1.xpose.msra.mxu0 %v636
    %2350 = vmatprep.subr.mxu0 %v643
    %2351 = vmatpush1.xpose.msra.mxu0 %v642
    %2352 = vmatprep.subr.mxu0 %v649
    %2353 = vmatpush1.xpose.msra.mxu0 %v648
    %2354 = vmatprep.subr.mxu0 %v655
    %2355 = vmatpush1.xpose.msra.mxu0 %v654
    %2356 = vmatprep.subr.mxu0 %v661
    %2357 = vmatpush1.xpose.msra.mxu0 %v660
    %2358 = vmatprep.subr.mxu0 %v667
    %2359 = vmatpush1.xpose.msra.mxu0 %v666
    %2360 = vmatprep.subr.mxu0 %v673
    %2361 = vmatpush1.xpose.msra.mxu0 %v672
    %2362 = vmatprep.subr.mxu0 %v679
    %2363 = vmatpush1.xpose.msra.mxu0 %v678
    %2364 = vmatprep.subr.mxu0 %v685
    %2365 = vmatpush1.xpose.msra.mxu0 %v684
    %2366 = vmatprep.subr.mxu0 %v691
    %2367 = vmatpush1.xpose.msra.mxu0 %v690
    %2368 = vmatprep.subr.mxu0 %v697
    %2369 = vmatpush1.xpose.msra.mxu0 %v696
    %2370 = vmatprep.subr.mxu0 %v703
    %2371 = vmatpush1.xpose.msra.mxu0 %v702
    %2372 = vmatprep.subr.mxu0 %v709
    %2373 = vmatpush1.xpose.msra.mxu0 %v708
    %2374 = vmatprep.subr.mxu0 %v715
    %2375 = vmatpush1.xpose.msra.mxu0 %v714
    %2376 = vmatprep.subr.mxu0 %v721
    %2377 = vmatpush1.xpose.msra.mxu0 %v720
    %2378 = vmatprep.subr.mxu0 %v727
    %2379 = vmatpush1.xpose.msra.mxu0 %v726
    %2380 = vmatprep.subr.mxu0 %v733
    %2381 = vmatpush1.xpose.msra.mxu0 %v732
    %2382 = vmatprep.subr.mxu0 %v739
    %2383 = vmatpush1.xpose.msra.mxu0 %v738
    %2384 = vmatprep.subr.mxu0 %v745
    %2385 = vmatpush1.xpose.msra.mxu0 %v744
    %2386 = vmatprep.subr.mxu0 %v751
    %2387 = vmatpush1.xpose.msra.mxu0 %v750
    %2388 = vmatprep.subr.mxu0 %v757
    %2389 = vmatpush1.xpose.msra.mxu0 %v756
    %2390 = vmatprep.subr.mxu0 %v763
    %2391 = vmatpush1.xpose.msra.mxu0 %v762
    %2392 = vmatprep.subr.mxu0 %v769
    %2393 = vmatpush1.xpose.msra.mxu0 %v768
    %2394 = vmatprep.subr.mxu0 %v775
    %2395 = vmatpush1.xpose.msra.mxu0 %v774
    %2396 = vmatprep.subr.mxu0 %v781
    %2397 = vmatpush1.xpose.msra.mxu0 %v780
    %2398 = vmatprep.subr.mxu0 %v787
    %2399 = vmatpush1.xpose.msra.mxu0 %v786
    %2400 = vmatprep.subr.mxu0 %v793
    %2401 = vmatpush1.xpose.msra.mxu0 %v792
    %2402 = vmatprep.subr.mxu0 %v799
    %2403 = vmatpush1.xpose.msra.mxu0 %v798
    %2404 = vmatprep.subr.mxu0 %v805
    %2405 = vmatpush1.xpose.msra.mxu0 %v804
    %2406 = vmatprep.subr.mxu0 %v811
    %2407 = vmatpush1.xpose.msra.mxu0 %v810
    %2408 = vmatprep.subr.mxu0 %v817
    %2409 = vmatpush1.xpose.msra.mxu0 %v816
    %2410 = vmatprep.mubr.f32.mxu0 %v1691
    %2411 = vmatmul.mubr.f32.gmra.mrb[0].mxu0 %v1683
    %v2412 = vpop.f32.mrb[0].mxu0
    %v2413 = vadd.f32 %v1621, %v2412
    %v2414 = vpop.f32.mrb[0].mxu0
    %v2415 = vadd.f32 %v1625, %v2414
    %2416 = vdwg.mxu0
    %2417 = vmatprep.subr.mxu0 %v633
    %2418 = vmatpush1.xpose.msra.mxu0 %v632
    %2419 = vmatprep.subr.mxu0 %v639
    %2420 = vmatpush1.xpose.msra.mxu0 %v638
    %2421 = vmatprep.subr.mxu0 %v645
    %2422 = vmatpush1.xpose.msra.mxu0 %v644
    %2423 = vmatprep.subr.mxu0 %v651
    %2424 = vmatpush1.xpose.msra.mxu0 %v650
    %2425 = vmatprep.subr.mxu0 %v657
    %2426 = vmatpush1.xpose.msra.mxu0 %v656
    %2427 = vmatprep.subr.mxu0 %v663
    %2428 = vmatpush1.xpose.msra.mxu0 %v662
    %2429 = vmatprep.subr.mxu0 %v669
    %2430 = vmatpush1.xpose.msra.mxu0 %v668
    %2431 = vmatprep.subr.mxu0 %v675
    %2432 = vmatpush1.xpose.msra.mxu0 %v674
    %2433 = vmatprep.subr.mxu0 %v681
    %2434 = vmatpush1.xpose.msra.mxu0 %v680
    %2435 = vmatprep.subr.mxu0 %v687
    %2436 = vmatpush1.xpose.msra.mxu0 %v686
    %2437 = vmatprep.subr.mxu0 %v693
    %2438 = vmatpush1.xpose.msra.mxu0 %v692
    %2439 = vmatprep.subr.mxu0 %v699
    %2440 = vmatpush1.xpose.msra.mxu0 %v698
    %2441 = vmatprep.subr.mxu0 %v705
    %2442 = vmatpush1.xpose.msra.mxu0 %v704
    %2443 = vmatprep.subr.mxu0 %v711
    %2444 = vmatpush1.xpose.msra.mxu0 %v710
    %2445 = vmatprep.subr.mxu0 %v717
    %2446 = vmatpush1.xpose.msra.mxu0 %v716
    %2447 = vmatprep.subr.mxu0 %v723
    %2448 = vmatpush1.xpose.msra.mxu0 %v722
    %2449 = vmatprep.subr.mxu0 %v729
    %2450 = vmatpush1.xpose.msra.mxu0 %v728
    %2451 = vmatprep.subr.mxu0 %v735
    %2452 = vmatpush1.xpose.msra.mxu0 %v734
    %2453 = vmatprep.subr.mxu0 %v741
    %2454 = vmatpush1.xpose.msra.mxu0 %v740
    %2455 = vmatprep.subr.mxu0 %v747
    %2456 = vmatpush1.xpose.msra.mxu0 %v746
    %2457 = vmatprep.subr.mxu0 %v753
    %2458 = vmatpush1.xpose.msra.mxu0 %v752
    %2459 = vmatprep.subr.mxu0 %v759
    %2460 = vmatpush1.xpose.msra.mxu0 %v758
    %2461 = vmatprep.subr.mxu0 %v765
    %2462 = vmatpush1.xpose.msra.mxu0 %v764
    %2463 = vmatprep.subr.mxu0 %v771
    %2464 = vmatpush1.xpose.msra.mxu0 %v770
    %2465 = vmatprep.subr.mxu0 %v777
    %2466 = vmatpush1.xpose.msra.mxu0 %v776
    %2467 = vmatprep.subr.mxu0 %v783
    %2468 = vmatpush1.xpose.msra.mxu0 %v782
    %2469 = vmatprep.subr.mxu0 %v789
    %2470 = vmatpush1.xpose.msra.mxu0 %v788
    %2471 = vmatprep.subr.mxu0 %v795
    %2472 = vmatpush1.xpose.msra.mxu0 %v794
    %2473 = vmatprep.subr.mxu0 %v801
    %2474 = vmatpush1.xpose.msra.mxu0 %v800
    %2475 = vmatprep.subr.mxu0 %v807
    %2476 = vmatpush1.xpose.msra.mxu0 %v806
    %2477 = vmatprep.subr.mxu0 %v813
    %2478 = vmatpush1.xpose.msra.mxu0 %v812
    %2479 = vmatprep.subr.mxu0 %v819
    %2480 = vmatpush1.xpose.msra.mxu0 %v818
    %2481 = vmatprep.mubr.f32.mxu0 %v1692
    %2482 = vmatmul.mubr.f32.gmra.mrb[0].mxu0 %v1690
    %v2483 = vpop.f32.mrb[0].mxu0
    %v2484 = vadd.f32 %v2413, %v2483
    %v2485 = vpop.f32.mrb[0].mxu0
    %v2486 = vadd.f32 %v2415, %v2485
    %2487 = vdwg.mxu0
    %2488 = vmatprep.subr.mxu0 %v635
    %2489 = vmatpush1.xpose.msra.mxu0 %v634
    %2490 = vmatprep.subr.mxu0 %v641
    %2491 = vmatpush1.xpose.msra.mxu0 %v640
    %2492 = vmatprep.subr.mxu0 %v647
    %2493 = vmatpush1.xpose.msra.mxu0 %v646
    %2494 = vmatprep.subr.mxu0 %v653
    %2495 = vmatpush1.xpose.msra.mxu0 %v652
    %2496 = vmatprep.subr.mxu0 %v659
    %2497 = vmatpush1.xpose.msra.mxu0 %v658
    %2498 = vmatprep.subr.mxu0 %v665
    %2499 = vmatpush1.xpose.msra.mxu0 %v664
    %2500 = vmatprep.subr.mxu0 %v671
    %2501 = vmatpush1.xpose.msra.mxu0 %v670
    %2502 = vmatprep.subr.mxu0 %v677
    %2503 = vmatpush1.xpose.msra.mxu0 %v676
    %2504 = vmatprep.subr.mxu0 %v683
    %2505 = vmatpush1.xpose.msra.mxu0 %v682
    %2506 = vmatprep.subr.mxu0 %v689
    %2507 = vmatpush1.xpose.msra.mxu0 %v688
    %2508 = vmatprep.subr.mxu0 %v695
    %2509 = vmatpush1.xpose.msra.mxu0 %v694
    %2510 = vmatprep.subr.mxu0 %v701
    %2511 = vmatpush1.xpose.msra.mxu0 %v700
    %2512 = vmatprep.subr.mxu0 %v707
    %2513 = vmatpush1.xpose.msra.mxu0 %v706
    %2514 = vmatprep.subr.mxu0 %v713
    %2515 = vmatpush1.xpose.msra.mxu0 %v712
    %2516 = vmatprep.subr.mxu0 %v719
    %2517 = vmatpush1.xpose.msra.mxu0 %v718
    %2518 = vmatprep.subr.mxu0 %v725
    %2519 = vmatpush1.xpose.msra.mxu0 %v724
    %2520 = vmatprep.subr.mxu0 %v731
    %2521 = vmatpush1.xpose.msra.mxu0 %v730
    %2522 = vmatprep.subr.mxu0 %v737
    %2523 = vmatpush1.xpose.msra.mxu0 %v736
    %2524 = vmatprep.subr.mxu0 %v743
    %2525 = vmatpush1.xpose.msra.mxu0 %v742
    %2526 = vmatprep.subr.mxu0 %v749
    %2527 = vmatpush1.xpose.msra.mxu0 %v748
    %2528 = vmatprep.subr.mxu0 %v755
    %2529 = vmatpush1.xpose.msra.mxu0 %v754
    %2530 = vmatprep.subr.mxu0 %v761
    %2531 = vmatpush1.xpose.msra.mxu0 %v760
    %2532 = vmatprep.subr.mxu0 %v767
    %2533 = vmatpush1.xpose.msra.mxu0 %v766
    %2534 = vmatprep.subr.mxu0 %v773
    %2535 = vmatpush1.xpose.msra.mxu0 %v772
    %2536 = vmatprep.subr.mxu0 %v779
    %2537 = vmatpush1.xpose.msra.mxu0 %v778
    %2538 = vmatprep.subr.mxu0 %v785
    %2539 = vmatpush1.xpose.msra.mxu0 %v784
    %2540 = vmatprep.subr.mxu0 %v791
    %2541 = vmatpush1.xpose.msra.mxu0 %v790
    %2542 = vmatprep.subr.mxu0 %v797
    %2543 = vmatpush1.xpose.msra.mxu0 %v796
    %2544 = vmatprep.subr.mxu0 %v803
    %2545 = vmatpush1.xpose.msra.mxu0 %v802
    %2546 = vmatprep.subr.mxu0 %v809
    %2547 = vmatpush1.xpose.msra.mxu0 %v808
    %2548 = vmatprep.subr.mxu0 %v815
    %2549 = vmatpush1.xpose.msra.mxu0 %v814
    %2550 = vmatprep.subr.mxu0 %v821
    %2551 = vmatpush1.xpose.msra.mxu0 %v820
    %2552 = vmatprep.mubr.f32.mxu0 %v1700
    %2553 = vmatmul.mubr.f32.gmra.mrb[0].mxu0 %v1699
    %v2554 = vpop.f32.mrb[0].mxu0
    %v2555 = vadd.f32 %v2484, %v2554
    %v2556 = vpop.f32.mrb[0].mxu0
    %v2557 = vadd.f32 %v2486, %v2556
    %2558 = vdwg.mxu0
    %2559 = vmatprep.subr.mxu0 %v823
    %2560 = vmatpush1.xpose.msra.mxu0 %v822
    %2561 = vmatprep.subr.mxu0 %v829
    %2562 = vmatpush1.xpose.msra.mxu0 %v828
    %2563 = vmatprep.subr.mxu0 %v835
    %2564 = vmatpush1.xpose.msra.mxu0 %v834
    %2565 = vmatprep.subr.mxu0 %v841
    %2566 = vmatpush1.xpose.msra.mxu0 %v840
    %2567 = vmatprep.subr.mxu0 %v847
    %2568 = vmatpush1.xpose.msra.mxu0 %v846
    %2569 = vmatprep.subr.mxu0 %v853
    %2570 = vmatpush1.xpose.msra.mxu0 %v852
    %2571 = vmatprep.subr.mxu0 %v859
    %2572 = vmatpush1.xpose.msra.mxu0 %v858
    %2573 = vmatprep.subr.mxu0 %v865
    %2574 = vmatpush1.xpose.msra.mxu0 %v864
    %2575 = vmatprep.subr.mxu0 %v871
    %2576 = vmatpush1.xpose.msra.mxu0 %v870
    %2577 = vmatprep.subr.mxu0 %v877
    %2578 = vmatpush1.xpose.msra.mxu0 %v876
    %2579 = vmatprep.subr.mxu0 %v883
    %2580 = vmatpush1.xpose.msra.mxu0 %v882
    %2581 = vmatprep.subr.mxu0 %v889
    %2582 = vmatpush1.xpose.msra.mxu0 %v888
    %2583 = vmatprep.subr.mxu0 %v895
    %2584 = vmatpush1.xpose.msra.mxu0 %v894
    %2585 = vmatprep.subr.mxu0 %v901
    %2586 = vmatpush1.xpose.msra.mxu0 %v900
    %2587 = vmatprep.subr.mxu0 %v907
    %2588 = vmatpush1.xpose.msra.mxu0 %v906
    %2589 = vmatprep.subr.mxu0 %v913
    %2590 = vmatpush1.xpose.msra.mxu0 %v912
    %2591 = vmatprep.subr.mxu0 %v919
    %2592 = vmatpush1.xpose.msra.mxu0 %v918
    %2593 = vmatprep.subr.mxu0 %v925
    %2594 = vmatpush1.xpose.msra.mxu0 %v924
    %2595 = vmatprep.subr.mxu0 %v931
    %2596 = vmatpush1.xpose.msra.mxu0 %v930
    %2597 = vmatprep.subr.mxu0 %v937
    %2598 = vmatpush1.xpose.msra.mxu0 %v936
    %2599 = vmatprep.subr.mxu0 %v943
    %2600 = vmatpush1.xpose.msra.mxu0 %v942
    %2601 = vmatprep.subr.mxu0 %v949
    %2602 = vmatpush1.xpose.msra.mxu0 %v948
    %2603 = vmatprep.subr.mxu0 %v955
    %2604 = vmatpush1.xpose.msra.mxu0 %v954
    %2605 = vmatprep.subr.mxu0 %v961
    %2606 = vmatpush1.xpose.msra.mxu0 %v960
    %2607 = vmatprep.subr.mxu0 %v967
    %2608 = vmatpush1.xpose.msra.mxu0 %v966
    %2609 = vmatprep.subr.mxu0 %v973
    %2610 = vmatpush1.xpose.msra.mxu0 %v972
    %2611 = vmatprep.subr.mxu0 %v979
    %2612 = vmatpush1.xpose.msra.mxu0 %v978
    %2613 = vmatprep.subr.mxu0 %v985
    %2614 = vmatpush1.xpose.msra.mxu0 %v984
    %2615 = vmatprep.subr.mxu0 %v991
    %2616 = vmatpush1.xpose.msra.mxu0 %v990
    %2617 = vmatprep.subr.mxu0 %v997
    %2618 = vmatpush1.xpose.msra.mxu0 %v996
    %2619 = vmatprep.subr.mxu0 %v1003
    %2620 = vmatpush1.xpose.msra.mxu0 %v1002
    %2621 = vmatprep.subr.mxu0 %v1009
    %2622 = vmatpush1.xpose.msra.mxu0 %v1008
    %2623 = vmatprep.mubr.f32.mxu0 %v1691
    %2624 = vmatmul.mubr.f32.gmra.mrb[0].mxu0 %v1683
    %v2625 = vpop.f32.mrb[0].mxu0
    %v2626 = vadd.f32 %v1629, %v2625
    %v2627 = vpop.f32.mrb[0].mxu0
    %v2628 = vadd.f32 %v1633, %v2627
    %2629 = vdwg.mxu0
    %2630 = vmatprep.subr.mxu0 %v825
    %2631 = vmatpush1.xpose.msra.mxu0 %v824
    %2632 = vmatprep.subr.mxu0 %v831
    %2633 = vmatpush1.xpose.msra.mxu0 %v830
    %2634 = vmatprep.subr.mxu0 %v837
    %2635 = vmatpush1.xpose.msra.mxu0 %v836
    %2636 = vmatprep.subr.mxu0 %v843
    %2637 = vmatpush1.xpose.msra.mxu0 %v842
    %2638 = vmatprep.subr.mxu0 %v849
    %2639 = vmatpush1.xpose.msra.mxu0 %v848
    %2640 = vmatprep.subr.mxu0 %v855
    %2641 = vmatpush1.xpose.msra.mxu0 %v854
    %2642 = vmatprep.subr.mxu0 %v861
    %2643 = vmatpush1.xpose.msra.mxu0 %v860
    %2644 = vmatprep.subr.mxu0 %v867
    %2645 = vmatpush1.xpose.msra.mxu0 %v866
    %2646 = vmatprep.subr.mxu0 %v873
    %2647 = vmatpush1.xpose.msra.mxu0 %v872
    %2648 = vmatprep.subr.mxu0 %v879
    %2649 = vmatpush1.xpose.msra.mxu0 %v878
    %2650 = vmatprep.subr.mxu0 %v885
    %2651 = vmatpush1.xpose.msra.mxu0 %v884
    %2652 = vmatprep.subr.mxu0 %v891
    %2653 = vmatpush1.xpose.msra.mxu0 %v890
    %2654 = vmatprep.subr.mxu0 %v897
    %2655 = vmatpush1.xpose.msra.mxu0 %v896
    %2656 = vmatprep.subr.mxu0 %v903
    %2657 = vmatpush1.xpose.msra.mxu0 %v902
    %2658 = vmatprep.subr.mxu0 %v909
    %2659 = vmatpush1.xpose.msra.mxu0 %v908
    %2660 = vmatprep.subr.mxu0 %v915
    %2661 = vmatpush1.xpose.msra.mxu0 %v914
    %2662 = vmatprep.subr.mxu0 %v921
    %2663 = vmatpush1.xpose.msra.mxu0 %v920
    %2664 = vmatprep.subr.mxu0 %v927
    %2665 = vmatpush1.xpose.msra.mxu0 %v926
    %2666 = vmatprep.subr.mxu0 %v933
    %2667 = vmatpush1.xpose.msra.mxu0 %v932
    %2668 = vmatprep.subr.mxu0 %v939
    %2669 = vmatpush1.xpose.msra.mxu0 %v938
    %2670 = vmatprep.subr.mxu0 %v945
    %2671 = vmatpush1.xpose.msra.mxu0 %v944
    %2672 = vmatprep.subr.mxu0 %v951
    %2673 = vmatpush1.xpose.msra.mxu0 %v950
    %2674 = vmatprep.subr.mxu0 %v957
    %2675 = vmatpush1.xpose.msra.mxu0 %v956
    %2676 = vmatprep.subr.mxu0 %v963
    %2677 = vmatpush1.xpose.msra.mxu0 %v962
    %2678 = vmatprep.subr.mxu0 %v969
    %2679 = vmatpush1.xpose.msra.mxu0 %v968
    %2680 = vmatprep.subr.mxu0 %v975
    %2681 = vmatpush1.xpose.msra.mxu0 %v974
    %2682 = vmatprep.subr.mxu0 %v981
    %2683 = vmatpush1.xpose.msra.mxu0 %v980
    %2684 = vmatprep.subr.mxu0 %v987
    %2685 = vmatpush1.xpose.msra.mxu0 %v986
    %2686 = vmatprep.subr.mxu0 %v993
    %2687 = vmatpush1.xpose.msra.mxu0 %v992
    %2688 = vmatprep.subr.mxu0 %v999
    %2689 = vmatpush1.xpose.msra.mxu0 %v998
    %2690 = vmatprep.subr.mxu0 %v1005
    %2691 = vmatpush1.xpose.msra.mxu0 %v1004
    %2692 = vmatprep.subr.mxu0 %v1011
    %2693 = vmatpush1.xpose.msra.mxu0 %v1010
    %2694 = vmatprep.mubr.f32.mxu0 %v1692
    %2695 = vmatmul.mubr.f32.gmra.mrb[0].mxu0 %v1690
    %v2696 = vpop.f32.mrb[0].mxu0
    %v2697 = vadd.f32 %v2626, %v2696
    %v2698 = vpop.f32.mrb[0].mxu0
    %v2699 = vadd.f32 %v2628, %v2698
    %2700 = vdwg.mxu0
    %2701 = vmatprep.subr.mxu0 %v827
    %2702 = vmatpush1.xpose.msra.mxu0 %v826
    %2703 = vmatprep.subr.mxu0 %v833
    %2704 = vmatpush1.xpose.msra.mxu0 %v832
    %2705 = vmatprep.subr.mxu0 %v839
    %2706 = vmatpush1.xpose.msra.mxu0 %v838
    %2707 = vmatprep.subr.mxu0 %v845
    %2708 = vmatpush1.xpose.msra.mxu0 %v844
    %2709 = vmatprep.subr.mxu0 %v851
    %2710 = vmatpush1.xpose.msra.mxu0 %v850
    %2711 = vmatprep.subr.mxu0 %v857
    %2712 = vmatpush1.xpose.msra.mxu0 %v856
    %2713 = vmatprep.subr.mxu0 %v863
    %2714 = vmatpush1.xpose.msra.mxu0 %v862
    %2715 = vmatprep.subr.mxu0 %v869
    %2716 = vmatpush1.xpose.msra.mxu0 %v868
    %2717 = vmatprep.subr.mxu0 %v875
    %2718 = vmatpush1.xpose.msra.mxu0 %v874
    %2719 = vmatprep.subr.mxu0 %v881
    %2720 = vmatpush1.xpose.msra.mxu0 %v880
    %2721 = vmatprep.subr.mxu0 %v887
    %2722 = vmatpush1.xpose.msra.mxu0 %v886
    %2723 = vmatprep.subr.mxu0 %v893
    %2724 = vmatpush1.xpose.msra.mxu0 %v892
    %2725 = vmatprep.subr.mxu0 %v899
    %2726 = vmatpush1.xpose.msra.mxu0 %v898
    %2727 = vmatprep.subr.mxu0 %v905
    %2728 = vmatpush1.xpose.msra.mxu0 %v904
    %2729 = vmatprep.subr.mxu0 %v911
    %2730 = vmatpush1.xpose.msra.mxu0 %v910
    %2731 = vmatprep.subr.mxu0 %v917
    %2732 = vmatpush1.xpose.msra.mxu0 %v916
    %2733 = vmatprep.subr.mxu0 %v923
    %2734 = vmatpush1.xpose.msra.mxu0 %v922
    %2735 = vmatprep.subr.mxu0 %v929
    %2736 = vmatpush1.xpose.msra.mxu0 %v928
    %2737 = vmatprep.subr.mxu0 %v935
    %2738 = vmatpush1.xpose.msra.mxu0 %v934
    %2739 = vmatprep.subr.mxu0 %v941
    %2740 = vmatpush1.xpose.msra.mxu0 %v940
    %2741 = vmatprep.subr.mxu0 %v947
    %2742 = vmatpush1.xpose.msra.mxu0 %v946
    %2743 = vmatprep.subr.mxu0 %v953
    %2744 = vmatpush1.xpose.msra.mxu0 %v952
    %2745 = vmatprep.subr.mxu0 %v959
    %2746 = vmatpush1.xpose.msra.mxu0 %v958
    %2747 = vmatprep.subr.mxu0 %v965
    %2748 = vmatpush1.xpose.msra.mxu0 %v964
    %2749 = vmatprep.subr.mxu0 %v971
    %2750 = vmatpush1.xpose.msra.mxu0 %v970
    %2751 = vmatprep.subr.mxu0 %v977
    %2752 = vmatpush1.xpose.msra.mxu0 %v976
    %2753 = vmatprep.subr.mxu0 %v983
    %2754 = vmatpush1.xpose.msra.mxu0 %v982
    %2755 = vmatprep.subr.mxu0 %v989
    %2756 = vmatpush1.xpose.msra.mxu0 %v988
    %2757 = vmatprep.subr.mxu0 %v995
    %2758 = vmatpush1.xpose.msra.mxu0 %v994
    %2759 = vmatprep.subr.mxu0 %v1001
    %2760 = vmatpush1.xpose.msra.mxu0 %v1000
    %2761 = vmatprep.subr.mxu0 %v1007
    %2762 = vmatpush1.xpose.msra.mxu0 %v1006
    %2763 = vmatprep.subr.mxu0 %v1013
    %2764 = vmatpush1.xpose.msra.mxu0 %v1012
    %2765 = vmatprep.mubr.f32.mxu0 %v1700
    %2766 = vmatmul.mubr.f32.gmra.mrb[0].mxu0 %v1699
    %v2767 = vpop.f32.mrb[0].mxu0
    %v2768 = vadd.f32 %v2697, %v2767
    %v2769 = vpop.f32.mrb[0].mxu0
    %v2770 = vadd.f32 %v2699, %v2769
    %2771 = vdwg.mxu0
    %2772 = vmatprep.subr.mxu0 %v1015
    %2773 = vmatpush1.xpose.msra.mxu0 %v1014
    %2774 = vmatprep.subr.mxu0 %v1021
    %2775 = vmatpush1.xpose.msra.mxu0 %v1020
    %2776 = vmatprep.subr.mxu0 %v1027
    %2777 = vmatpush1.xpose.msra.mxu0 %v1026
    %2778 = vmatprep.subr.mxu0 %v1033
    %2779 = vmatpush1.xpose.msra.mxu0 %v1032
    %2780 = vmatprep.subr.mxu0 %v1039
    %2781 = vmatpush1.xpose.msra.mxu0 %v1038
    %2782 = vmatprep.subr.mxu0 %v1045
    %2783 = vmatpush1.xpose.msra.mxu0 %v1044
    %2784 = vmatprep.subr.mxu0 %v1051
    %2785 = vmatpush1.xpose.msra.mxu0 %v1050
    %2786 = vmatprep.subr.mxu0 %v1057
    %2787 = vmatpush1.xpose.msra.mxu0 %v1056
    %2788 = vmatprep.subr.mxu0 %v1063
    %2789 = vmatpush1.xpose.msra.mxu0 %v1062
    %2790 = vmatprep.subr.mxu0 %v1069
    %2791 = vmatpush1.xpose.msra.mxu0 %v1068
    %2792 = vmatprep.subr.mxu0 %v1075
    %2793 = vmatpush1.xpose.msra.mxu0 %v1074
    %2794 = vmatprep.subr.mxu0 %v1081
    %2795 = vmatpush1.xpose.msra.mxu0 %v1080
    %2796 = vmatprep.subr.mxu0 %v1087
    %2797 = vmatpush1.xpose.msra.mxu0 %v1086
    %2798 = vmatprep.subr.mxu0 %v1093
    %2799 = vmatpush1.xpose.msra.mxu0 %v1092
    %2800 = vmatprep.subr.mxu0 %v1099
    %2801 = vmatpush1.xpose.msra.mxu0 %v1098
    %2802 = vmatprep.subr.mxu0 %v1105
    %2803 = vmatpush1.xpose.msra.mxu0 %v1104
    %2804 = vmatprep.subr.mxu0 %v1111
    %2805 = vmatpush1.xpose.msra.mxu0 %v1110
    %2806 = vmatprep.subr.mxu0 %v1117
    %2807 = vmatpush1.xpose.msra.mxu0 %v1116
    %2808 = vmatprep.subr.mxu0 %v1123
    %2809 = vmatpush1.xpose.msra.mxu0 %v1122
    %2810 = vmatprep.subr.mxu0 %v1129
    %2811 = vmatpush1.xpose.msra.mxu0 %v1128
    %2812 = vmatprep.subr.mxu0 %v1135
    %2813 = vmatpush1.xpose.msra.mxu0 %v1134
    %2814 = vmatprep.subr.mxu0 %v1141
    %2815 = vmatpush1.xpose.msra.mxu0 %v1140
    %2816 = vmatprep.subr.mxu0 %v1147
    %2817 = vmatpush1.xpose.msra.mxu0 %v1146
    %2818 = vmatprep.subr.mxu0 %v1153
    %2819 = vmatpush1.xpose.msra.mxu0 %v1152
    %2820 = vmatprep.subr.mxu0 %v1159
    %2821 = vmatpush1.xpose.msra.mxu0 %v1158
    %2822 = vmatprep.subr.mxu0 %v1165
    %2823 = vmatpush1.xpose.msra.mxu0 %v1164
    %2824 = vmatprep.subr.mxu0 %v1171
    %2825 = vmatpush1.xpose.msra.mxu0 %v1170
    %2826 = vmatprep.subr.mxu0 %v1177
    %2827 = vmatpush1.xpose.msra.mxu0 %v1176
    %2828 = vmatprep.subr.mxu0 %v1183
    %2829 = vmatpush1.xpose.msra.mxu0 %v1182
    %2830 = vmatprep.subr.mxu0 %v1189
    %2831 = vmatpush1.xpose.msra.mxu0 %v1188
    %2832 = vmatprep.subr.mxu0 %v1195
    %2833 = vmatpush1.xpose.msra.mxu0 %v1194
    %2834 = vmatprep.subr.mxu0 %v1201
    %2835 = vmatpush1.xpose.msra.mxu0 %v1200
    %2836 = vmatprep.mubr.f32.mxu0 %v1691
    %2837 = vmatmul.mubr.f32.gmra.mrb[0].mxu0 %v1683
    %v2838 = vpop.f32.mrb[0].mxu0
    %v2839 = vadd.f32 %v1637, %v2838
    %v2840 = vpop.f32.mrb[0].mxu0
    %v2841 = vadd.f32 %v1641, %v2840
    %2842 = vdwg.mxu0
    %2843 = vmatprep.subr.mxu0 %v1017
    %2844 = vmatpush1.xpose.msra.mxu0 %v1016
    %2845 = vmatprep.subr.mxu0 %v1023
    %2846 = vmatpush1.xpose.msra.mxu0 %v1022
    %2847 = vmatprep.subr.mxu0 %v1029
    %2848 = vmatpush1.xpose.msra.mxu0 %v1028
    %2849 = vmatprep.subr.mxu0 %v1035
    %2850 = vmatpush1.xpose.msra.mxu0 %v1034
    %2851 = vmatprep.subr.mxu0 %v1041
    %2852 = vmatpush1.xpose.msra.mxu0 %v1040
    %2853 = vmatprep.subr.mxu0 %v1047
    %2854 = vmatpush1.xpose.msra.mxu0 %v1046
    %2855 = vmatprep.subr.mxu0 %v1053
    %2856 = vmatpush1.xpose.msra.mxu0 %v1052
    %2857 = vmatprep.subr.mxu0 %v1059
    %2858 = vmatpush1.xpose.msra.mxu0 %v1058
    %2859 = vmatprep.subr.mxu0 %v1065
    %2860 = vmatpush1.xpose.msra.mxu0 %v1064
    %2861 = vmatprep.subr.mxu0 %v1071
    %2862 = vmatpush1.xpose.msra.mxu0 %v1070
    %2863 = vmatprep.subr.mxu0 %v1077
    %2864 = vmatpush1.xpose.msra.mxu0 %v1076
    %2865 = vmatprep.subr.mxu0 %v1083
    %2866 = vmatpush1.xpose.msra.mxu0 %v1082
    %2867 = vmatprep.subr.mxu0 %v1089
    %2868 = vmatpush1.xpose.msra.mxu0 %v1088
    %2869 = vmatprep.subr.mxu0 %v1095
    %2870 = vmatpush1.xpose.msra.mxu0 %v1094
    %2871 = vmatprep.subr.mxu0 %v1101
    %2872 = vmatpush1.xpose.msra.mxu0 %v1100
    %2873 = vmatprep.subr.mxu0 %v1107
    %2874 = vmatpush1.xpose.msra.mxu0 %v1106
    %2875 = vmatprep.subr.mxu0 %v1113
    %2876 = vmatpush1.xpose.msra.mxu0 %v1112
    %2877 = vmatprep.subr.mxu0 %v1119
    %2878 = vmatpush1.xpose.msra.mxu0 %v1118
    %2879 = vmatprep.subr.mxu0 %v1125
    %2880 = vmatpush1.xpose.msra.mxu0 %v1124
    %2881 = vmatprep.subr.mxu0 %v1131
    %2882 = vmatpush1.xpose.msra.mxu0 %v1130
    %2883 = vmatprep.subr.mxu0 %v1137
    %2884 = vmatpush1.xpose.msra.mxu0 %v1136
    %2885 = vmatprep.subr.mxu0 %v1143
    %2886 = vmatpush1.xpose.msra.mxu0 %v1142
    %2887 = vmatprep.subr.mxu0 %v1149
    %2888 = vmatpush1.xpose.msra.mxu0 %v1148
    %2889 = vmatprep.subr.mxu0 %v1155
    %2890 = vmatpush1.xpose.msra.mxu0 %v1154
    %2891 = vmatprep.subr.mxu0 %v1161
    %2892 = vmatpush1.xpose.msra.mxu0 %v1160
    %2893 = vmatprep.subr.mxu0 %v1167
    %2894 = vmatpush1.xpose.msra.mxu0 %v1166
    %2895 = vmatprep.subr.mxu0 %v1173
    %2896 = vmatpush1.xpose.msra.mxu0 %v1172
    %2897 = vmatprep.subr.mxu0 %v1179
    %2898 = vmatpush1.xpose.msra.mxu0 %v1178
    %2899 = vmatprep.subr.mxu0 %v1185
    %2900 = vmatpush1.xpose.msra.mxu0 %v1184
    %2901 = vmatprep.subr.mxu0 %v1191
    %2902 = vmatpush1.xpose.msra.mxu0 %v1190
    %2903 = vmatprep.subr.mxu0 %v1197
    %2904 = vmatpush1.xpose.msra.mxu0 %v1196
    %2905 = vmatprep.subr.mxu0 %v1203
    %2906 = vmatpush1.xpose.msra.mxu0 %v1202
    %2907 = vmatprep.mubr.f32.mxu0 %v1692
    %2908 = vmatmul.mubr.f32.gmra.mrb[0].mxu0 %v1690
    %v2909 = vpop.f32.mrb[0].mxu0
    %v2910 = vadd.f32 %v2839, %v2909
    %v2911 = vpop.f32.mrb[0].mxu0
    %v2912 = vadd.f32 %v2841, %v2911
    %2913 = vdwg.mxu0
    %2914 = vmatprep.subr.mxu0 %v1019
    %2915 = vmatpush1.xpose.msra.mxu0 %v1018
    %2916 = vmatprep.subr.mxu0 %v1025
    %2917 = vmatpush1.xpose.msra.mxu0 %v1024
    %2918 = vmatprep.subr.mxu0 %v1031
    %2919 = vmatpush1.xpose.msra.mxu0 %v1030
    %2920 = vmatprep.subr.mxu0 %v1037
    %2921 = vmatpush1.xpose.msra.mxu0 %v1036
    %2922 = vmatprep.subr.mxu0 %v1043
    %2923 = vmatpush1.xpose.msra.mxu0 %v1042
    %2924 = vmatprep.subr.mxu0 %v1049
    %2925 = vmatpush1.xpose.msra.mxu0 %v1048
    %2926 = vmatprep.subr.mxu0 %v1055
    %2927 = vmatpush1.xpose.msra.mxu0 %v1054
    %2928 = vmatprep.subr.mxu0 %v1061
    %2929 = vmatpush1.xpose.msra.mxu0 %v1060
    %2930 = vmatprep.subr.mxu0 %v1067
    %2931 = vmatpush1.xpose.msra.mxu0 %v1066
    %2932 = vmatprep.subr.mxu0 %v1073
    %2933 = vmatpush1.xpose.msra.mxu0 %v1072
    %2934 = vmatprep.subr.mxu0 %v1079
    %2935 = vmatpush1.xpose.msra.mxu0 %v1078
    %2936 = vmatprep.subr.mxu0 %v1085
    %2937 = vmatpush1.xpose.msra.mxu0 %v1084
    %2938 = vmatprep.subr.mxu0 %v1091
    %2939 = vmatpush1.xpose.msra.mxu0 %v1090
    %2940 = vmatprep.subr.mxu0 %v1097
    %2941 = vmatpush1.xpose.msra.mxu0 %v1096
    %2942 = vmatprep.subr.mxu0 %v1103
    %2943 = vmatpush1.xpose.msra.mxu0 %v1102
    %2944 = vmatprep.subr.mxu0 %v1109
    %2945 = vmatpush1.xpose.msra.mxu0 %v1108
    %2946 = vmatprep.subr.mxu0 %v1115
    %2947 = vmatpush1.xpose.msra.mxu0 %v1114
    %2948 = vmatprep.subr.mxu0 %v1121
    %2949 = vmatpush1.xpose.msra.mxu0 %v1120
    %2950 = vmatprep.subr.mxu0 %v1127
    %2951 = vmatpush1.xpose.msra.mxu0 %v1126
    %2952 = vmatprep.subr.mxu0 %v1133
    %2953 = vmatpush1.xpose.msra.mxu0 %v1132
    %2954 = vmatprep.subr.mxu0 %v1139
    %2955 = vmatpush1.xpose.msra.mxu0 %v1138
    %2956 = vmatprep.subr.mxu0 %v1145
    %2957 = vmatpush1.xpose.msra.mxu0 %v1144
    %2958 = vmatprep.subr.mxu0 %v1151
    %2959 = vmatpush1.xpose.msra.mxu0 %v1150
    %2960 = vmatprep.subr.mxu0 %v1157
    %2961 = vmatpush1.xpose.msra.mxu0 %v1156
    %2962 = vmatprep.subr.mxu0 %v1163
    %2963 = vmatpush1.xpose.msra.mxu0 %v1162
    %2964 = vmatprep.subr.mxu0 %v1169
    %2965 = vmatpush1.xpose.msra.mxu0 %v1168
    %2966 = vmatprep.subr.mxu0 %v1175
    %2967 = vmatpush1.xpose.msra.mxu0 %v1174
    %2968 = vmatprep.subr.mxu0 %v1181
    %2969 = vmatpush1.xpose.msra.mxu0 %v1180
    %2970 = vmatprep.subr.mxu0 %v1187
    %2971 = vmatpush1.xpose.msra.mxu0 %v1186
    %2972 = vmatprep.subr.mxu0 %v1193
    %2973 = vmatpush1.xpose.msra.mxu0 %v1192
    %2974 = vmatprep.subr.mxu0 %v1199
    %2975 = vmatpush1.xpose.msra.mxu0 %v1198
    %2976 = vmatprep.subr.mxu0 %v1205
    %2977 = vmatpush1.xpose.msra.mxu0 %v1204
    %2978 = vmatprep.mubr.f32.mxu0 %v1700
    %2979 = vmatmul.mubr.f32.gmra.mrb[0].mxu0 %v1699
    %v2980 = vpop.f32.mrb[0].mxu0
    %v2981 = vadd.f32 %v2910, %v2980
    %v2982 = vpop.f32.mrb[0].mxu0
    %v2983 = vadd.f32 %v2912, %v2982
    %2984 = vdwg.mxu0
    %2985 = vmatprep.subr.mxu0 %v1207
    %2986 = vmatpush1.xpose.msra.mxu0 %v1206
    %2987 = vmatprep.subr.mxu0 %v1213
    %2988 = vmatpush1.xpose.msra.mxu0 %v1212
    %2989 = vmatprep.subr.mxu0 %v1219
    %2990 = vmatpush1.xpose.msra.mxu0 %v1218
    %2991 = vmatprep.subr.mxu0 %v1225
    %2992 = vmatpush1.xpose.msra.mxu0 %v1224
    %2993 = vmatprep.subr.mxu0 %v1231
    %2994 = vmatpush1.xpose.msra.mxu0 %v1230
    %2995 = vmatprep.subr.mxu0 %v1237
    %2996 = vmatpush1.xpose.msra.mxu0 %v1236
    %2997 = vmatprep.subr.mxu0 %v1243
    %2998 = vmatpush1.xpose.msra.mxu0 %v1242
    %2999 = vmatprep.subr.mxu0 %v1249
    %3000 = vmatpush1.xpose.msra.mxu0 %v1248
    %3001 = vmatprep.subr.mxu0 %v1255
    %3002 = vmatpush1.xpose.msra.mxu0 %v1254
    %3003 = vmatprep.subr.mxu0 %v1261
    %3004 = vmatpush1.xpose.msra.mxu0 %v1260
    %3005 = vmatprep.subr.mxu0 %v1267
    %3006 = vmatpush1.xpose.msra.mxu0 %v1266
    %3007 = vmatprep.subr.mxu0 %v1273
    %3008 = vmatpush1.xpose.msra.mxu0 %v1272
    %3009 = vmatprep.subr.mxu0 %v1279
    %3010 = vmatpush1.xpose.msra.mxu0 %v1278
    %3011 = vmatprep.subr.mxu0 %v1285
    %3012 = vmatpush1.xpose.msra.mxu0 %v1284
    %3013 = vmatprep.subr.mxu0 %v1291
    %3014 = vmatpush1.xpose.msra.mxu0 %v1290
    %3015 = vmatprep.subr.mxu0 %v1297
    %3016 = vmatpush1.xpose.msra.mxu0 %v1296
    %3017 = vmatprep.subr.mxu0 %v1303
    %3018 = vmatpush1.xpose.msra.mxu0 %v1302
    %3019 = vmatprep.subr.mxu0 %v1309
    %3020 = vmatpush1.xpose.msra.mxu0 %v1308
    %3021 = vmatprep.subr.mxu0 %v1315
    %3022 = vmatpush1.xpose.msra.mxu0 %v1314
    %3023 = vmatprep.subr.mxu0 %v1321
    %3024 = vmatpush1.xpose.msra.mxu0 %v1320
    %3025 = vmatprep.subr.mxu0 %v1327
    %3026 = vmatpush1.xpose.msra.mxu0 %v1326
    %3027 = vmatprep.subr.mxu0 %v1333
    %3028 = vmatpush1.xpose.msra.mxu0 %v1332
    %3029 = vmatprep.subr.mxu0 %v1339
    %3030 = vmatpush1.xpose.msra.mxu0 %v1338
    %3031 = vmatprep.subr.mxu0 %v1345
    %3032 = vmatpush1.xpose.msra.mxu0 %v1344
    %3033 = vmatprep.subr.mxu0 %v1351
    %3034 = vmatpush1.xpose.msra.mxu0 %v1350
    %3035 = vmatprep.subr.mxu0 %v1357
    %3036 = vmatpush1.xpose.msra.mxu0 %v1356
    %3037 = vmatprep.subr.mxu0 %v1363
    %3038 = vmatpush1.xpose.msra.mxu0 %v1362
    %3039 = vmatprep.subr.mxu0 %v1369
    %3040 = vmatpush1.xpose.msra.mxu0 %v1368
    %3041 = vmatprep.subr.mxu0 %v1375
    %3042 = vmatpush1.xpose.msra.mxu0 %v1374
    %3043 = vmatprep.subr.mxu0 %v1381
    %3044 = vmatpush1.xpose.msra.mxu0 %v1380
    %3045 = vmatprep.subr.mxu0 %v1387
    %3046 = vmatpush1.xpose.msra.mxu0 %v1386
    %3047 = vmatprep.subr.mxu0 %v1393
    %3048 = vmatpush1.xpose.msra.mxu0 %v1392
    %3049 = vmatprep.mubr.f32.mxu0 %v1691
    %3050 = vmatmul.mubr.f32.gmra.mrb[0].mxu0 %v1683
    %v3051 = vpop.f32.mrb[0].mxu0
    %v3052 = vadd.f32 %v1645, %v3051
    %v3053 = vpop.f32.mrb[0].mxu0
    %v3054 = vadd.f32 %v1649, %v3053
    %3055 = vdwg.mxu0
    %3056 = vmatprep.subr.mxu0 %v1209
    %3057 = vmatpush1.xpose.msra.mxu0 %v1208
    %3058 = vmatprep.subr.mxu0 %v1215
    %3059 = vmatpush1.xpose.msra.mxu0 %v1214
    %3060 = vmatprep.subr.mxu0 %v1221
    %3061 = vmatpush1.xpose.msra.mxu0 %v1220
    %3062 = vmatprep.subr.mxu0 %v1227
    %3063 = vmatpush1.xpose.msra.mxu0 %v1226
    %3064 = vmatprep.subr.mxu0 %v1233
    %3065 = vmatpush1.xpose.msra.mxu0 %v1232
    %3066 = vmatprep.subr.mxu0 %v1239
    %3067 = vmatpush1.xpose.msra.mxu0 %v1238
    %3068 = vmatprep.subr.mxu0 %v1245
    %3069 = vmatpush1.xpose.msra.mxu0 %v1244
    %3070 = vmatprep.subr.mxu0 %v1251
    %3071 = vmatpush1.xpose.msra.mxu0 %v1250
    %3072 = vmatprep.subr.mxu0 %v1257
    %3073 = vmatpush1.xpose.msra.mxu0 %v1256
    %3074 = vmatprep.subr.mxu0 %v1263
    %3075 = vmatpush1.xpose.msra.mxu0 %v1262
    %3076 = vmatprep.subr.mxu0 %v1269
    %3077 = vmatpush1.xpose.msra.mxu0 %v1268
    %3078 = vmatprep.subr.mxu0 %v1275
    %3079 = vmatpush1.xpose.msra.mxu0 %v1274
    %3080 = vmatprep.subr.mxu0 %v1281
    %3081 = vmatpush1.xpose.msra.mxu0 %v1280
    %3082 = vmatprep.subr.mxu0 %v1287
    %3083 = vmatpush1.xpose.msra.mxu0 %v1286
    %3084 = vmatprep.subr.mxu0 %v1293
    %3085 = vmatpush1.xpose.msra.mxu0 %v1292
    %3086 = vmatprep.subr.mxu0 %v1299
    %3087 = vmatpush1.xpose.msra.mxu0 %v1298
    %3088 = vmatprep.subr.mxu0 %v1305
    %3089 = vmatpush1.xpose.msra.mxu0 %v1304
    %3090 = vmatprep.subr.mxu0 %v1311
    %3091 = vmatpush1.xpose.msra.mxu0 %v1310
    %3092 = vmatprep.subr.mxu0 %v1317
    %3093 = vmatpush1.xpose.msra.mxu0 %v1316
    %3094 = vmatprep.subr.mxu0 %v1323
    %3095 = vmatpush1.xpose.msra.mxu0 %v1322
    %3096 = vmatprep.subr.mxu0 %v1329
    %3097 = vmatpush1.xpose.msra.mxu0 %v1328
    %3098 = vmatprep.subr.mxu0 %v1335
    %3099 = vmatpush1.xpose.msra.mxu0 %v1334
    %3100 = vmatprep.subr.mxu0 %v1341
    %3101 = vmatpush1.xpose.msra.mxu0 %v1340
    %3102 = vmatprep.subr.mxu0 %v1347
    %3103 = vmatpush1.xpose.msra.mxu0 %v1346
    %3104 = vmatprep.subr.mxu0 %v1353
    %3105 = vmatpush1.xpose.msra.mxu0 %v1352
    %3106 = vmatprep.subr.mxu0 %v1359
    %3107 = vmatpush1.xpose.msra.mxu0 %v1358
    %3108 = vmatprep.subr.mxu0 %v1365
    %3109 = vmatpush1.xpose.msra.mxu0 %v1364
    %3110 = vmatprep.subr.mxu0 %v1371
    %3111 = vmatpush1.xpose.msra.mxu0 %v1370
    %3112 = vmatprep.subr.mxu0 %v1377
    %3113 = vmatpush1.xpose.msra.mxu0 %v1376
    %3114 = vmatprep.subr.mxu0 %v1383
    %3115 = vmatpush1.xpose.msra.mxu0 %v1382
    %3116 = vmatprep.subr.mxu0 %v1389
    %3117 = vmatpush1.xpose.msra.mxu0 %v1388
    %3118 = vmatprep.subr.mxu0 %v1395
    %3119 = vmatpush1.xpose.msra.mxu0 %v1394
    %3120 = vmatprep.mubr.f32.mxu0 %v1692
    %3121 = vmatmul.mubr.f32.gmra.mrb[0].mxu0 %v1690
    %v3122 = vpop.f32.mrb[0].mxu0
    %v3123 = vadd.f32 %v3052, %v3122
    %v3124 = vpop.f32.mrb[0].mxu0
    %v3125 = vadd.f32 %v3054, %v3124
    %3126 = vdwg.mxu0
    %3127 = vmatprep.subr.mxu0 %v1211
    %3128 = vmatpush1.xpose.msra.mxu0 %v1210
    %3129 = vmatprep.subr.mxu0 %v1217
    %3130 = vmatpush1.xpose.msra.mxu0 %v1216
    %3131 = vmatprep.subr.mxu0 %v1223
    %3132 = vmatpush1.xpose.msra.mxu0 %v1222
    %3133 = vmatprep.subr.mxu0 %v1229
    %3134 = vmatpush1.xpose.msra.mxu0 %v1228
    %3135 = vmatprep.subr.mxu0 %v1235
    %3136 = vmatpush1.xpose.msra.mxu0 %v1234
    %3137 = vmatprep.subr.mxu0 %v1241
    %3138 = vmatpush1.xpose.msra.mxu0 %v1240
    %3139 = vmatprep.subr.mxu0 %v1247
    %3140 = vmatpush1.xpose.msra.mxu0 %v1246
    %3141 = vmatprep.subr.mxu0 %v1253
    %3142 = vmatpush1.xpose.msra.mxu0 %v1252
    %3143 = vmatprep.subr.mxu0 %v1259
    %3144 = vmatpush1.xpose.msra.mxu0 %v1258
    %3145 = vmatprep.subr.mxu0 %v1265
    %3146 = vmatpush1.xpose.msra.mxu0 %v1264
    %3147 = vmatprep.subr.mxu0 %v1271
    %3148 = vmatpush1.xpose.msra.mxu0 %v1270
    %3149 = vmatprep.subr.mxu0 %v1277
    %3150 = vmatpush1.xpose.msra.mxu0 %v1276
    %3151 = vmatprep.subr.mxu0 %v1283
    %3152 = vmatpush1.xpose.msra.mxu0 %v1282
    %3153 = vmatprep.subr.mxu0 %v1289
    %3154 = vmatpush1.xpose.msra.mxu0 %v1288
    %3155 = vmatprep.subr.mxu0 %v1295
    %3156 = vmatpush1.xpose.msra.mxu0 %v1294
    %3157 = vmatprep.subr.mxu0 %v1301
    %3158 = vmatpush1.xpose.msra.mxu0 %v1300
    %3159 = vmatprep.subr.mxu0 %v1307
    %3160 = vmatpush1.xpose.msra.mxu0 %v1306
    %3161 = vmatprep.subr.mxu0 %v1313
    %3162 = vmatpush1.xpose.msra.mxu0 %v1312
    %3163 = vmatprep.subr.mxu0 %v1319
    %3164 = vmatpush1.xpose.msra.mxu0 %v1318
    %3165 = vmatprep.subr.mxu0 %v1325
    %3166 = vmatpush1.xpose.msra.mxu0 %v1324
    %3167 = vmatprep.subr.mxu0 %v1331
    %3168 = vmatpush1.xpose.msra.mxu0 %v1330
    %3169 = vmatprep.subr.mxu0 %v1337
    %3170 = vmatpush1.xpose.msra.mxu0 %v1336
    %3171 = vmatprep.subr.mxu0 %v1343
    %3172 = vmatpush1.xpose.msra.mxu0 %v1342
    %3173 = vmatprep.subr.mxu0 %v1349
    %3174 = vmatpush1.xpose.msra.mxu0 %v1348
    %3175 = vmatprep.subr.mxu0 %v1355
    %3176 = vmatpush1.xpose.msra.mxu0 %v1354
    %3177 = vmatprep.subr.mxu0 %v1361
    %3178 = vmatpush1.xpose.msra.mxu0 %v1360
    %3179 = vmatprep.subr.mxu0 %v1367
    %3180 = vmatpush1.xpose.msra.mxu0 %v1366
    %3181 = vmatprep.subr.mxu0 %v1373
    %3182 = vmatpush1.xpose.msra.mxu0 %v1372
    %3183 = vmatprep.subr.mxu0 %v1379
    %3184 = vmatpush1.xpose.msra.mxu0 %v1378
    %3185 = vmatprep.subr.mxu0 %v1385
    %3186 = vmatpush1.xpose.msra.mxu0 %v1384
    %3187 = vmatprep.subr.mxu0 %v1391
    %3188 = vmatpush1.xpose.msra.mxu0 %v1390
    %3189 = vmatprep.subr.mxu0 %v1397
    %3190 = vmatpush1.xpose.msra.mxu0 %v1396
    %3191 = vmatprep.mubr.f32.mxu0 %v1700
    %3192 = vmatmul.mubr.f32.gmra.mrb[0].mxu0 %v1699
    %v3193 = vpop.f32.mrb[0].mxu0
    %v3194 = vadd.f32 %v3123, %v3193
    %v3195 = vpop.f32.mrb[0].mxu0
    %v3196 = vadd.f32 %v3125, %v3195
    %3197 = vdwg.mxu0
    %3198 = vmatprep.subr.mxu0 %v1399
    %3199 = vmatpush1.xpose.msra.mxu0 %v1398
    %3200 = vmatprep.subr.mxu0 %v1405
    %3201 = vmatpush1.xpose.msra.mxu0 %v1404
    %3202 = vmatprep.subr.mxu0 %v1411
    %3203 = vmatpush1.xpose.msra.mxu0 %v1410
    %3204 = vmatprep.subr.mxu0 %v1417
    %3205 = vmatpush1.xpose.msra.mxu0 %v1416
    %3206 = vmatprep.subr.mxu0 %v1423
    %3207 = vmatpush1.xpose.msra.mxu0 %v1422
    %3208 = vmatprep.subr.mxu0 %v1429
    %3209 = vmatpush1.xpose.msra.mxu0 %v1428
    %3210 = vmatprep.subr.mxu0 %v1435
    %3211 = vmatpush1.xpose.msra.mxu0 %v1434
    %3212 = vmatprep.subr.mxu0 %v1441
    %3213 = vmatpush1.xpose.msra.mxu0 %v1440
    %3214 = vmatprep.subr.mxu0 %v1447
    %3215 = vmatpush1.xpose.msra.mxu0 %v1446
    %3216 = vmatprep.subr.mxu0 %v1453
    %3217 = vmatpush1.xpose.msra.mxu0 %v1452
    %3218 = vmatprep.subr.mxu0 %v1459
    %3219 = vmatpush1.xpose.msra.mxu0 %v1458
    %3220 = vmatprep.subr.mxu0 %v1465
    %3221 = vmatpush1.xpose.msra.mxu0 %v1464
    %3222 = vmatprep.subr.mxu0 %v1471
    %3223 = vmatpush1.xpose.msra.mxu0 %v1470
    %3224 = vmatprep.subr.mxu0 %v1477
    %3225 = vmatpush1.xpose.msra.mxu0 %v1476
    %3226 = vmatprep.subr.mxu0 %v1483
    %3227 = vmatpush1.xpose.msra.mxu0 %v1482
    %3228 = vmatprep.subr.mxu0 %v1489
    %3229 = vmatpush1.xpose.msra.mxu0 %v1488
    %3230 = vmatprep.subr.mxu0 %v1495
    %3231 = vmatpush1.xpose.msra.mxu0 %v1494
    %3232 = vmatprep.subr.mxu0 %v1501
    %3233 = vmatpush1.xpose.msra.mxu0 %v1500
    %3234 = vmatprep.subr.mxu0 %v1507
    %3235 = vmatpush1.xpose.msra.mxu0 %v1506
    %3236 = vmatprep.subr.mxu0 %v1513
    %3237 = vmatpush1.xpose.msra.mxu0 %v1512
    %3238 = vmatprep.subr.mxu0 %v1519
    %3239 = vmatpush1.xpose.msra.mxu0 %v1518
    %3240 = vmatprep.subr.mxu0 %v1525
    %3241 = vmatpush1.xpose.msra.mxu0 %v1524
    %3242 = vmatprep.subr.mxu0 %v1531
    %3243 = vmatpush1.xpose.msra.mxu0 %v1530
    %3244 = vmatprep.subr.mxu0 %v1537
    %3245 = vmatpush1.xpose.msra.mxu0 %v1536
    %3246 = vmatprep.subr.mxu0 %v1543
    %3247 = vmatpush1.xpose.msra.mxu0 %v1542
    %3248 = vmatprep.subr.mxu0 %v1549
    %3249 = vmatpush1.xpose.msra.mxu0 %v1548
    %3250 = vmatprep.subr.mxu0 %v1555
    %3251 = vmatpush1.xpose.msra.mxu0 %v1554
    %3252 = vmatprep.subr.mxu0 %v1561
    %3253 = vmatpush1.xpose.msra.mxu0 %v1560
    %3254 = vmatprep.subr.mxu0 %v1567
    %3255 = vmatpush1.xpose.msra.mxu0 %v1566
    %3256 = vmatprep.subr.mxu0 %v1573
    %3257 = vmatpush1.xpose.msra.mxu0 %v1572
    %3258 = vmatprep.subr.mxu0 %v1579
    %3259 = vmatpush1.xpose.msra.mxu0 %v1578
    %3260 = vmatprep.subr.mxu0 %v1585
    %3261 = vmatpush1.xpose.msra.mxu0 %v1584
    %3262 = vmatprep.mubr.f32.mxu0 %v1691
    %3263 = vmatmul.mubr.f32.gmra.mrb[0].mxu0 %v1683
    %v3264 = vpop.f32.mrb[0].mxu0
    %v3265 = vadd.f32 %v1653, %v3264
    %v3266 = vpop.f32.mrb[0].mxu0
    %v3267 = vadd.f32 %v1657, %v3266
    %3268 = vdwg.mxu0
    %3269 = vmatprep.subr.mxu0 %v1401
    %3270 = vmatpush1.xpose.msra.mxu0 %v1400
    %3271 = vmatprep.subr.mxu0 %v1407
    %3272 = vmatpush1.xpose.msra.mxu0 %v1406
    %3273 = vmatprep.subr.mxu0 %v1413
    %3274 = vmatpush1.xpose.msra.mxu0 %v1412
    %3275 = vmatprep.subr.mxu0 %v1419
    %3276 = vmatpush1.xpose.msra.mxu0 %v1418
    %3277 = vmatprep.subr.mxu0 %v1425
    %3278 = vmatpush1.xpose.msra.mxu0 %v1424
    %3279 = vmatprep.subr.mxu0 %v1431
    %3280 = vmatpush1.xpose.msra.mxu0 %v1430
    %3281 = vmatprep.subr.mxu0 %v1437
    %3282 = vmatpush1.xpose.msra.mxu0 %v1436
    %3283 = vmatprep.subr.mxu0 %v1443
    %3284 = vmatpush1.xpose.msra.mxu0 %v1442
    %3285 = vmatprep.subr.mxu0 %v1449
    %3286 = vmatpush1.xpose.msra.mxu0 %v1448
    %3287 = vmatprep.subr.mxu0 %v1455
    %3288 = vmatpush1.xpose.msra.mxu0 %v1454
    %3289 = vmatprep.subr.mxu0 %v1461
    %3290 = vmatpush1.xpose.msra.mxu0 %v1460
    %3291 = vmatprep.subr.mxu0 %v1467
    %3292 = vmatpush1.xpose.msra.mxu0 %v1466
    %3293 = vmatprep.subr.mxu0 %v1473
    %3294 = vmatpush1.xpose.msra.mxu0 %v1472
    %3295 = vmatprep.subr.mxu0 %v1479
    %3296 = vmatpush1.xpose.msra.mxu0 %v1478
    %3297 = vmatprep.subr.mxu0 %v1485
    %3298 = vmatpush1.xpose.msra.mxu0 %v1484
    %3299 = vmatprep.subr.mxu0 %v1491
    %3300 = vmatpush1.xpose.msra.mxu0 %v1490
    %3301 = vmatprep.subr.mxu0 %v1497
    %3302 = vmatpush1.xpose.msra.mxu0 %v1496
    %3303 = vmatprep.subr.mxu0 %v1503
    %3304 = vmatpush1.xpose.msra.mxu0 %v1502
    %3305 = vmatprep.subr.mxu0 %v1509
    %3306 = vmatpush1.xpose.msra.mxu0 %v1508
    %3307 = vmatprep.subr.mxu0 %v1515
    %3308 = vmatpush1.xpose.msra.mxu0 %v1514
    %3309 = vmatprep.subr.mxu0 %v1521
    %3310 = vmatpush1.xpose.msra.mxu0 %v1520
    %3311 = vmatprep.subr.mxu0 %v1527
    %3312 = vmatpush1.xpose.msra.mxu0 %v1526
    %3313 = vmatprep.subr.mxu0 %v1533
    %3314 = vmatpush1.xpose.msra.mxu0 %v1532
    %3315 = vmatprep.subr.mxu0 %v1539
    %3316 = vmatpush1.xpose.msra.mxu0 %v1538
    %3317 = vmatprep.subr.mxu0 %v1545
    %3318 = vmatpush1.xpose.msra.mxu0 %v1544
    %3319 = vmatprep.subr.mxu0 %v1551
    %3320 = vmatpush1.xpose.msra.mxu0 %v1550
    %3321 = vmatprep.subr.mxu0 %v1557
    %3322 = vmatpush1.xpose.msra.mxu0 %v1556
    %3323 = vmatprep.subr.mxu0 %v1563
    %3324 = vmatpush1.xpose.msra.mxu0 %v1562
    %3325 = vmatprep.subr.mxu0 %v1569
    %3326 = vmatpush1.xpose.msra.mxu0 %v1568
    %3327 = vmatprep.subr.mxu0 %v1575
    %3328 = vmatpush1.xpose.msra.mxu0 %v1574
    %3329 = vmatprep.subr.mxu0 %v1581
    %3330 = vmatpush1.xpose.msra.mxu0 %v1580
    %3331 = vmatprep.subr.mxu0 %v1587
    %3332 = vmatpush1.xpose.msra.mxu0 %v1586
    %3333 = vmatprep.mubr.f32.mxu0 %v1692
    %3334 = vmatmul.mubr.f32.gmra.mrb[0].mxu0 %v1690
    %v3335 = vpop.f32.mrb[0].mxu0
    %v3336 = vadd.f32 %v3265, %v3335
    %v3337 = vpop.f32.mrb[0].mxu0
    %v3338 = vadd.f32 %v3267, %v3337
    %3339 = vdwg.mxu0
    %3340 = vmatprep.subr.mxu0 %v1403
    %3341 = vmatpush1.xpose.msra.mxu0 %v1402
    %3342 = vmatprep.subr.mxu0 %v1409
    %3343 = vmatpush1.xpose.msra.mxu0 %v1408
    %3344 = vmatprep.subr.mxu0 %v1415
    %3345 = vmatpush1.xpose.msra.mxu0 %v1414
    %3346 = vmatprep.subr.mxu0 %v1421
    %3347 = vmatpush1.xpose.msra.mxu0 %v1420
    %3348 = vmatprep.subr.mxu0 %v1427
    %3349 = vmatpush1.xpose.msra.mxu0 %v1426
    %3350 = vmatprep.subr.mxu0 %v1433
    %3351 = vmatpush1.xpose.msra.mxu0 %v1432
    %3352 = vmatprep.subr.mxu0 %v1439
    %3353 = vmatpush1.xpose.msra.mxu0 %v1438
    %3354 = vmatprep.subr.mxu0 %v1445
    %3355 = vmatpush1.xpose.msra.mxu0 %v1444
    %3356 = vmatprep.subr.mxu0 %v1451
    %3357 = vmatpush1.xpose.msra.mxu0 %v1450
    %3358 = vmatprep.subr.mxu0 %v1457
    %3359 = vmatpush1.xpose.msra.mxu0 %v1456
    %3360 = vmatprep.subr.mxu0 %v1463
    %3361 = vmatpush1.xpose.msra.mxu0 %v1462
    %3362 = vmatprep.subr.mxu0 %v1469
    %3363 = vmatpush1.xpose.msra.mxu0 %v1468
    %3364 = vmatprep.subr.mxu0 %v1475
    %3365 = vmatpush1.xpose.msra.mxu0 %v1474
    %3366 = vmatprep.subr.mxu0 %v1481
    %3367 = vmatpush1.xpose.msra.mxu0 %v1480
    %3368 = vmatprep.subr.mxu0 %v1487
    %3369 = vmatpush1.xpose.msra.mxu0 %v1486
    %3370 = vmatprep.subr.mxu0 %v1493
    %3371 = vmatpush1.xpose.msra.mxu0 %v1492
    %3372 = vmatprep.subr.mxu0 %v1499
    %3373 = vmatpush1.xpose.msra.mxu0 %v1498
    %3374 = vmatprep.subr.mxu0 %v1505
    %3375 = vmatpush1.xpose.msra.mxu0 %v1504
    %3376 = vmatprep.subr.mxu0 %v1511
    %3377 = vmatpush1.xpose.msra.mxu0 %v1510
    %3378 = vmatprep.subr.mxu0 %v1517
    %3379 = vmatpush1.xpose.msra.mxu0 %v1516
    %3380 = vmatprep.subr.mxu0 %v1523
    %3381 = vmatpush1.xpose.msra.mxu0 %v1522
    %3382 = vmatprep.subr.mxu0 %v1529
    %3383 = vmatpush1.xpose.msra.mxu0 %v1528
    %3384 = vmatprep.subr.mxu0 %v1535
    %3385 = vmatpush1.xpose.msra.mxu0 %v1534
    %3386 = vmatprep.subr.mxu0 %v1541
    %3387 = vmatpush1.xpose.msra.mxu0 %v1540
    %3388 = vmatprep.subr.mxu0 %v1547
    %3389 = vmatpush1.xpose.msra.mxu0 %v1546
    %3390 = vmatprep.subr.mxu0 %v1553
    %3391 = vmatpush1.xpose.msra.mxu0 %v1552
    %3392 = vmatprep.subr.mxu0 %v1559
    %3393 = vmatpush1.xpose.msra.mxu0 %v1558
    %3394 = vmatprep.subr.mxu0 %v1565
    %3395 = vmatpush1.xpose.msra.mxu0 %v1564
    %3396 = vmatprep.subr.mxu0 %v1571
    %3397 = vmatpush1.xpose.msra.mxu0 %v1570
    %3398 = vmatprep.subr.mxu0 %v1577
    %3399 = vmatpush1.xpose.msra.mxu0 %v1576
    %3400 = vmatprep.subr.mxu0 %v1583
    %3401 = vmatpush1.xpose.msra.mxu0 %v1582
    %3402 = vmatprep.subr.mxu0 %v1589
    %3403 = vmatpush1.xpose.msra.mxu0 %v1588
    %3404 = vmatprep.mubr.f32.mxu0 %v1700
    %3405 = vmatmul.mubr.f32.gmra.mrb[0].mxu0 %v1699
    %v3406 = vpop.f32.mrb[0].mxu0
    %v3407 = vadd.f32 %v3336, %v3406
    %v3408 = vpop.f32.mrb[0].mxu0
    %v3409 = vadd.f32 %v3338, %v3408
    %3410 = vdwg.mxu0
    %v3427 = vcombine.low %v1916, %v1918
    %v3428 = vcombine.low %v2129, %v2131
    %v3430 = vunpack.c.l.s4 1983009808
    %v3431 = vunpack.c.0.s8 %v3430
    %v3432 = vlaneseq
    %v3433 = vshrl.u32 %v3432, 7
    %v3434 = vsub.s32 %v3431, %v3433
    %v3435 = vrot.slane %v3427, %v3434
    %v3437 = vunpack.c.l.s4 1983009808
    %v3438 = vunpack.c.0.s8 %v3437
    %v3439 = vlaneseq
    %v3440 = vshrl.u32 %v3439, 7
    %v3441 = vsub.s32 %v3438, %v3440
    %v3442 = vrot.slane %v3428, %v3441
    %v3443 = vcombine.low %v3435, %v3442
    %v3444 = vcombine.low %v2342, %v2344
    %v3445 = vcombine.low %v2555, %v2557
    %v3447 = vunpack.c.l.s4 1983009808
    %v3448 = vunpack.c.0.s8 %v3447
    %v3449 = vlaneseq
    %v3450 = vshrl.u32 %v3449, 7
    %v3451 = vsub.s32 %v3448, %v3450
    %v3452 = vrot.slane %v3444, %v3451
    %v3454 = vunpack.c.l.s4 1983009808
    %v3455 = vunpack.c.0.s8 %v3454
    %v3456 = vlaneseq
    %v3457 = vshrl.u32 %v3456, 7
    %v3458 = vsub.s32 %v3455, %v3457
    %v3459 = vrot.slane %v3445, %v3458
    %v3460 = vcombine.low %v3452, %v3459
    %v3461 = vcombine.low %v2768, %v2770
    %v3462 = vcombine.low %v2981, %v2983
    %v3464 = vunpack.c.l.s4 1983009808
    %v3465 = vunpack.c.0.s8 %v3464
    %v3466 = vlaneseq
    %v3467 = vshrl.u32 %v3466, 7
    %v3468 = vsub.s32 %v3465, %v3467
    %v3469 = vrot.slane %v3461, %v3468
    %v3471 = vunpack.c.l.s4 1983009808
    %v3472 = vunpack.c.0.s8 %v3471
    %v3473 = vlaneseq
    %v3474 = vshrl.u32 %v3473, 7
    %v3475 = vsub.s32 %v3472, %v3474
    %v3476 = vrot.slane %v3462, %v3475
    %v3477 = vcombine.low %v3469, %v3476
    %v3478 = vcombine.low %v3194, %v3196
    %v3479 = vcombine.low %v3407, %v3409
    %v3481 = vunpack.c.l.s4 1983009808
    %v3482 = vunpack.c.0.s8 %v3481
    %v3483 = vlaneseq
    %v3484 = vshrl.u32 %v3483, 7
    %v3485 = vsub.s32 %v3482, %v3484
    %v3486 = vrot.slane %v3478, %v3485
    %v3488 = vunpack.c.l.s4 1983009808
    %v3489 = vunpack.c.0.s8 %v3488
    %v3490 = vlaneseq
    %v3491 = vshrl.u32 %v3490, 7
    %v3492 = vsub.s32 %v3489, %v3491
    %v3493 = vrot.slane %v3479, %v3492
    %v3494 = vcombine.low %v3486, %v3493
    %3499 = vst [vmem:[#allocation8] sm:$0xff] %v3443
    %3500 = vst [vmem:[#allocation8 + $0x8] sm:$0xff] %v3460
    %3501 = vst [vmem:[#allocation8 + $0x10] sm:$0xff] %v3477
    %3502 = vst [vmem:[#allocation8 + $0x18] sm:$0xff] %v3494
    // Predicated region
    $region26: #{tpu_custom_call.1} parent=1 // pred_check
      _
    $region27: #{tpu_custom_call.1} parent=1 // pred_check_branch
      %3504 = sbr.rel (0) target = $region29
    $region28: #{tpu_custom_call.1} parent=1 // pred_region
      %s3506 = ssub.s32 512, 512
      %3507 = vsyncadd [#allocation4], %s3506
      %s3509 = sshll.u32 [#allocation8], 4
      %s3510 = int_to_ptr.vmem [resolvable:$true] %s3509
      %3512 = dma.vmem_to_hbm [thread:$0]  %s3510, 512, %s3, [#allocation4]
    $region29: #{tpu_custom_call.1} parent=1 // pred_fallthru
      _
    // Predicated region
    $region30: #{tpu_custom_call.1} parent=1 // pred_check
      _
    $region31: #{tpu_custom_call.1} parent=1 // pred_check_branch
      %3514 = sbr.rel (0) target = $region33
    $region32: #{tpu_custom_call.1} parent=1 // pred_region
      %3515 = dma.done [#allocation4], 512
    $region33: #{tpu_custom_call.1} parent=1 // pred_fallthru
      _
    %3516 = vsyncpa [#allocation3], 1
    %3517 = vsyncpa [#allocation6], 1
    %3518 = vsyncpa [#allocation4], 1

</llo_original>
